<compile_context>
chip_gen: v5e
topology: v5e:2x2
jax: 0.10.0
libtpu: 0.0.40
codegen_flags: <defaults>
</compile_context>

<pallas_src>
import jax
import jax.numpy as jnp
from jax.experimental import pallas as pl
from jax.experimental.pallas import tpu as pltpu

BN_EPS = 1e-5
KSIZE = 3  # kernel_size=3 is assumed by the in-kernel tap unrolling


# ----------------------------- fused Pallas kernel -----------------------------

def _fused_forward_kernel(xps_ref, w1_ref, b1_ref, wdw_ref, b2a_ref,
                          wpw_ref, b2b_ref, wlin_ref, blin_ref,
                          out_ref, pt_ref, y1_ref, p1_ref):
    # xps_ref : (4*B, Hb, Wb, C0)  parity-split, zero-padded input
    # w1_ref  : (k*k*C0, C1)       conv1 (BN scale folded)
    # wdw_ref : (k*k, C1)          depthwise (BN scale folded)
    # wpw_ref : (C1, C2)           pointwise (BN scale folded)
    # wlin_ref: (C2, num_classes)
    # pt_ref  : (B, Ho, Wo, k*k*C0) im2col scratch
    # y1_ref  : (B, Ho, Wo, C1)     conv1 output scratch
    # p1_ref  : (B, Hp+2, Wp+2, C1) pool1 output scratch, zero border = conv pad
    four_b, hb, wb, c0 = xps_ref.shape
    b_sz = four_b // 4
    ho, wo = hb - 1, wb - 1          # conv1 output spatial (stride 2, 'same')
    hp, wp = ho // 2, wo // 2        # after first 2x2 max pool
    c1 = w1_ref.shape[1]
    c2 = wpw_ref.shape[1]

    # ---- Block 1: in-kernel im2col for the 3x3 stride-2 conv -------------------
    # Parity-split layout makes every stride-2 tap a unit-stride slice.
    for ky in range(KSIZE):
        for kx in range(KSIZE):
            t = ky * KSIZE + kx
            par = (ky & 1) * 2 + (kx & 1)
            tap = xps_ref[par * b_sz:(par + 1) * b_sz,
                          (ky >> 1):(ky >> 1) + ho,
                          (kx >> 1):(kx >> 1) + wo, :]           # (B, Ho, Wo, C0)
            pt_ref[:, :, :, t * c0:(t + 1) * c0] = tap

    # conv matmul (MXU) + folded-BN bias + ReLU, one row (Wo, C1) at a time.
    for b in range(b_sz):
        for i in range(ho):
            row = jnp.dot(pt_ref[b, i, :, :], w1_ref[...],
                          preferred_element_type=jnp.float32)    # (Wo, C1)
            y1_ref[b, i, :, :] = jnp.maximum(row + b1_ref[...], 0.0)

    # ---- 2x2 max pool into zero-padded scratch (border = depthwise 'same' pad) -
    p1_ref[...] = jnp.zeros(p1_ref.shape, jnp.float32)
    for u in range(hp):
        zr = jnp.maximum(y1_ref[:, 2 * u, :, :],
                         y1_ref[:, 2 * u + 1, :, :])             # (B, Wo, C1)
        for v in range(wp):
            p1_ref[:, u + 1, v + 1, :] = jnp.maximum(zr[:, 2 * v, :],
                                                     zr[:, 2 * v + 1, :])

    # ---- Block 2a: 3x3 depthwise conv + BN + ReLU (balanced-tree accumulate) ---
    terms = []
    for ky in range(KSIZE):
        for kx in range(KSIZE):
            t = ky * KSIZE + kx
            terms.append(p1_ref[:, ky:ky + hp, kx:kx + wp, :]
                         * wdw_ref[t:t + 1, :])                  # (B, Hp, Wp, C1)
    while len(terms) > 1:
        nxt = [terms[i] + terms[i + 1] for i in range(0, len(terms) - 1, 2)]
        if len(terms) % 2:
            nxt.append(terms[-1])
        terms = nxt
    y2a = jnp.maximum(terms[0] + b2a_ref[...], 0.0)              # (B, Hp, Wp, C1)

    # ---- Block 2b: 1x1 conv + BN + ReLU, 2x2 max pool, GAP, Linear -------------
    inv_pool = 1.0 / float((hp // 2) * (wp // 2))
    for b in range(b_sz):
        rows = [jnp.maximum(jnp.dot(y2a[b, i], wpw_ref[...],
                                    preferred_element_type=jnp.float32)
                            + b2b_ref[...], 0.0)
                for i in range(hp)]                              # each (Wp, C2)
        gap = None
        for u in range(hp // 2):
            r = jnp.maximum(rows[2 * u], rows[2 * u + 1])        # (Wp, C2)
            for v in range(wp // 2):
                pooled = jnp.maximum(r[2 * v:2 * v + 1, :],
                                     r[2 * v + 1:2 * v + 2, :])  # (1, C2)
                gap = pooled if gap is None else gap + pooled
        gap = gap * inv_pool                                     # global average pool
        # TODO(synk): nn.Dropout(0.2) is a training-time stochastic op; eval-mode
        # identity is implemented here.
        out_ref[b:b + 1, :] = (jnp.dot(gap, wlin_ref[...],
                                       preferred_element_type=jnp.float32)
                               + blin_ref[...])


# --------------------------------- wrapper -------------------------------------

@jax.jit
def modular_micro_pizza_net_forward(x_nchw, params):
    """Forward pass.  x_nchw: (B, C, H, W) with H, W divisible by 8."""
    x = x_nchw.astype(jnp.float32)
    b_sz, c0, h, w = x.shape
    assert h % 8 == 0 and w % 8 == 0, "spatial dims must be divisible by 8"
    hb, wb = h // 2 + 1, w // 2 + 1
    ho, wo = h // 2, w // 2
    hp, wp = ho // 2, wo // 2
    c1 = params["w1"].shape[1]
    num_classes = params["w_lin"].shape[1]

    # 'same' padding for the stride-2 conv + parity split of both spatial axes
    # so every conv tap is a unit-stride slice inside the kernel (cheap XLA ops
    # on a ~4 KB tensor; no data amplification).
    xp = jnp.pad(x, ((0, 0), (0, 0), (1, 1), (1, 1)))            # (B, C0, H+2, W+2)
    xps = (xp.reshape(b_sz, c0, hb, 2, wb, 2)
             .transpose((3, 5, 0, 2, 4, 1))                      # (hp, wp, B, hb, wb, c)
             .reshape(4 * b_sz, hb, wb, c0))

    return pl.pallas_call(
        _fused_forward_kernel,
        out_shape=jax.ShapeDtypeStruct((b_sz, num_classes), jnp.float32),
        scratch_shapes=[
            pltpu.VMEM((b_sz, ho, wo, KSIZE * KSIZE * c0), jnp.float32),  # im2col
            pltpu.VMEM((b_sz, ho, wo, c1), jnp.float32),                  # conv1 out
            pltpu.VMEM((b_sz, hp + 2, wp + 2, c1), jnp.float32),          # pool1 (padded)
        ],
    )(xps, params["w1"], params["b1"], params["w_dw"], params["b2a"],
      params["w_pw"], params["b2b"], params["w_lin"], params["b_lin"])


# ------------------------------- parameters ------------------------------------

def _bn_fold(gamma, beta, mean, var, eps=BN_EPS):
    scale = gamma / jnp.sqrt(var + eps)
    return scale, beta - mean * scale


def init_params(key, num_classes=6, input_channels=3, initial_channels=8,
                kernel_size=KSIZE):
    """Synthetic init matching the module's init scheme, with eval-mode
    BatchNorm scales pre-folded into the conv weights (parameter-prep time)."""
    k = kernel_size
    c0, c1 = input_channels, initial_channels
    c2 = c1 * 2
    k0, k1, k2, k3 = jax.random.split(key, 4)

    std1 = (2.0 / (c1 * k * k)) ** 0.5          # kaiming fan_out for conv1
    w1 = jax.random.normal(k0, (k * k * c0, c1), jnp.float32) * std1
    std_dw = (2.0 / (k * k)) ** 0.5             # depthwise: fan_out = k*k
    w_dw = jax.random.normal(k1, (k * k, c1), jnp.float32) * std_dw
    std_pw = (2.0 / c2) ** 0.5                  # pointwise: fan_out = c2
    w_pw = jax.random.normal(k2, (c1, c2), jnp.float32) * std_pw
    w_lin = jax.random.normal(k3, (c2, num_classes), jnp.float32) * 0.01
    b_lin = jnp.zeros((1, num_classes), jnp.float32)

    def bn(c):  # fresh BN, eval mode: gamma=1, beta=0, mean=0, var=1
        return _bn_fold(jnp.ones((c,), jnp.float32), jnp.zeros((c,), jnp.float32),
                        jnp.zeros((c,), jnp.float32), jnp.ones((c,), jnp.float32))

    s1, bias1 = bn(c1)
    s2a, bias2a = bn(c1)
    s2b, bias2b = bn(c2)
    return dict(
        w1=w1 * s1[None, :],        b1=bias1.reshape(1, c1),
        w_dw=w_dw * s2a[None, :],   b2a=bias2a.reshape(1, c1),
        w_pw=w_pw * s2b[None, :],   b2b=bias2b.reshape(1, c2),
        w_lin=w_lin,                b_lin=b_lin,
    )


# ----------------------------- pure-JAX reference ------------------------------

def _maxpool2x2_ref(x):
    b, h, w, c = x.shape
    return jnp.max(x.reshape(b, h // 2, 2, w // 2, 2, c), axis=(2, 4))


def _reference_forward(x_nchw, params):
    k = KSIZE
    x = jnp.transpose(x_nchw, (0, 2, 3, 1)).astype(jnp.float32)
    c0 = x.shape[-1]
    c1 = params["w1"].shape[1]
    w1 = params["w1"].reshape(k, k, c0, c1)
    y = jax.lax.conv_general_dilated(x, w1, (2, 2), ((1, 1), (1, 1)),
                                     dimension_numbers=("NHWC", "HWIO", "NHWC"))
    y = jnp.maximum(y + params["b1"].reshape(1, 1, 1, -1), 0.0)
    y = _maxpool2x2_ref(y)
    wdw = params["w_dw"].reshape(k, k, 1, c1)
    y = jax.lax.conv_general_dilated(y, wdw, (1, 1), ((1, 1), (1, 1)),
                                     dimension_numbers=("NHWC", "HWIO", "NHWC"),
                                     feature_group_count=c1)
    y = jnp.maximum(y + params["b2a"].reshape(1, 1, 1, -1), 0.0)
    y = jnp.maximum(jnp.einsum("bhwc,cn->bhwn", y, params["w_pw"])
                    + params["b2b"].reshape(1, 1, 1, -1), 0.0)
    y = _maxpool2x2_ref(y)
    g = jnp.mean(y, axis=(1, 2))
    return g @ params["w_lin"] + params["b_lin"]


# ----------------------------------- main ---------------------------------------

if __name__ == "__main__":
    key = jax.random.PRNGKey(0)
    pkey, xkey = jax.random.split(key)
    params = init_params(pkey, num_classes=6, input_channels=3, initial_channels=8)
    # img_size=16 (divisible by 8: stride-2 conv followed by two 2x2 max pools)
    x = jax.random.normal(xkey, (2, 3, 16, 16), jnp.float32)   # NCHW like PyTorch
    logits = modular_micro_pizza_net_forward(x, params)
    jax.block_until_ready(logits)
    assert logits.shape == (2, 6), logits.shape
    ref = _reference_forward(x, params)
    max_err = float(jnp.max(jnp.abs(logits - ref)))
    # tolerant bound: MXU default-precision f32 matmuls vs. XLA conv reference
    assert max_err < 3e-3, max_err
    print("KERNEL_OK")
</pallas_src>

<mosaic_0001>
module attributes {stable_mosaic.version = 11 : i64} {
  func.func @_fused_forward_kernel(%arg0: memref<8x9x9x3xf32, #tpu.memory_space<vmem>>, %arg1: memref<27x8xf32, #tpu.memory_space<vmem>>, %arg2: memref<1x8xf32, #tpu.memory_space<vmem>>, %arg3: memref<9x8xf32, #tpu.memory_space<vmem>>, %arg4: memref<1x8xf32, #tpu.memory_space<vmem>>, %arg5: memref<8x16xf32, #tpu.memory_space<vmem>>, %arg6: memref<1x16xf32, #tpu.memory_space<vmem>>, %arg7: memref<16x6xf32, #tpu.memory_space<vmem>>, %arg8: memref<1x6xf32, #tpu.memory_space<vmem>>, %arg9: memref<2x6xf32, #tpu.memory_space<vmem>>, %arg10: memref<2x8x8x27xf32, #tpu.memory_space<vmem>>, %arg11: memref<2x8x8x8xf32, #tpu.memory_space<vmem>>, %arg12: memref<2x6x6x8xf32, #tpu.memory_space<vmem>>) attributes {dimension_semantics = [], scalar_prefetch = 0 : i64, scratch_operands = 3 : i64, tpu.core_type = #tpu.core_type<tc>} {
    %c0 = arith.constant 0 : index
    %c0_0 = arith.constant 0 : index
    %c0_1 = arith.constant 0 : index
    %c0_2 = arith.constant 0 : index
    %0 = vector.load %arg0[%c0, %c0_0, %c0_1, %c0_2] : memref<8x9x9x3xf32, #tpu.memory_space<vmem>>, vector<2x8x8x3xf32>
    %c0_3 = arith.constant 0 : index
    %c0_4 = arith.constant 0 : index
    %c0_5 = arith.constant 0 : index
    %c0_6 = arith.constant 0 : index
    %1 = vector.load %arg10[%c0_3, %c0_4, %c0_5, %c0_6] : memref<2x8x8x27xf32, #tpu.memory_space<vmem>>, vector<2x8x8x3xf32>
    tpu.vector_store %arg10[%c0_3, %c0_4, %c0_5, %c0_6], %0 {strides = array<i32>} : memref<2x8x8x27xf32, #tpu.memory_space<vmem>>, vector<2x8x8x3xf32>,
    %c2 = arith.constant 2 : index
    %c0_7 = arith.constant 0 : index
    %c0_8 = arith.constant 0 : index
    %c0_9 = arith.constant 0 : index
    %2 = vector.load %arg0[%c2, %c0_7, %c0_8, %c0_9] : memref<8x9x9x3xf32, #tpu.memory_space<vmem>>, vector<2x8x8x3xf32>
    %c0_10 = arith.constant 0 : index
    %c0_11 = arith.constant 0 : index
    %c0_12 = arith.constant 0 : index
    %c3 = arith.constant 3 : index
    %3 = vector.load %arg10[%c0_10, %c0_11, %c0_12, %c3] : memref<2x8x8x27xf32, #tpu.memory_space<vmem>>, vector<2x8x8x3xf32>
    tpu.vector_store %arg10[%c0_10, %c0_11, %c0_12, %c3], %2 {strides = array<i32>} : memref<2x8x8x27xf32, #tpu.memory_space<vmem>>, vector<2x8x8x3xf32>,
    %c0_13 = arith.constant 0 : index
    %c0_14 = arith.constant 0 : index
    %c1 = arith.constant 1 : index
    %c0_15 = arith.constant 0 : index
    %4 = vector.load %arg0[%c0_13, %c0_14, %c1, %c0_15] : memref<8x9x9x3xf32, #tpu.memory_space<vmem>>, vector<2x8x8x3xf32>
    %c0_16 = arith.constant 0 : index
    %c0_17 = arith.constant 0 : index
    %c0_18 = arith.constant 0 : index
    %c6 = arith.constant 6 : index
    %5 = vector.load %arg10[%c0_16, %c0_17, %c0_18, %c6] : memref<2x8x8x27xf32, #tpu.memory_space<vmem>>, vector<2x8x8x3xf32>
    tpu.vector_store %arg10[%c0_16, %c0_17, %c0_18, %c6], %4 {strides = array<i32>} : memref<2x8x8x27xf32, #tpu.memory_space<vmem>>, vector<2x8x8x3xf32>,
    %c4 = arith.constant 4 : index
    %c0_19 = arith.constant 0 : index
    %c0_20 = arith.constant 0 : index
    %c0_21 = arith.constant 0 : index
    %6 = vector.load %arg0[%c4, %c0_19, %c0_20, %c0_21] : memref<8x9x9x3xf32, #tpu.memory_space<vmem>>, vector<2x8x8x3xf32>
    %c0_22 = arith.constant 0 : index
    %c0_23 = arith.constant 0 : index
    %c0_24 = arith.constant 0 : index
    %c9 = arith.constant 9 : index
    %7 = vector.load %arg10[%c0_22, %c0_23, %c0_24, %c9] : memref<2x8x8x27xf32, #tpu.memory_space<vmem>>, vector<2x8x8x3xf32>
    tpu.vector_store %arg10[%c0_22, %c0_23, %c0_24, %c9], %6 {strides = array<i32>} : memref<2x8x8x27xf32, #tpu.memory_space<vmem>>, vector<2x8x8x3xf32>,
    %c6_25 = arith.constant 6 : index
    %c0_26 = arith.constant 0 : index
    %c0_27 = arith.constant 0 : index
    %c0_28 = arith.constant 0 : index
    %8 = vector.load %arg0[%c6_25, %c0_26, %c0_27, %c0_28] : memref<8x9x9x3xf32, #tpu.memory_space<vmem>>, vector<2x8x8x3xf32>
    %c0_29 = arith.constant 0 : index
    %c0_30 = arith.constant 0 : index
    %c0_31 = arith.constant 0 : index
    %c12 = arith.constant 12 : index
    %9 = vector.load %arg10[%c0_29, %c0_30, %c0_31, %c12] : memref<2x8x8x27xf32, #tpu.memory_space<vmem>>, vector<2x8x8x3xf32>
    tpu.vector_store %arg10[%c0_29, %c0_30, %c0_31, %c12], %8 {strides = array<i32>} : memref<2x8x8x27xf32, #tpu.memory_space<vmem>>, vector<2x8x8x3xf32>,
    %c4_32 = arith.constant 4 : index
    %c0_33 = arith.constant 0 : index
    %c1_34 = arith.constant 1 : index
    %c0_35 = arith.constant 0 : index
    %10 = vector.load %arg0[%c4_32, %c0_33, %c1_34, %c0_35] : memref<8x9x9x3xf32, #tpu.memory_space<vmem>>, vector<2x8x8x3xf32>
    %c0_36 = arith.constant 0 : index
    %c0_37 = arith.constant 0 : index
    %c0_38 = arith.constant 0 : index
    %c15 = arith.constant 15 : index
    %11 = vector.load %arg10[%c0_36, %c0_37, %c0_38, %c15] : memref<2x8x8x27xf32, #tpu.memory_space<vmem>>, vector<2x8x8x3xf32>
    tpu.vector_store %arg10[%c0_36, %c0_37, %c0_38, %c15], %10 {strides = array<i32>} : memref<2x8x8x27xf32, #tpu.memory_space<vmem>>, vector<2x8x8x3xf32>,
    %c0_39 = arith.constant 0 : index
    %c1_40 = arith.constant 1 : index
    %c0_41 = arith.constant 0 : index
    %c0_42 = arith.constant 0 : index
    %12 = vector.load %arg0[%c0_39, %c1_40, %c0_41, %c0_42] : memref<8x9x9x3xf32, #tpu.memory_space<vmem>>, vector<2x8x8x3xf32>
    %c0_43 = arith.constant 0 : index
    %c0_44 = arith.constant 0 : index
    %c0_45 = arith.constant 0 : index
    %c18 = arith.constant 18 : index
    %13 = vector.load %arg10[%c0_43, %c0_44, %c0_45, %c18] : memref<2x8x8x27xf32, #tpu.memory_space<vmem>>, vector<2x8x8x3xf32>
    tpu.vector_store %arg10[%c0_43, %c0_44, %c0_45, %c18], %12 {strides = array<i32>} : memref<2x8x8x27xf32, #tpu.memory_space<vmem>>, vector<2x8x8x3xf32>,
    %c2_46 = arith.constant 2 : index
    %c1_47 = arith.constant 1 : index
    %c0_48 = arith.constant 0 : index
    %c0_49 = arith.constant 0 : index
    %14 = vector.load %arg0[%c2_46, %c1_47, %c0_48, %c0_49] : memref<8x9x9x3xf32, #tpu.memory_space<vmem>>, vector<2x8x8x3xf32>
    %c0_50 = arith.constant 0 : index
    %c0_51 = arith.constant 0 : index
    %c0_52 = arith.constant 0 : index
    %c21 = arith.constant 21 : index
    %15 = vector.load %arg10[%c0_50, %c0_51, %c0_52, %c21] : memref<2x8x8x27xf32, #tpu.memory_space<vmem>>, vector<2x8x8x3xf32>
    tpu.vector_store %arg10[%c0_50, %c0_51, %c0_52, %c21], %14 {strides = array<i32>} : memref<2x8x8x27xf32, #tpu.memory_space<vmem>>, vector<2x8x8x3xf32>,
    %c0_53 = arith.constant 0 : index
    %c1_54 = arith.constant 1 : index
    %c1_55 = arith.constant 1 : index
    %c0_56 = arith.constant 0 : index
    %16 = vector.load %arg0[%c0_53, %c1_54, %c1_55, %c0_56] : memref<8x9x9x3xf32, #tpu.memory_space<vmem>>, vector<2x8x8x3xf32>
    %c0_57 = arith.constant 0 : index
    %c0_58 = arith.constant 0 : index
    %c0_59 = arith.constant 0 : index
    %c24 = arith.constant 24 : index
    %17 = vector.load %arg10[%c0_57, %c0_58, %c0_59, %c24] : memref<2x8x8x27xf32, #tpu.memory_space<vmem>>, vector<2x8x8x3xf32>
    tpu.vector_store %arg10[%c0_57, %c0_58, %c0_59, %c24], %16 {strides = array<i32>} : memref<2x8x8x27xf32, #tpu.memory_space<vmem>>, vector<2x8x8x3xf32>,
    %c0_60 = arith.constant 0 : index
    %c0_61 = arith.constant 0 : index
    %c0_62 = arith.constant 0 : index
    %c0_63 = arith.constant 0 : index
    %18 = vector.load %arg10[%c0_60, %c0_61, %c0_62, %c0_63] : memref<2x8x8x27xf32, #tpu.memory_space<vmem>>, vector<1x1x8x27xf32>
    %19 = vector.shape_cast %18 : vector<1x1x8x27xf32> to vector<8x27xf32>
    %c0_64 = arith.constant 0 : index
    %c0_65 = arith.constant 0 : index
    %20 = vector.load %arg1[%c0_64, %c0_65] : memref<27x8xf32, #tpu.memory_space<vmem>>, vector<27x8xf32>
    %cst = arith.constant dense<0.000000e+00> : vector<8x8xf32>
    %21 = tpu.matmul %19, %20, %cst {dimension_numbers = #tpu.dot_dimension_numbers<[1], [0], [0], [1], [0, 0, 1, 1], [], []>} : vector<8x27xf32>, vector<27x8xf32>, vector<8x8xf32> -> vector<8x8xf32>
    %c0_66 = arith.constant 0 : index
    %c0_67 = arith.constant 0 : index
    %22 = vector.load %arg2[%c0_66, %c0_67] : memref<1x8xf32, #tpu.memory_space<vmem>>, vector<1x8xf32>
    %23 = vector.broadcast %22 : vector<1x8xf32> to vector<8x8xf32>
    %24 = arith.addf %21, %23 : vector<8x8xf32>
    %cst_68 = arith.constant 0.000000e+00 : f32
    %25 = vector.broadcast %cst_68 : f32 to vector<8x8xf32>
    %26 = arith.maximumf %24, %25 : vector<8x8xf32>
    %c0_69 = arith.constant 0 : index
    %c0_70 = arith.constant 0 : index
    %c0_71 = arith.constant 0 : index
    %c0_72 = arith.constant 0 : index
    %27 = vector.load %arg11[%c0_69, %c0_70, %c0_71, %c0_72] : memref<2x8x8x8xf32, #tpu.memory_space<vmem>>, vector<1x1x8x8xf32>
    %28 = vector.shape_cast %27 : vector<1x1x8x8xf32> to vector<8x8xf32>
    %29 = vector.shape_cast %26 : vector<8x8xf32> to vector<1x1x8x8xf32>
    tpu.vector_store %arg11[%c0_69, %c0_70, %c0_71, %c0_72], %29 {strides = array<i32>} : memref<2x8x8x8xf32, #tpu.memory_space<vmem>>, vector<1x1x8x8xf32>,
    %c0_73 = arith.constant 0 : index
    %c1_74 = arith.constant 1 : index
    %c0_75 = arith.constant 0 : index
    %c0_76 = arith.constant 0 : index
    %30 = vector.load %arg10[%c0_73, %c1_74, %c0_75, %c0_76] : memref<2x8x8x27xf32, #tpu.memory_space<vmem>>, vector<1x1x8x27xf32>
    %31 = vector.shape_cast %30 : vector<1x1x8x27xf32> to vector<8x27xf32>
    %c0_77 = arith.constant 0 : index
    %c0_78 = arith.constant 0 : index
    %32 = vector.load %arg1[%c0_77, %c0_78] : memref<27x8xf32, #tpu.memory_space<vmem>>, vector<27x8xf32>
    %cst_79 = arith.constant dense<0.000000e+00> : vector<8x8xf32>
    %33 = tpu.matmul %31, %32, %cst_79 {dimension_numbers = #tpu.dot_dimension_numbers<[1], [0], [0], [1], [0, 0, 1, 1], [], []>} : vector<8x27xf32>, vector<27x8xf32>, vector<8x8xf32> -> vector<8x8xf32>
    %c0_80 = arith.constant 0 : index
    %c0_81 = arith.constant 0 : index
    %34 = vector.load %arg2[%c0_80, %c0_81] : memref<1x8xf32, #tpu.memory_space<vmem>>, vector<1x8xf32>
    %35 = vector.broadcast %34 : vector<1x8xf32> to vector<8x8xf32>
    %36 = arith.addf %33, %35 : vector<8x8xf32>
    %cst_82 = arith.constant 0.000000e+00 : f32
    %37 = vector.broadcast %cst_82 : f32 to vector<8x8xf32>
    %38 = arith.maximumf %36, %37 : vector<8x8xf32>
    %c0_83 = arith.constant 0 : index
    %c1_84 = arith.constant 1 : index
    %c0_85 = arith.constant 0 : index
    %c0_86 = arith.constant 0 : index
    %39 = vector.load %arg11[%c0_83, %c1_84, %c0_85, %c0_86] : memref<2x8x8x8xf32, #tpu.memory_space<vmem>>, vector<1x1x8x8xf32>
    %40 = vector.shape_cast %39 : vector<1x1x8x8xf32> to vector<8x8xf32>
    %41 = vector.shape_cast %38 : vector<8x8xf32> to vector<1x1x8x8xf32>
    tpu.vector_store %arg11[%c0_83, %c1_84, %c0_85, %c0_86], %41 {strides = array<i32>} : memref<2x8x8x8xf32, #tpu.memory_space<vmem>>, vector<1x1x8x8xf32>,
    %c0_87 = arith.constant 0 : index
    %c2_88 = arith.constant 2 : index
    %c0_89 = arith.constant 0 : index
    %c0_90 = arith.constant 0 : index
    %42 = vector.load %arg10[%c0_87, %c2_88, %c0_89, %c0_90] : memref<2x8x8x27xf32, #tpu.memory_space<vmem>>, vector<1x1x8x27xf32>
    %43 = vector.shape_cast %42 : vector<1x1x8x27xf32> to vector<8x27xf32>
    %c0_91 = arith.constant 0 : index
    %c0_92 = arith.constant 0 : index
    %44 = vector.load %arg1[%c0_91, %c0_92] : memref<27x8xf32, #tpu.memory_space<vmem>>, vector<27x8xf32>
    %cst_93 = arith.constant dense<0.000000e+00> : vector<8x8xf32>
    %45 = tpu.matmul %43, %44, %cst_93 {dimension_numbers = #tpu.dot_dimension_numbers<[1], [0], [0], [1], [0, 0, 1, 1], [], []>} : vector<8x27xf32>, vector<27x8xf32>, vector<8x8xf32> -> vector<8x8xf32>
    %c0_94 = arith.constant 0 : index
    %c0_95 = arith.constant 0 : index
    %46 = vector.load %arg2[%c0_94, %c0_95] : memref<1x8xf32, #tpu.memory_space<vmem>>, vector<1x8xf32>
    %47 = vector.broadcast %46 : vector<1x8xf32> to vector<8x8xf32>
    %48 = arith.addf %45, %47 : vector<8x8xf32>
    %cst_96 = arith.constant 0.000000e+00 : f32
    %49 = vector.broadcast %cst_96 : f32 to vector<8x8xf32>
    %50 = arith.maximumf %48, %49 : vector<8x8xf32>
    %c0_97 = arith.constant 0 : index
    %c2_98 = arith.constant 2 : index
    %c0_99 = arith.constant 0 : index
    %c0_100 = arith.constant 0 : index
    %51 = vector.load %arg11[%c0_97, %c2_98, %c0_99, %c0_100] : memref<2x8x8x8xf32, #tpu.memory_space<vmem>>, vector<1x1x8x8xf32>
    %52 = vector.shape_cast %51 : vector<1x1x8x8xf32> to vector<8x8xf32>
    %53 = vector.shape_cast %50 : vector<8x8xf32> to vector<1x1x8x8xf32>
    tpu.vector_store %arg11[%c0_97, %c2_98, %c0_99, %c0_100], %53 {strides = array<i32>} : memref<2x8x8x8xf32, #tpu.memory_space<vmem>>, vector<1x1x8x8xf32>,
    %c0_101 = arith.constant 0 : index
    %c3_102 = arith.constant 3 : index
    %c0_103 = arith.constant 0 : index
    %c0_104 = arith.constant 0 : index
    %54 = vector.load %arg10[%c0_101, %c3_102, %c0_103, %c0_104] : memref<2x8x8x27xf32, #tpu.memory_space<vmem>>, vector<1x1x8x27xf32>
    %55 = vector.shape_cast %54 : vector<1x1x8x27xf32> to vector<8x27xf32>
    %c0_105 = arith.constant 0 : index
    %c0_106 = arith.constant 0 : index
    %56 = vector.load %arg1[%c0_105, %c0_106] : memref<27x8xf32, #tpu.memory_space<vmem>>, vector<27x8xf32>
    %cst_107 = arith.constant dense<0.000000e+00> : vector<8x8xf32>
    %57 = tpu.matmul %55, %56, %cst_107 {dimension_numbers = #tpu.dot_dimension_numbers<[1], [0], [0], [1], [0, 0, 1, 1], [], []>} : vector<8x27xf32>, vector<27x8xf32>, vector<8x8xf32> -> vector<8x8xf32>
    %c0_108 = arith.constant 0 : index
    %c0_109 = arith.constant 0 : index
    %58 = vector.load %arg2[%c0_108, %c0_109] : memref<1x8xf32, #tpu.memory_space<vmem>>, vector<1x8xf32>
    %59 = vector.broadcast %58 : vector<1x8xf32> to vector<8x8xf32>
    %60 = arith.addf %57, %59 : vector<8x8xf32>
    %cst_110 = arith.constant 0.000000e+00 : f32
    %61 = vector.broadcast %cst_110 : f32 to vector<8x8xf32>
    %62 = arith.maximumf %60, %61 : vector<8x8xf32>
    %c0_111 = arith.constant 0 : index
    %c3_112 = arith.constant 3 : index
    %c0_113 = arith.constant 0 : index
    %c0_114 = arith.constant 0 : index
    %63 = vector.load %arg11[%c0_111, %c3_112, %c0_113, %c0_114] : memref<2x8x8x8xf32, #tpu.memory_space<vmem>>, vector<1x1x8x8xf32>
    %64 = vector.shape_cast %63 : vector<1x1x8x8xf32> to vector<8x8xf32>
    %65 = vector.shape_cast %62 : vector<8x8xf32> to vector<1x1x8x8xf32>
    tpu.vector_store %arg11[%c0_111, %c3_112, %c0_113, %c0_114], %65 {strides = array<i32>} : memref<2x8x8x8xf32, #tpu.memory_space<vmem>>, vector<1x1x8x8xf32>,
    %c0_115 = arith.constant 0 : index
    %c4_116 = arith.constant 4 : index
    %c0_117 = arith.constant 0 : index
    %c0_118 = arith.constant 0 : index
    %66 = vector.load %arg10[%c0_115, %c4_116, %c0_117, %c0_118] : memref<2x8x8x27xf32, #tpu.memory_space<vmem>>, vector<1x1x8x27xf32>
    %67 = vector.shape_cast %66 : vector<1x1x8x27xf32> to vector<8x27xf32>
    %c0_119 = arith.constant 0 : index
    %c0_120 = arith.constant 0 : index
    %68 = vector.load %arg1[%c0_119, %c0_120] : memref<27x8xf32, #tpu.memory_space<vmem>>, vector<27x8xf32>
    %cst_121 = arith.constant dense<0.000000e+00> : vector<8x8xf32>
    %69 = tpu.matmul %67, %68, %cst_121 {dimension_numbers = #tpu.dot_dimension_numbers<[1], [0], [0], [1], [0, 0, 1, 1], [], []>} : vector<8x27xf32>, vector<27x8xf32>, vector<8x8xf32> -> vector<8x8xf32>
    %c0_122 = arith.constant 0 : index
    %c0_123 = arith.constant 0 : index
    %70 = vector.load %arg2[%c0_122, %c0_123] : memref<1x8xf32, #tpu.memory_space<vmem>>, vector<1x8xf32>
    %71 = vector.broadcast %70 : vector<1x8xf32> to vector<8x8xf32>
    %72 = arith.addf %69, %71 : vector<8x8xf32>
    %cst_124 = arith.constant 0.000000e+00 : f32
    %73 = vector.broadcast %cst_124 : f32 to vector<8x8xf32>
    %74 = arith.maximumf %72, %73 : vector<8x8xf32>
    %c0_125 = arith.constant 0 : index
    %c4_126 = arith.constant 4 : index
    %c0_127 = arith.constant 0 : index
    %c0_128 = arith.constant 0 : index
    %75 = vector.load %arg11[%c0_125, %c4_126, %c0_127, %c0_128] : memref<2x8x8x8xf32, #tpu.memory_space<vmem>>, vector<1x1x8x8xf32>
    %76 = vector.shape_cast %75 : vector<1x1x8x8xf32> to vector<8x8xf32>
    %77 = vector.shape_cast %74 : vector<8x8xf32> to vector<1x1x8x8xf32>
    tpu.vector_store %arg11[%c0_125, %c4_126, %c0_127, %c0_128], %77 {strides = array<i32>} : memref<2x8x8x8xf32, #tpu.memory_space<vmem>>, vector<1x1x8x8xf32>,
    %c0_129 = arith.constant 0 : index
    %c5 = arith.constant 5 : index
    %c0_130 = arith.constant 0 : index
    %c0_131 = arith.constant 0 : index
    %78 = vector.load %arg10[%c0_129, %c5, %c0_130, %c0_131] : memref<2x8x8x27xf32, #tpu.memory_space<vmem>>, vector<1x1x8x27xf32>
    %79 = vector.shape_cast %78 : vector<1x1x8x27xf32> to vector<8x27xf32>
    %c0_132 = arith.constant 0 : index
    %c0_133 = arith.constant 0 : index
    %80 = vector.load %arg1[%c0_132, %c0_133] : memref<27x8xf32, #tpu.memory_space<vmem>>, vector<27x8xf32>
    %cst_134 = arith.constant dense<0.000000e+00> : vector<8x8xf32>
    %81 = tpu.matmul %79, %80, %cst_134 {dimension_numbers = #tpu.dot_dimension_numbers<[1], [0], [0], [1], [0, 0, 1, 1], [], []>} : vector<8x27xf32>, vector<27x8xf32>, vector<8x8xf32> -> vector<8x8xf32>
    %c0_135 = arith.constant 0 : index
    %c0_136 = arith.constant 0 : index
    %82 = vector.load %arg2[%c0_135, %c0_136] : memref<1x8xf32, #tpu.memory_space<vmem>>, vector<1x8xf32>
    %83 = vector.broadcast %82 : vector<1x8xf32> to vector<8x8xf32>
    %84 = arith.addf %81, %83 : vector<8x8xf32>
    %cst_137 = arith.constant 0.000000e+00 : f32
    %85 = vector.broadcast %cst_137 : f32 to vector<8x8xf32>
    %86 = arith.maximumf %84, %85 : vector<8x8xf32>
    %c0_138 = arith.constant 0 : index
    %c5_139 = arith.constant 5 : index
    %c0_140 = arith.constant 0 : index
    %c0_141 = arith.constant 0 : index
    %87 = vector.load %arg11[%c0_138, %c5_139, %c0_140, %c0_141] : memref<2x8x8x8xf32, #tpu.memory_space<vmem>>, vector<1x1x8x8xf32>
    %88 = vector.shape_cast %87 : vector<1x1x8x8xf32> to vector<8x8xf32>
    %89 = vector.shape_cast %86 : vector<8x8xf32> to vector<1x1x8x8xf32>
    tpu.vector_store %arg11[%c0_138, %c5_139, %c0_140, %c0_141], %89 {strides = array<i32>} : memref<2x8x8x8xf32, #tpu.memory_space<vmem>>, vector<1x1x8x8xf32>,
    %c0_142 = arith.constant 0 : index
    %c6_143 = arith.constant 6 : index
    %c0_144 = arith.constant 0 : index
    %c0_145 = arith.constant 0 : index
    %90 = vector.load %arg10[%c0_142, %c6_143, %c0_144, %c0_145] : memref<2x8x8x27xf32, #tpu.memory_space<vmem>>, vector<1x1x8x27xf32>
    %91 = vector.shape_cast %90 : vector<1x1x8x27xf32> to vector<8x27xf32>
    %c0_146 = arith.constant 0 : index
    %c0_147 = arith.constant 0 : index
    %92 = vector.load %arg1[%c0_146, %c0_147] : memref<27x8xf32, #tpu.memory_space<vmem>>, vector<27x8xf32>
    %cst_148 = arith.constant dense<0.000000e+00> : vector<8x8xf32>
    %93 = tpu.matmul %91, %92, %cst_148 {dimension_numbers = #tpu.dot_dimension_numbers<[1], [0], [0], [1], [0, 0, 1, 1], [], []>} : vector<8x27xf32>, vector<27x8xf32>, vector<8x8xf32> -> vector<8x8xf32>
    %c0_149 = arith.constant 0 : index
    %c0_150 = arith.constant 0 : index
    %94 = vector.load %arg2[%c0_149, %c0_150] : memref<1x8xf32, #tpu.memory_space<vmem>>, vector<1x8xf32>
    %95 = vector.broadcast %94 : vector<1x8xf32> to vector<8x8xf32>
    %96 = arith.addf %93, %95 : vector<8x8xf32>
    %cst_151 = arith.constant 0.000000e+00 : f32
    %97 = vector.broadcast %cst_151 : f32 to vector<8x8xf32>
    %98 = arith.maximumf %96, %97 : vector<8x8xf32>
    %c0_152 = arith.constant 0 : index
    %c6_153 = arith.constant 6 : index
    %c0_154 = arith.constant 0 : index
    %c0_155 = arith.constant 0 : index
    %99 = vector.load %arg11[%c0_152, %c6_153, %c0_154, %c0_155] : memref<2x8x8x8xf32, #tpu.memory_space<vmem>>, vector<1x1x8x8xf32>
    %100 = vector.shape_cast %99 : vector<1x1x8x8xf32> to vector<8x8xf32>
    %101 = vector.shape_cast %98 : vector<8x8xf32> to vector<1x1x8x8xf32>
    tpu.vector_store %arg11[%c0_152, %c6_153, %c0_154, %c0_155], %101 {strides = array<i32>} : memref<2x8x8x8xf32, #tpu.memory_space<vmem>>, vector<1x1x8x8xf32>,
    %c0_156 = arith.constant 0 : index
    %c7 = arith.constant 7 : index
    %c0_157 = arith.constant 0 : index
    %c0_158 = arith.constant 0 : index
    %102 = vector.load %arg10[%c0_156, %c7, %c0_157, %c0_158] : memref<2x8x8x27xf32, #tpu.memory_space<vmem>>, vector<1x1x8x27xf32>
    %103 = vector.shape_cast %102 : vector<1x1x8x27xf32> to vector<8x27xf32>
    %c0_159 = arith.constant 0 : index
    %c0_160 = arith.constant 0 : index
    %104 = vector.load %arg1[%c0_159, %c0_160] : memref<27x8xf32, #tpu.memory_space<vmem>>, vector<27x8xf32>
    %cst_161 = arith.constant dense<0.000000e+00> : vector<8x8xf32>
    %105 = tpu.matmul %103, %104, %cst_161 {dimension_numbers = #tpu.dot_dimension_numbers<[1], [0], [0], [1], [0, 0, 1, 1], [], []>} : vector<8x27xf32>, vector<27x8xf32>, vector<8x8xf32> -> vector<8x8xf32>
    %c0_162 = arith.constant 0 : index
    %c0_163 = arith.constant 0 : index
    %106 = vector.load %arg2[%c0_162, %c0_163] : memref<1x8xf32, #tpu.memory_space<vmem>>, vector<1x8xf32>
    %107 = vector.broadcast %106 : vector<1x8xf32> to vector<8x8xf32>
    %108 = arith.addf %105, %107 : vector<8x8xf32>
    %cst_164 = arith.constant 0.000000e+00 : f32
    %109 = vector.broadcast %cst_164 : f32 to vector<8x8xf32>
    %110 = arith.maximumf %108, %109 : vector<8x8xf32>
    %c0_165 = arith.constant 0 : index
    %c7_166 = arith.constant 7 : index
    %c0_167 = arith.constant 0 : index
    %c0_168 = arith.constant 0 : index
    %111 = vector.load %arg11[%c0_165, %c7_166, %c0_167, %c0_168] : memref<2x8x8x8xf32, #tpu.memory_space<vmem>>, vector<1x1x8x8xf32>
    %112 = vector.shape_cast %111 : vector<1x1x8x8xf32> to vector<8x8xf32>
    %113 = vector.shape_cast %110 : vector<8x8xf32> to vector<1x1x8x8xf32>
    tpu.vector_store %arg11[%c0_165, %c7_166, %c0_167, %c0_168], %113 {strides = array<i32>} : memref<2x8x8x8xf32, #tpu.memory_space<vmem>>, vector<1x1x8x8xf32>,
    %c1_169 = arith.constant 1 : index
    %c0_170 = arith.constant 0 : index
    %c0_171 = arith.constant 0 : index
    %c0_172 = arith.constant 0 : index
    %114 = vector.load %arg10[%c1_169, %c0_170, %c0_171, %c0_172] : memref<2x8x8x27xf32, #tpu.memory_space<vmem>>, vector<1x1x8x27xf32>
    %115 = vector.shape_cast %114 : vector<1x1x8x27xf32> to vector<8x27xf32>
    %c0_173 = arith.constant 0 : index
    %c0_174 = arith.constant 0 : index
    %116 = vector.load %arg1[%c0_173, %c0_174] : memref<27x8xf32, #tpu.memory_space<vmem>>, vector<27x8xf32>
    %cst_175 = arith.constant dense<0.000000e+00> : vector<8x8xf32>
    %117 = tpu.matmul %115, %116, %cst_175 {dimension_numbers = #tpu.dot_dimension_numbers<[1], [0], [0], [1], [0, 0, 1, 1], [], []>} : vector<8x27xf32>, vector<27x8xf32>, vector<8x8xf32> -> vector<8x8xf32>
    %c0_176 = arith.constant 0 : index
    %c0_177 = arith.constant 0 : index
    %118 = vector.load %arg2[%c0_176, %c0_177] : memref<1x8xf32, #tpu.memory_space<vmem>>, vector<1x8xf32>
    %119 = vector.broadcast %118 : vector<1x8xf32> to vector<8x8xf32>
    %120 = arith.addf %117, %119 : vector<8x8xf32>
    %cst_178 = arith.constant 0.000000e+00 : f32
    %121 = vector.broadcast %cst_178 : f32 to vector<8x8xf32>
    %122 = arith.maximumf %120, %121 : vector<8x8xf32>
    %c1_179 = arith.constant 1 : index
    %c0_180 = arith.constant 0 : index
    %c0_181 = arith.constant 0 : index
    %c0_182 = arith.constant 0 : index
    %123 = vector.load %arg11[%c1_179, %c0_180, %c0_181, %c0_182] : memref<2x8x8x8xf32, #tpu.memory_space<vmem>>, vector<1x1x8x8xf32>
    %124 = vector.shape_cast %123 : vector<1x1x8x8xf32> to vector<8x8xf32>
    %125 = vector.shape_cast %122 : vector<8x8xf32> to vector<1x1x8x8xf32>
    tpu.vector_store %arg11[%c1_179, %c0_180, %c0_181, %c0_182], %125 {strides = array<i32>} : memref<2x8x8x8xf32, #tpu.memory_space<vmem>>, vector<1x1x8x8xf32>,
    %c1_183 = arith.constant 1 : index
    %c1_184 = arith.constant 1 : index
    %c0_185 = arith.constant 0 : index
    %c0_186 = arith.constant 0 : index
    %126 = vector.load %arg10[%c1_183, %c1_184, %c0_185, %c0_186] : memref<2x8x8x27xf32, #tpu.memory_space<vmem>>, vector<1x1x8x27xf32>
    %127 = vector.shape_cast %126 : vector<1x1x8x27xf32> to vector<8x27xf32>
    %c0_187 = arith.constant 0 : index
    %c0_188 = arith.constant 0 : index
    %128 = vector.load %arg1[%c0_187, %c0_188] : memref<27x8xf32, #tpu.memory_space<vmem>>, vector<27x8xf32>
    %cst_189 = arith.constant dense<0.000000e+00> : vector<8x8xf32>
    %129 = tpu.matmul %127, %128, %cst_189 {dimension_numbers = #tpu.dot_dimension_numbers<[1], [0], [0], [1], [0, 0, 1, 1], [], []>} : vector<8x27xf32>, vector<27x8xf32>, vector<8x8xf32> -> vector<8x8xf32>
    %c0_190 = arith.constant 0 : index
    %c0_191 = arith.constant 0 : index
    %130 = vector.load %arg2[%c0_190, %c0_191] : memref<1x8xf32, #tpu.memory_space<vmem>>, vector<1x8xf32>
    %131 = vector.broadcast %130 : vector<1x8xf32> to vector<8x8xf32>
    %132 = arith.addf %129, %131 : vector<8x8xf32>
    %cst_192 = arith.constant 0.000000e+00 : f32
    %133 = vector.broadcast %cst_192 : f32 to vector<8x8xf32>
    %134 = arith.maximumf %132, %133 : vector<8x8xf32>
    %c1_193 = arith.constant 1 : index
    %c1_194 = arith.constant 1 : index
    %c0_195 = arith.constant 0 : index
    %c0_196 = arith.constant 0 : index
    %135 = vector.load %arg11[%c1_193, %c1_194, %c0_195, %c0_196] : memref<2x8x8x8xf32, #tpu.memory_space<vmem>>, vector<1x1x8x8xf32>
    %136 = vector.shape_cast %135 : vector<1x1x8x8xf32> to vector<8x8xf32>
    %137 = vector.shape_cast %134 : vector<8x8xf32> to vector<1x1x8x8xf32>
    tpu.vector_store %arg11[%c1_193, %c1_194, %c0_195, %c0_196], %137 {strides = array<i32>} : memref<2x8x8x8xf32, #tpu.memory_space<vmem>>, vector<1x1x8x8xf32>,
    %c1_197 = arith.constant 1 : index
    %c2_198 = arith.constant 2 : index
    %c0_199 = arith.constant 0 : index
    %c0_200 = arith.constant 0 : index
    %138 = vector.load %arg10[%c1_197, %c2_198, %c0_199, %c0_200] : memref<2x8x8x27xf32, #tpu.memory_space<vmem>>, vector<1x1x8x27xf32>
    %139 = vector.shape_cast %138 : vector<1x1x8x27xf32> to vector<8x27xf32>
    %c0_201 = arith.constant 0 : index
    %c0_202 = arith.constant 0 : index
    %140 = vector.load %arg1[%c0_201, %c0_202] : memref<27x8xf32, #tpu.memory_space<vmem>>, vector<27x8xf32>
    %cst_203 = arith.constant dense<0.000000e+00> : vector<8x8xf32>
    %141 = tpu.matmul %139, %140, %cst_203 {dimension_numbers = #tpu.dot_dimension_numbers<[1], [0], [0], [1], [0, 0, 1, 1], [], []>} : vector<8x27xf32>, vector<27x8xf32>, vector<8x8xf32> -> vector<8x8xf32>
    %c0_204 = arith.constant 0 : index
    %c0_205 = arith.constant 0 : index
    %142 = vector.load %arg2[%c0_204, %c0_205] : memref<1x8xf32, #tpu.memory_space<vmem>>, vector<1x8xf32>
    %143 = vector.broadcast %142 : vector<1x8xf32> to vector<8x8xf32>
    %144 = arith.addf %141, %143 : vector<8x8xf32>
    %cst_206 = arith.constant 0.000000e+00 : f32
    %145 = vector.broadcast %cst_206 : f32 to vector<8x8xf32>
    %146 = arith.maximumf %144, %145 : vector<8x8xf32>
    %c1_207 = arith.constant 1 : index
    %c2_208 = arith.constant 2 : index
    %c0_209 = arith.constant 0 : index
    %c0_210 = arith.constant 0 : index
    %147 = vector.load %arg11[%c1_207, %c2_208, %c0_209, %c0_210] : memref<2x8x8x8xf32, #tpu.memory_space<vmem>>, vector<1x1x8x8xf32>
    %148 = vector.shape_cast %147 : vector<1x1x8x8xf32> to vector<8x8xf32>
    %149 = vector.shape_cast %146 : vector<8x8xf32> to vector<1x1x8x8xf32>
    tpu.vector_store %arg11[%c1_207, %c2_208, %c0_209, %c0_210], %149 {strides = array<i32>} : memref<2x8x8x8xf32, #tpu.memory_space<vmem>>, vector<1x1x8x8xf32>,
    %c1_211 = arith.constant 1 : index
    %c3_212 = arith.constant 3 : index
    %c0_213 = arith.constant 0 : index
    %c0_214 = arith.constant 0 : index
    %150 = vector.load %arg10[%c1_211, %c3_212, %c0_213, %c0_214] : memref<2x8x8x27xf32, #tpu.memory_space<vmem>>, vector<1x1x8x27xf32>
    %151 = vector.shape_cast %150 : vector<1x1x8x27xf32> to vector<8x27xf32>
    %c0_215 = arith.constant 0 : index
    %c0_216 = arith.constant 0 : index
    %152 = vector.load %arg1[%c0_215, %c0_216] : memref<27x8xf32, #tpu.memory_space<vmem>>, vector<27x8xf32>
    %cst_217 = arith.constant dense<0.000000e+00> : vector<8x8xf32>
    %153 = tpu.matmul %151, %152, %cst_217 {dimension_numbers = #tpu.dot_dimension_numbers<[1], [0], [0], [1], [0, 0, 1, 1], [], []>} : vector<8x27xf32>, vector<27x8xf32>, vector<8x8xf32> -> vector<8x8xf32>
    %c0_218 = arith.constant 0 : index
    %c0_219 = arith.constant 0 : index
    %154 = vector.load %arg2[%c0_218, %c0_219] : memref<1x8xf32, #tpu.memory_space<vmem>>, vector<1x8xf32>
    %155 = vector.broadcast %154 : vector<1x8xf32> to vector<8x8xf32>
    %156 = arith.addf %153, %155 : vector<8x8xf32>
    %cst_220 = arith.constant 0.000000e+00 : f32
    %157 = vector.broadcast %cst_220 : f32 to vector<8x8xf32>
    %158 = arith.maximumf %156, %157 : vector<8x8xf32>
    %c1_221 = arith.constant 1 : index
    %c3_222 = arith.constant 3 : index
    %c0_223 = arith.constant 0 : index
    %c0_224 = arith.constant 0 : index
    %159 = vector.load %arg11[%c1_221, %c3_222, %c0_223, %c0_224] : memref<2x8x8x8xf32, #tpu.memory_space<vmem>>, vector<1x1x8x8xf32>
    %160 = vector.shape_cast %159 : vector<1x1x8x8xf32> to vector<8x8xf32>
    %161 = vector.shape_cast %158 : vector<8x8xf32> to vector<1x1x8x8xf32>
    tpu.vector_store %arg11[%c1_221, %c3_222, %c0_223, %c0_224], %161 {strides = array<i32>} : memref<2x8x8x8xf32, #tpu.memory_space<vmem>>, vector<1x1x8x8xf32>,
    %c1_225 = arith.constant 1 : index
    %c4_226 = arith.constant 4 : index
    %c0_227 = arith.constant 0 : index
    %c0_228 = arith.constant 0 : index
    %162 = vector.load %arg10[%c1_225, %c4_226, %c0_227, %c0_228] : memref<2x8x8x27xf32, #tpu.memory_space<vmem>>, vector<1x1x8x27xf32>
    %163 = vector.shape_cast %162 : vector<1x1x8x27xf32> to vector<8x27xf32>
    %c0_229 = arith.constant 0 : index
    %c0_230 = arith.constant 0 : index
    %164 = vector.load %arg1[%c0_229, %c0_230] : memref<27x8xf32, #tpu.memory_space<vmem>>, vector<27x8xf32>
    %cst_231 = arith.constant dense<0.000000e+00> : vector<8x8xf32>
    %165 = tpu.matmul %163, %164, %cst_231 {dimension_numbers = #tpu.dot_dimension_numbers<[1], [0], [0], [1], [0, 0, 1, 1], [], []>} : vector<8x27xf32>, vector<27x8xf32>, vector<8x8xf32> -> vector<8x8xf32>
    %c0_232 = arith.constant 0 : index
    %c0_233 = arith.constant 0 : index
    %166 = vector.load %arg2[%c0_232, %c0_233] : memref<1x8xf32, #tpu.memory_space<vmem>>, vector<1x8xf32>
    %167 = vector.broadcast %166 : vector<1x8xf32> to vector<8x8xf32>
    %168 = arith.addf %165, %167 : vector<8x8xf32>
    %cst_234 = arith.constant 0.000000e+00 : f32
    %169 = vector.broadcast %cst_234 : f32 to vector<8x8xf32>
    %170 = arith.maximumf %168, %169 : vector<8x8xf32>
    %c1_235 = arith.constant 1 : index
    %c4_236 = arith.constant 4 : index
    %c0_237 = arith.constant 0 : index
    %c0_238 = arith.constant 0 : index
    %171 = vector.load %arg11[%c1_235, %c4_236, %c0_237, %c0_238] : memref<2x8x8x8xf32, #tpu.memory_space<vmem>>, vector<1x1x8x8xf32>
    %172 = vector.shape_cast %171 : vector<1x1x8x8xf32> to vector<8x8xf32>
    %173 = vector.shape_cast %170 : vector<8x8xf32> to vector<1x1x8x8xf32>
    tpu.vector_store %arg11[%c1_235, %c4_236, %c0_237, %c0_238], %173 {strides = array<i32>} : memref<2x8x8x8xf32, #tpu.memory_space<vmem>>, vector<1x1x8x8xf32>,
    %c1_239 = arith.constant 1 : index
    %c5_240 = arith.constant 5 : index
    %c0_241 = arith.constant 0 : index
    %c0_242 = arith.constant 0 : index
    %174 = vector.load %arg10[%c1_239, %c5_240, %c0_241, %c0_242] : memref<2x8x8x27xf32, #tpu.memory_space<vmem>>, vector<1x1x8x27xf32>
    %175 = vector.shape_cast %174 : vector<1x1x8x27xf32> to vector<8x27xf32>
    %c0_243 = arith.constant 0 : index
    %c0_244 = arith.constant 0 : index
    %176 = vector.load %arg1[%c0_243, %c0_244] : memref<27x8xf32, #tpu.memory_space<vmem>>, vector<27x8xf32>
    %cst_245 = arith.constant dense<0.000000e+00> : vector<8x8xf32>
    %177 = tpu.matmul %175, %176, %cst_245 {dimension_numbers = #tpu.dot_dimension_numbers<[1], [0], [0], [1], [0, 0, 1, 1], [], []>} : vector<8x27xf32>, vector<27x8xf32>, vector<8x8xf32> -> vector<8x8xf32>
    %c0_246 = arith.constant 0 : index
    %c0_247 = arith.constant 0 : index
    %178 = vector.load %arg2[%c0_246, %c0_247] : memref<1x8xf32, #tpu.memory_space<vmem>>, vector<1x8xf32>
    %179 = vector.broadcast %178 : vector<1x8xf32> to vector<8x8xf32>
    %180 = arith.addf %177, %179 : vector<8x8xf32>
    %cst_248 = arith.constant 0.000000e+00 : f32
    %181 = vector.broadcast %cst_248 : f32 to vector<8x8xf32>
    %182 = arith.maximumf %180, %181 : vector<8x8xf32>
    %c1_249 = arith.constant 1 : index
    %c5_250 = arith.constant 5 : index
    %c0_251 = arith.constant 0 : index
    %c0_252 = arith.constant 0 : index
    %183 = vector.load %arg11[%c1_249, %c5_250, %c0_251, %c0_252] : memref<2x8x8x8xf32, #tpu.memory_space<vmem>>, vector<1x1x8x8xf32>
    %184 = vector.shape_cast %183 : vector<1x1x8x8xf32> to vector<8x8xf32>
    %185 = vector.shape_cast %182 : vector<8x8xf32> to vector<1x1x8x8xf32>
    tpu.vector_store %arg11[%c1_249, %c5_250, %c0_251, %c0_252], %185 {strides = array<i32>} : memref<2x8x8x8xf32, #tpu.memory_space<vmem>>, vector<1x1x8x8xf32>,
    %c1_253 = arith.constant 1 : index
    %c6_254 = arith.constant 6 : index
    %c0_255 = arith.constant 0 : index
    %c0_256 = arith.constant 0 : index
    %186 = vector.load %arg10[%c1_253, %c6_254, %c0_255, %c0_256] : memref<2x8x8x27xf32, #tpu.memory_space<vmem>>, vector<1x1x8x27xf32>
    %187 = vector.shape_cast %186 : vector<1x1x8x27xf32> to vector<8x27xf32>
    %c0_257 = arith.constant 0 : index
    %c0_258 = arith.constant 0 : index
    %188 = vector.load %arg1[%c0_257, %c0_258] : memref<27x8xf32, #tpu.memory_space<vmem>>, vector<27x8xf32>
    %cst_259 = arith.constant dense<0.000000e+00> : vector<8x8xf32>
    %189 = tpu.matmul %187, %188, %cst_259 {dimension_numbers = #tpu.dot_dimension_numbers<[1], [0], [0], [1], [0, 0, 1, 1], [], []>} : vector<8x27xf32>, vector<27x8xf32>, vector<8x8xf32> -> vector<8x8xf32>
    %c0_260 = arith.constant 0 : index
    %c0_261 = arith.constant 0 : index
    %190 = vector.load %arg2[%c0_260, %c0_261] : memref<1x8xf32, #tpu.memory_space<vmem>>, vector<1x8xf32>
    %191 = vector.broadcast %190 : vector<1x8xf32> to vector<8x8xf32>
    %192 = arith.addf %189, %191 : vector<8x8xf32>
    %cst_262 = arith.constant 0.000000e+00 : f32
    %193 = vector.broadcast %cst_262 : f32 to vector<8x8xf32>
    %194 = arith.maximumf %192, %193 : vector<8x8xf32>
    %c1_263 = arith.constant 1 : index
    %c6_264 = arith.constant 6 : index
    %c0_265 = arith.constant 0 : index
    %c0_266 = arith.constant 0 : index
    %195 = vector.load %arg11[%c1_263, %c6_264, %c0_265, %c0_266] : memref<2x8x8x8xf32, #tpu.memory_space<vmem>>, vector<1x1x8x8xf32>
    %196 = vector.shape_cast %195 : vector<1x1x8x8xf32> to vector<8x8xf32>
    %197 = vector.shape_cast %194 : vector<8x8xf32> to vector<1x1x8x8xf32>
    tpu.vector_store %arg11[%c1_263, %c6_264, %c0_265, %c0_266], %197 {strides = array<i32>} : memref<2x8x8x8xf32, #tpu.memory_space<vmem>>, vector<1x1x8x8xf32>,
    %c1_267 = arith.constant 1 : index
    %c7_268 = arith.constant 7 : index
    %c0_269 = arith.constant 0 : index
    %c0_270 = arith.constant 0 : index
    %198 = vector.load %arg10[%c1_267, %c7_268, %c0_269, %c0_270] : memref<2x8x8x27xf32, #tpu.memory_space<vmem>>, vector<1x1x8x27xf32>
    %199 = vector.shape_cast %198 : vector<1x1x8x27xf32> to vector<8x27xf32>
    %c0_271 = arith.constant 0 : index
    %c0_272 = arith.constant 0 : index
    %200 = vector.load %arg1[%c0_271, %c0_272] : memref<27x8xf32, #tpu.memory_space<vmem>>, vector<27x8xf32>
    %cst_273 = arith.constant dense<0.000000e+00> : vector<8x8xf32>
    %201 = tpu.matmul %199, %200, %cst_273 {dimension_numbers = #tpu.dot_dimension_numbers<[1], [0], [0], [1], [0, 0, 1, 1], [], []>} : vector<8x27xf32>, vector<27x8xf32>, vector<8x8xf32> -> vector<8x8xf32>
    %c0_274 = arith.constant 0 : index
    %c0_275 = arith.constant 0 : index
    %202 = vector.load %arg2[%c0_274, %c0_275] : memref<1x8xf32, #tpu.memory_space<vmem>>, vector<1x8xf32>
    %203 = vector.broadcast %202 : vector<1x8xf32> to vector<8x8xf32>
    %204 = arith.addf %201, %203 : vector<8x8xf32>
    %cst_276 = arith.constant 0.000000e+00 : f32
    %205 = vector.broadcast %cst_276 : f32 to vector<8x8xf32>
    %206 = arith.maximumf %204, %205 : vector<8x8xf32>
    %c1_277 = arith.constant 1 : index
    %c7_278 = arith.constant 7 : index
    %c0_279 = arith.constant 0 : index
    %c0_280 = arith.constant 0 : index
    %207 = vector.load %arg11[%c1_277, %c7_278, %c0_279, %c0_280] : memref<2x8x8x8xf32, #tpu.memory_space<vmem>>, vector<1x1x8x8xf32>
    %208 = vector.shape_cast %207 : vector<1x1x8x8xf32> to vector<8x8xf32>
    %209 = vector.shape_cast %206 : vector<8x8xf32> to vector<1x1x8x8xf32>
    tpu.vector_store %arg11[%c1_277, %c7_278, %c0_279, %c0_280], %209 {strides = array<i32>} : memref<2x8x8x8xf32, #tpu.memory_space<vmem>>, vector<1x1x8x8xf32>,
    %cst_281 = arith.constant 0.000000e+00 : f32
    %210 = vector.broadcast %cst_281 : f32 to vector<2x6x6x8xf32>
    %c0_282 = arith.constant 0 : index
    %c0_283 = arith.constant 0 : index
    %c0_284 = arith.constant 0 : index
    %c0_285 = arith.constant 0 : index
    %211 = vector.load %arg12[%c0_282, %c0_283, %c0_284, %c0_285] : memref<2x6x6x8xf32, #tpu.memory_space<vmem>>, vector<2x6x6x8xf32>
    tpu.vector_store %arg12[%c0_282, %c0_283, %c0_284, %c0_285], %210 {strides = array<i32>} : memref<2x6x6x8xf32, #tpu.memory_space<vmem>>, vector<2x6x6x8xf32>,
    %c0_286 = arith.constant 0 : index
    %c0_287 = arith.constant 0 : index
    %c0_288 = arith.constant 0 : index
    %c0_289 = arith.constant 0 : index
    %212 = vector.load %arg11[%c0_286, %c0_287, %c0_288, %c0_289] : memref<2x8x8x8xf32, #tpu.memory_space<vmem>>, vector<2x1x8x8xf32>
    %213 = vector.shape_cast %212 : vector<2x1x8x8xf32> to vector<2x8x8xf32>
    %c0_290 = arith.constant 0 : index
    %c1_291 = arith.constant 1 : index
    %c0_292 = arith.constant 0 : index
    %c0_293 = arith.constant 0 : index
    %214 = vector.load %arg11[%c0_290, %c1_291, %c0_292, %c0_293] : memref<2x8x8x8xf32, #tpu.memory_space<vmem>>, vector<2x1x8x8xf32>
    %215 = vector.shape_cast %214 : vector<2x1x8x8xf32> to vector<2x8x8xf32>
    %216 = arith.maximumf %213, %215 : vector<2x8x8xf32>
    %217 = vector.extract_strided_slice %216 {offsets = [0, 0, 0], sizes = [2, 1, 8], strides = [1, 1, 1]} : vector<2x8x8xf32> to vector<2x1x8xf32>
    %218 = vector.shape_cast %217 : vector<2x1x8xf32> to vector<2x8xf32>
    %219 = vector.extract_strided_slice %216 {offsets = [0, 1, 0], sizes = [2, 1, 8], strides = [1, 1, 1]} : vector<2x8x8xf32> to vector<2x1x8xf32>
    %220 = vector.shape_cast %219 : vector<2x1x8xf32> to vector<2x8xf32>
    %221 = arith.maximumf %218, %220 : vector<2x8xf32>
    %c0_294 = arith.constant 0 : index
    %c1_295 = arith.constant 1 : index
    %c1_296 = arith.constant 1 : index
    %c0_297 = arith.constant 0 : index
    %222 = vector.load %arg12[%c0_294, %c1_295, %c1_296, %c0_297] : memref<2x6x6x8xf32, #tpu.memory_space<vmem>>, vector<2x1x1x8xf32>
    %223 = vector.shape_cast %222 : vector<2x1x1x8xf32> to vector<2x8xf32>
    %224 = vector.shape_cast %221 : vector<2x8xf32> to vector<2x1x1x8xf32>
    tpu.vector_store %arg12[%c0_294, %c1_295, %c1_296, %c0_297], %224 {strides = array<i32>} : memref<2x6x6x8xf32, #tpu.memory_space<vmem>>, vector<2x1x1x8xf32>,
    %225 = vector.extract_strided_slice %216 {offsets = [0, 2, 0], sizes = [2, 1, 8], strides = [1, 1, 1]} : vector<2x8x8xf32> to vector<2x1x8xf32>
    %226 = vector.shape_cast %225 : vector<2x1x8xf32> to vector<2x8xf32>
    %227 = vector.extract_strided_slice %216 {offsets = [0, 3, 0], sizes = [2, 1, 8], strides = [1, 1, 1]} : vector<2x8x8xf32> to vector<2x1x8xf32>
    %228 = vector.shape_cast %227 : vector<2x1x8xf32> to vector<2x8xf32>
    %229 = arith.maximumf %226, %228 : vector<2x8xf32>
    %c0_298 = arith.constant 0 : index
    %c1_299 = arith.constant 1 : index
    %c2_300 = arith.constant 2 : index
    %c0_301 = arith.constant 0 : index
    %230 = vector.load %arg12[%c0_298, %c1_299, %c2_300, %c0_301] : memref<2x6x6x8xf32, #tpu.memory_space<vmem>>, vector<2x1x1x8xf32>
    %231 = vector.shape_cast %230 : vector<2x1x1x8xf32> to vector<2x8xf32>
    %232 = vector.shape_cast %229 : vector<2x8xf32> to vector<2x1x1x8xf32>
    tpu.vector_store %arg12[%c0_298, %c1_299, %c2_300, %c0_301], %232 {strides = array<i32>} : memref<2x6x6x8xf32, #tpu.memory_space<vmem>>, vector<2x1x1x8xf32>,
    %233 = vector.extract_strided_slice %216 {offsets = [0, 4, 0], sizes = [2, 1, 8], strides = [1, 1, 1]} : vector<2x8x8xf32> to vector<2x1x8xf32>
    %234 = vector.shape_cast %233 : vector<2x1x8xf32> to vector<2x8xf32>
    %235 = vector.extract_strided_slice %216 {offsets = [0, 5, 0], sizes = [2, 1, 8], strides = [1, 1, 1]} : vector<2x8x8xf32> to vector<2x1x8xf32>
    %236 = vector.shape_cast %235 : vector<2x1x8xf32> to vector<2x8xf32>
    %237 = arith.maximumf %234, %236 : vector<2x8xf32>
    %c0_302 = arith.constant 0 : index
    %c1_303 = arith.constant 1 : index
    %c3_304 = arith.constant 3 : index
    %c0_305 = arith.constant 0 : index
    %238 = vector.load %arg12[%c0_302, %c1_303, %c3_304, %c0_305] : memref<2x6x6x8xf32, #tpu.memory_space<vmem>>, vector<2x1x1x8xf32>
    %239 = vector.shape_cast %238 : vector<2x1x1x8xf32> to vector<2x8xf32>
    %240 = vector.shape_cast %237 : vector<2x8xf32> to vector<2x1x1x8xf32>
    tpu.vector_store %arg12[%c0_302, %c1_303, %c3_304, %c0_305], %240 {strides = array<i32>} : memref<2x6x6x8xf32, #tpu.memory_space<vmem>>, vector<2x1x1x8xf32>,
    %241 = vector.extract_strided_slice %216 {offsets = [0, 6, 0], sizes = [2, 1, 8], strides = [1, 1, 1]} : vector<2x8x8xf32> to vector<2x1x8xf32>
    %242 = vector.shape_cast %241 : vector<2x1x8xf32> to vector<2x8xf32>
    %243 = vector.extract_strided_slice %216 {offsets = [0, 7, 0], sizes = [2, 1, 8], strides = [1, 1, 1]} : vector<2x8x8xf32> to vector<2x1x8xf32>
    %244 = vector.shape_cast %243 : vector<2x1x8xf32> to vector<2x8xf32>
    %245 = arith.maximumf %242, %244 : vector<2x8xf32>
    %c0_306 = arith.constant 0 : index
    %c1_307 = arith.constant 1 : index
    %c4_308 = arith.constant 4 : index
    %c0_309 = arith.constant 0 : index
    %246 = vector.load %arg12[%c0_306, %c1_307, %c4_308, %c0_309] : memref<2x6x6x8xf32, #tpu.memory_space<vmem>>, vector<2x1x1x8xf32>
    %247 = vector.shape_cast %246 : vector<2x1x1x8xf32> to vector<2x8xf32>
    %248 = vector.shape_cast %245 : vector<2x8xf32> to vector<2x1x1x8xf32>
    tpu.vector_store %arg12[%c0_306, %c1_307, %c4_308, %c0_309], %248 {strides = array<i32>} : memref<2x6x6x8xf32, #tpu.memory_space<vmem>>, vector<2x1x1x8xf32>,
    %c0_310 = arith.constant 0 : index
    %c2_311 = arith.constant 2 : index
    %c0_312 = arith.constant 0 : index
    %c0_313 = arith.constant 0 : index
    %249 = vector.load %arg11[%c0_310, %c2_311, %c0_312, %c0_313] : memref<2x8x8x8xf32, #tpu.memory_space<vmem>>, vector<2x1x8x8xf32>
    %250 = vector.shape_cast %249 : vector<2x1x8x8xf32> to vector<2x8x8xf32>
    %c0_314 = arith.constant 0 : index
    %c3_315 = arith.constant 3 : index
    %c0_316 = arith.constant 0 : index
    %c0_317 = arith.constant 0 : index
    %251 = vector.load %arg11[%c0_314, %c3_315, %c0_316, %c0_317] : memref<2x8x8x8xf32, #tpu.memory_space<vmem>>, vector<2x1x8x8xf32>
    %252 = vector.shape_cast %251 : vector<2x1x8x8xf32> to vector<2x8x8xf32>
    %253 = arith.maximumf %250, %252 : vector<2x8x8xf32>
    %254 = vector.extract_strided_slice %253 {offsets = [0, 0, 0], sizes = [2, 1, 8], strides = [1, 1, 1]} : vector<2x8x8xf32> to vector<2x1x8xf32>
    %255 = vector.shape_cast %254 : vector<2x1x8xf32> to vector<2x8xf32>
    %256 = vector.extract_strided_slice %253 {offsets = [0, 1, 0], sizes = [2, 1, 8], strides = [1, 1, 1]} : vector<2x8x8xf32> to vector<2x1x8xf32>
    %257 = vector.shape_cast %256 : vector<2x1x8xf32> to vector<2x8xf32>
    %258 = arith.maximumf %255, %257 : vector<2x8xf32>
    %c0_318 = arith.constant 0 : index
    %c2_319 = arith.constant 2 : index
    %c1_320 = arith.constant 1 : index
    %c0_321 = arith.constant 0 : index
    %259 = vector.load %arg12[%c0_318, %c2_319, %c1_320, %c0_321] : memref<2x6x6x8xf32, #tpu.memory_space<vmem>>, vector<2x1x1x8xf32>
    %260 = vector.shape_cast %259 : vector<2x1x1x8xf32> to vector<2x8xf32>
    %261 = vector.shape_cast %258 : vector<2x8xf32> to vector<2x1x1x8xf32>
    tpu.vector_store %arg12[%c0_318, %c2_319, %c1_320, %c0_321], %261 {strides = array<i32>} : memref<2x6x6x8xf32, #tpu.memory_space<vmem>>, vector<2x1x1x8xf32>,
    %262 = vector.extract_strided_slice %253 {offsets = [0, 2, 0], sizes = [2, 1, 8], strides = [1, 1, 1]} : vector<2x8x8xf32> to vector<2x1x8xf32>
    %263 = vector.shape_cast %262 : vector<2x1x8xf32> to vector<2x8xf32>
    %264 = vector.extract_strided_slice %253 {offsets = [0, 3, 0], sizes = [2, 1, 8], strides = [1, 1, 1]} : vector<2x8x8xf32> to vector<2x1x8xf32>
    %265 = vector.shape_cast %264 : vector<2x1x8xf32> to vector<2x8xf32>
    %266 = arith.maximumf %263, %265 : vector<2x8xf32>
    %c0_322 = arith.constant 0 : index
    %c2_323 = arith.constant 2 : index
    %c2_324 = arith.constant 2 : index
    %c0_325 = arith.constant 0 : index
    %267 = vector.load %arg12[%c0_322, %c2_323, %c2_324, %c0_325] : memref<2x6x6x8xf32, #tpu.memory_space<vmem>>, vector<2x1x1x8xf32>
    %268 = vector.shape_cast %267 : vector<2x1x1x8xf32> to vector<2x8xf32>
    %269 = vector.shape_cast %266 : vector<2x8xf32> to vector<2x1x1x8xf32>
    tpu.vector_store %arg12[%c0_322, %c2_323, %c2_324, %c0_325], %269 {strides = array<i32>} : memref<2x6x6x8xf32, #tpu.memory_space<vmem>>, vector<2x1x1x8xf32>,
    %270 = vector.extract_strided_slice %253 {offsets = [0, 4, 0], sizes = [2, 1, 8], strides = [1, 1, 1]} : vector<2x8x8xf32> to vector<2x1x8xf32>
    %271 = vector.shape_cast %270 : vector<2x1x8xf32> to vector<2x8xf32>
    %272 = vector.extract_strided_slice %253 {offsets = [0, 5, 0], sizes = [2, 1, 8], strides = [1, 1, 1]} : vector<2x8x8xf32> to vector<2x1x8xf32>
    %273 = vector.shape_cast %272 : vector<2x1x8xf32> to vector<2x8xf32>
    %274 = arith.maximumf %271, %273 : vector<2x8xf32>
    %c0_326 = arith.constant 0 : index
    %c2_327 = arith.constant 2 : index
    %c3_328 = arith.constant 3 : index
    %c0_329 = arith.constant 0 : index
    %275 = vector.load %arg12[%c0_326, %c2_327, %c3_328, %c0_329] : memref<2x6x6x8xf32, #tpu.memory_space<vmem>>, vector<2x1x1x8xf32>
    %276 = vector.shape_cast %275 : vector<2x1x1x8xf32> to vector<2x8xf32>
    %277 = vector.shape_cast %274 : vector<2x8xf32> to vector<2x1x1x8xf32>
    tpu.vector_store %arg12[%c0_326, %c2_327, %c3_328, %c0_329], %277 {strides = array<i32>} : memref<2x6x6x8xf32, #tpu.memory_space<vmem>>, vector<2x1x1x8xf32>,
    %278 = vector.extract_strided_slice %253 {offsets = [0, 6, 0], sizes = [2, 1, 8], strides = [1, 1, 1]} : vector<2x8x8xf32> to vector<2x1x8xf32>
    %279 = vector.shape_cast %278 : vector<2x1x8xf32> to vector<2x8xf32>
    %280 = vector.extract_strided_slice %253 {offsets = [0, 7, 0], sizes = [2, 1, 8], strides = [1, 1, 1]} : vector<2x8x8xf32> to vector<2x1x8xf32>
    %281 = vector.shape_cast %280 : vector<2x1x8xf32> to vector<2x8xf32>
    %282 = arith.maximumf %279, %281 : vector<2x8xf32>
    %c0_330 = arith.constant 0 : index
    %c2_331 = arith.constant 2 : index
    %c4_332 = arith.constant 4 : index
    %c0_333 = arith.constant 0 : index
    %283 = vector.load %arg12[%c0_330, %c2_331, %c4_332, %c0_333] : memref<2x6x6x8xf32, #tpu.memory_space<vmem>>, vector<2x1x1x8xf32>
    %284 = vector.shape_cast %283 : vector<2x1x1x8xf32> to vector<2x8xf32>
    %285 = vector.shape_cast %282 : vector<2x8xf32> to vector<2x1x1x8xf32>
    tpu.vector_store %arg12[%c0_330, %c2_331, %c4_332, %c0_333], %285 {strides = array<i32>} : memref<2x6x6x8xf32, #tpu.memory_space<vmem>>, vector<2x1x1x8xf32>,
    %c0_334 = arith.constant 0 : index
    %c4_335 = arith.constant 4 : index
    %c0_336 = arith.constant 0 : index
    %c0_337 = arith.constant 0 : index
    %286 = vector.load %arg11[%c0_334, %c4_335, %c0_336, %c0_337] : memref<2x8x8x8xf32, #tpu.memory_space<vmem>>, vector<2x1x8x8xf32>
    %287 = vector.shape_cast %286 : vector<2x1x8x8xf32> to vector<2x8x8xf32>
    %c0_338 = arith.constant 0 : index
    %c5_339 = arith.constant 5 : index
    %c0_340 = arith.constant 0 : index
    %c0_341 = arith.constant 0 : index
    %288 = vector.load %arg11[%c0_338, %c5_339, %c0_340, %c0_341] : memref<2x8x8x8xf32, #tpu.memory_space<vmem>>, vector<2x1x8x8xf32>
    %289 = vector.shape_cast %288 : vector<2x1x8x8xf32> to vector<2x8x8xf32>
    %290 = arith.maximumf %287, %289 : vector<2x8x8xf32>
    %291 = vector.extract_strided_slice %290 {offsets = [0, 0, 0], sizes = [2, 1, 8], strides = [1, 1, 1]} : vector<2x8x8xf32> to vector<2x1x8xf32>
    %292 = vector.shape_cast %291 : vector<2x1x8xf32> to vector<2x8xf32>
    %293 = vector.extract_strided_slice %290 {offsets = [0, 1, 0], sizes = [2, 1, 8], strides = [1, 1, 1]} : vector<2x8x8xf32> to vector<2x1x8xf32>
    %294 = vector.shape_cast %293 : vector<2x1x8xf32> to vector<2x8xf32>
    %295 = arith.maximumf %292, %294 : vector<2x8xf32>
    %c0_342 = arith.constant 0 : index
    %c3_343 = arith.constant 3 : index
    %c1_344 = arith.constant 1 : index
    %c0_345 = arith.constant 0 : index
    %296 = vector.load %arg12[%c0_342, %c3_343, %c1_344, %c0_345] : memref<2x6x6x8xf32, #tpu.memory_space<vmem>>, vector<2x1x1x8xf32>
    %297 = vector.shape_cast %296 : vector<2x1x1x8xf32> to vector<2x8xf32>
    %298 = vector.shape_cast %295 : vector<2x8xf32> to vector<2x1x1x8xf32>
    tpu.vector_store %arg12[%c0_342, %c3_343, %c1_344, %c0_345], %298 {strides = array<i32>} : memref<2x6x6x8xf32, #tpu.memory_space<vmem>>, vector<2x1x1x8xf32>,
    %299 = vector.extract_strided_slice %290 {offsets = [0, 2, 0], sizes = [2, 1, 8], strides = [1, 1, 1]} : vector<2x8x8xf32> to vector<2x1x8xf32>
    %300 = vector.shape_cast %299 : vector<2x1x8xf32> to vector<2x8xf32>
    %301 = vector.extract_strided_slice %290 {offsets = [0, 3, 0], sizes = [2, 1, 8], strides = [1, 1, 1]} : vector<2x8x8xf32> to vector<2x1x8xf32>
    %302 = vector.shape_cast %301 : vector<2x1x8xf32> to vector<2x8xf32>
    %303 = arith.maximumf %300, %302 : vector<2x8xf32>
    %c0_346 = arith.constant 0 : index
    %c3_347 = arith.constant 3 : index
    %c2_348 = arith.constant 2 : index
    %c0_349 = arith.constant 0 : index
    %304 = vector.load %arg12[%c0_346, %c3_347, %c2_348, %c0_349] : memref<2x6x6x8xf32, #tpu.memory_space<vmem>>, vector<2x1x1x8xf32>
    %305 = vector.shape_cast %304 : vector<2x1x1x8xf32> to vector<2x8xf32>
    %306 = vector.shape_cast %303 : vector<2x8xf32> to vector<2x1x1x8xf32>
    tpu.vector_store %arg12[%c0_346, %c3_347, %c2_348, %c0_349], %306 {strides = array<i32>} : memref<2x6x6x8xf32, #tpu.memory_space<vmem>>, vector<2x1x1x8xf32>,
    %307 = vector.extract_strided_slice %290 {offsets = [0, 4, 0], sizes = [2, 1, 8], strides = [1, 1, 1]} : vector<2x8x8xf32> to vector<2x1x8xf32>
    %308 = vector.shape_cast %307 : vector<2x1x8xf32> to vector<2x8xf32>
    %309 = vector.extract_strided_slice %290 {offsets = [0, 5, 0], sizes = [2, 1, 8], strides = [1, 1, 1]} : vector<2x8x8xf32> to vector<2x1x8xf32>
    %310 = vector.shape_cast %309 : vector<2x1x8xf32> to vector<2x8xf32>
    %311 = arith.maximumf %308, %310 : vector<2x8xf32>
    %c0_350 = arith.constant 0 : index
    %c3_351 = arith.constant 3 : index
    %c3_352 = arith.constant 3 : index
    %c0_353 = arith.constant 0 : index
    %312 = vector.load %arg12[%c0_350, %c3_351, %c3_352, %c0_353] : memref<2x6x6x8xf32, #tpu.memory_space<vmem>>, vector<2x1x1x8xf32>
    %313 = vector.shape_cast %312 : vector<2x1x1x8xf32> to vector<2x8xf32>
    %314 = vector.shape_cast %311 : vector<2x8xf32> to vector<2x1x1x8xf32>
    tpu.vector_store %arg12[%c0_350, %c3_351, %c3_352, %c0_353], %314 {strides = array<i32>} : memref<2x6x6x8xf32, #tpu.memory_space<vmem>>, vector<2x1x1x8xf32>,
    %315 = vector.extract_strided_slice %290 {offsets = [0, 6, 0], sizes = [2, 1, 8], strides = [1, 1, 1]} : vector<2x8x8xf32> to vector<2x1x8xf32>
    %316 = vector.shape_cast %315 : vector<2x1x8xf32> to vector<2x8xf32>
    %317 = vector.extract_strided_slice %290 {offsets = [0, 7, 0], sizes = [2, 1, 8], strides = [1, 1, 1]} : vector<2x8x8xf32> to vector<2x1x8xf32>
    %318 = vector.shape_cast %317 : vector<2x1x8xf32> to vector<2x8xf32>
    %319 = arith.maximumf %316, %318 : vector<2x8xf32>
    %c0_354 = arith.constant 0 : index
    %c3_355 = arith.constant 3 : index
    %c4_356 = arith.constant 4 : index
    %c0_357 = arith.constant 0 : index
    %320 = vector.load %arg12[%c0_354, %c3_355, %c4_356, %c0_357] : memref<2x6x6x8xf32, #tpu.memory_space<vmem>>, vector<2x1x1x8xf32>
    %321 = vector.shape_cast %320 : vector<2x1x1x8xf32> to vector<2x8xf32>
    %322 = vector.shape_cast %319 : vector<2x8xf32> to vector<2x1x1x8xf32>
    tpu.vector_store %arg12[%c0_354, %c3_355, %c4_356, %c0_357], %322 {strides = array<i32>} : memref<2x6x6x8xf32, #tpu.memory_space<vmem>>, vector<2x1x1x8xf32>,
    %c0_358 = arith.constant 0 : index
    %c6_359 = arith.constant 6 : index
    %c0_360 = arith.constant 0 : index
    %c0_361 = arith.constant 0 : index
    %323 = vector.load %arg11[%c0_358, %c6_359, %c0_360, %c0_361] : memref<2x8x8x8xf32, #tpu.memory_space<vmem>>, vector<2x1x8x8xf32>
    %324 = vector.shape_cast %323 : vector<2x1x8x8xf32> to vector<2x8x8xf32>
    %c0_362 = arith.constant 0 : index
    %c7_363 = arith.constant 7 : index
    %c0_364 = arith.constant 0 : index
    %c0_365 = arith.constant 0 : index
    %325 = vector.load %arg11[%c0_362, %c7_363, %c0_364, %c0_365] : memref<2x8x8x8xf32, #tpu.memory_space<vmem>>, vector<2x1x8x8xf32>
    %326 = vector.shape_cast %325 : vector<2x1x8x8xf32> to vector<2x8x8xf32>
    %327 = arith.maximumf %324, %326 : vector<2x8x8xf32>
    %328 = vector.extract_strided_slice %327 {offsets = [0, 0, 0], sizes = [2, 1, 8], strides = [1, 1, 1]} : vector<2x8x8xf32> to vector<2x1x8xf32>
    %329 = vector.shape_cast %328 : vector<2x1x8xf32> to vector<2x8xf32>
    %330 = vector.extract_strided_slice %327 {offsets = [0, 1, 0], sizes = [2, 1, 8], strides = [1, 1, 1]} : vector<2x8x8xf32> to vector<2x1x8xf32>
    %331 = vector.shape_cast %330 : vector<2x1x8xf32> to vector<2x8xf32>
    %332 = arith.maximumf %329, %331 : vector<2x8xf32>
    %c0_366 = arith.constant 0 : index
    %c4_367 = arith.constant 4 : index
    %c1_368 = arith.constant 1 : index
    %c0_369 = arith.constant 0 : index
    %333 = vector.load %arg12[%c0_366, %c4_367, %c1_368, %c0_369] : memref<2x6x6x8xf32, #tpu.memory_space<vmem>>, vector<2x1x1x8xf32>
    %334 = vector.shape_cast %333 : vector<2x1x1x8xf32> to vector<2x8xf32>
    %335 = vector.shape_cast %332 : vector<2x8xf32> to vector<2x1x1x8xf32>
    tpu.vector_store %arg12[%c0_366, %c4_367, %c1_368, %c0_369], %335 {strides = array<i32>} : memref<2x6x6x8xf32, #tpu.memory_space<vmem>>, vector<2x1x1x8xf32>,
    %336 = vector.extract_strided_slice %327 {offsets = [0, 2, 0], sizes = [2, 1, 8], strides = [1, 1, 1]} : vector<2x8x8xf32> to vector<2x1x8xf32>
    %337 = vector.shape_cast %336 : vector<2x1x8xf32> to vector<2x8xf32>
    %338 = vector.extract_strided_slice %327 {offsets = [0, 3, 0], sizes = [2, 1, 8], strides = [1, 1, 1]} : vector<2x8x8xf32> to vector<2x1x8xf32>
    %339 = vector.shape_cast %338 : vector<2x1x8xf32> to vector<2x8xf32>
    %340 = arith.maximumf %337, %339 : vector<2x8xf32>
    %c0_370 = arith.constant 0 : index
    %c4_371 = arith.constant 4 : index
    %c2_372 = arith.constant 2 : index
    %c0_373 = arith.constant 0 : index
    %341 = vector.load %arg12[%c0_370, %c4_371, %c2_372, %c0_373] : memref<2x6x6x8xf32, #tpu.memory_space<vmem>>, vector<2x1x1x8xf32>
    %342 = vector.shape_cast %341 : vector<2x1x1x8xf32> to vector<2x8xf32>
    %343 = vector.shape_cast %340 : vector<2x8xf32> to vector<2x1x1x8xf32>
    tpu.vector_store %arg12[%c0_370, %c4_371, %c2_372, %c0_373], %343 {strides = array<i32>} : memref<2x6x6x8xf32, #tpu.memory_space<vmem>>, vector<2x1x1x8xf32>,
    %344 = vector.extract_strided_slice %327 {offsets = [0, 4, 0], sizes = [2, 1, 8], strides = [1, 1, 1]} : vector<2x8x8xf32> to vector<2x1x8xf32>
    %345 = vector.shape_cast %344 : vector<2x1x8xf32> to vector<2x8xf32>
    %346 = vector.extract_strided_slice %327 {offsets = [0, 5, 0], sizes = [2, 1, 8], strides = [1, 1, 1]} : vector<2x8x8xf32> to vector<2x1x8xf32>
    %347 = vector.shape_cast %346 : vector<2x1x8xf32> to vector<2x8xf32>
    %348 = arith.maximumf %345, %347 : vector<2x8xf32>
    %c0_374 = arith.constant 0 : index
    %c4_375 = arith.constant 4 : index
    %c3_376 = arith.constant 3 : index
    %c0_377 = arith.constant 0 : index
    %349 = vector.load %arg12[%c0_374, %c4_375, %c3_376, %c0_377] : memref<2x6x6x8xf32, #tpu.memory_space<vmem>>, vector<2x1x1x8xf32>
    %350 = vector.shape_cast %349 : vector<2x1x1x8xf32> to vector<2x8xf32>
    %351 = vector.shape_cast %348 : vector<2x8xf32> to vector<2x1x1x8xf32>
    tpu.vector_store %arg12[%c0_374, %c4_375, %c3_376, %c0_377], %351 {strides = array<i32>} : memref<2x6x6x8xf32, #tpu.memory_space<vmem>>, vector<2x1x1x8xf32>,
    %352 = vector.extract_strided_slice %327 {offsets = [0, 6, 0], sizes = [2, 1, 8], strides = [1, 1, 1]} : vector<2x8x8xf32> to vector<2x1x8xf32>
    %353 = vector.shape_cast %352 : vector<2x1x8xf32> to vector<2x8xf32>
    %354 = vector.extract_strided_slice %327 {offsets = [0, 7, 0], sizes = [2, 1, 8], strides = [1, 1, 1]} : vector<2x8x8xf32> to vector<2x1x8xf32>
    %355 = vector.shape_cast %354 : vector<2x1x8xf32> to vector<2x8xf32>
    %356 = arith.maximumf %353, %355 : vector<2x8xf32>
    %c0_378 = arith.constant 0 : index
    %c4_379 = arith.constant 4 : index
    %c4_380 = arith.constant 4 : index
    %c0_381 = arith.constant 0 : index
    %357 = vector.load %arg12[%c0_378, %c4_379, %c4_380, %c0_381] : memref<2x6x6x8xf32, #tpu.memory_space<vmem>>, vector<2x1x1x8xf32>
    %358 = vector.shape_cast %357 : vector<2x1x1x8xf32> to vector<2x8xf32>
    %359 = vector.shape_cast %356 : vector<2x8xf32> to vector<2x1x1x8xf32>
    tpu.vector_store %arg12[%c0_378, %c4_379, %c4_380, %c0_381], %359 {strides = array<i32>} : memref<2x6x6x8xf32, #tpu.memory_space<vmem>>, vector<2x1x1x8xf32>,
    %c0_382 = arith.constant 0 : index
    %c0_383 = arith.constant 0 : index
    %c0_384 = arith.constant 0 : index
    %c0_385 = arith.constant 0 : index
    %360 = vector.load %arg12[%c0_382, %c0_383, %c0_384, %c0_385] : memref<2x6x6x8xf32, #tpu.memory_space<vmem>>, vector<2x4x4x8xf32>
    %c0_386 = arith.constant 0 : index
    %c0_387 = arith.constant 0 : index
    %361 = vector.load %arg3[%c0_386, %c0_387] : memref<9x8xf32, #tpu.memory_space<vmem>>, vector<1x8xf32>
    %362 = vector.shape_cast %361 : vector<1x8xf32> to vector<1x1x1x8xf32>
    %363 = vector.broadcast %362 : vector<1x1x1x8xf32> to vector<2x4x4x8xf32>
    %364 = arith.mulf %360, %363 : vector<2x4x4x8xf32>
    %c0_388 = arith.constant 0 : index
    %c0_389 = arith.constant 0 : index
    %c1_390 = arith.constant 1 : index
    %c0_391 = arith.constant 0 : index
    %365 = vector.load %arg12[%c0_388, %c0_389, %c1_390, %c0_391] : memref<2x6x6x8xf32, #tpu.memory_space<vmem>>, vector<2x4x4x8xf32>
    %c1_392 = arith.constant 1 : index
    %c0_393 = arith.constant 0 : index
    %366 = vector.load %arg3[%c1_392, %c0_393] : memref<9x8xf32, #tpu.memory_space<vmem>>, vector<1x8xf32>
    %367 = vector.shape_cast %366 : vector<1x8xf32> to vector<1x1x1x8xf32>
    %368 = vector.broadcast %367 : vector<1x1x1x8xf32> to vector<2x4x4x8xf32>
    %369 = arith.mulf %365, %368 : vector<2x4x4x8xf32>
    %c0_394 = arith.constant 0 : index
    %c0_395 = arith.constant 0 : index
    %c2_396 = arith.constant 2 : index
    %c0_397 = arith.constant 0 : index
    %370 = vector.load %arg12[%c0_394, %c0_395, %c2_396, %c0_397] : memref<2x6x6x8xf32, #tpu.memory_space<vmem>>, vector<2x4x4x8xf32>
    %c2_398 = arith.constant 2 : index
    %c0_399 = arith.constant 0 : index
    %371 = vector.load %arg3[%c2_398, %c0_399] : memref<9x8xf32, #tpu.memory_space<vmem>>, vector<1x8xf32>
    %372 = vector.shape_cast %371 : vector<1x8xf32> to vector<1x1x1x8xf32>
    %373 = vector.broadcast %372 : vector<1x1x1x8xf32> to vector<2x4x4x8xf32>
    %374 = arith.mulf %370, %373 : vector<2x4x4x8xf32>
    %c0_400 = arith.constant 0 : index
    %c1_401 = arith.constant 1 : index
    %c0_402 = arith.constant 0 : index
    %c0_403 = arith.constant 0 : index
    %375 = vector.load %arg12[%c0_400, %c1_401, %c0_402, %c0_403] : memref<2x6x6x8xf32, #tpu.memory_space<vmem>>, vector<2x4x4x8xf32>
    %c3_404 = arith.constant 3 : index
    %c0_405 = arith.constant 0 : index
    %376 = vector.load %arg3[%c3_404, %c0_405] : memref<9x8xf32, #tpu.memory_space<vmem>>, vector<1x8xf32>
    %377 = vector.shape_cast %376 : vector<1x8xf32> to vector<1x1x1x8xf32>
    %378 = vector.broadcast %377 : vector<1x1x1x8xf32> to vector<2x4x4x8xf32>
    %379 = arith.mulf %375, %378 : vector<2x4x4x8xf32>
    %c0_406 = arith.constant 0 : index
    %c1_407 = arith.constant 1 : index
    %c1_408 = arith.constant 1 : index
    %c0_409 = arith.constant 0 : index
    %380 = vector.load %arg12[%c0_406, %c1_407, %c1_408, %c0_409] : memref<2x6x6x8xf32, #tpu.memory_space<vmem>>, vector<2x4x4x8xf32>
    %c4_410 = arith.constant 4 : index
    %c0_411 = arith.constant 0 : index
    %381 = vector.load %arg3[%c4_410, %c0_411] : memref<9x8xf32, #tpu.memory_space<vmem>>, vector<1x8xf32>
    %382 = vector.shape_cast %381 : vector<1x8xf32> to vector<1x1x1x8xf32>
    %383 = vector.broadcast %382 : vector<1x1x1x8xf32> to vector<2x4x4x8xf32>
    %384 = arith.mulf %380, %383 : vector<2x4x4x8xf32>
    %c0_412 = arith.constant 0 : index
    %c1_413 = arith.constant 1 : index
    %c2_414 = arith.constant 2 : index
    %c0_415 = arith.constant 0 : index
    %385 = vector.load %arg12[%c0_412, %c1_413, %c2_414, %c0_415] : memref<2x6x6x8xf32, #tpu.memory_space<vmem>>, vector<2x4x4x8xf32>
    %c5_416 = arith.constant 5 : index
    %c0_417 = arith.constant 0 : index
    %386 = vector.load %arg3[%c5_416, %c0_417] : memref<9x8xf32, #tpu.memory_space<vmem>>, vector<1x8xf32>
    %387 = vector.shape_cast %386 : vector<1x8xf32> to vector<1x1x1x8xf32>
    %388 = vector.broadcast %387 : vector<1x1x1x8xf32> to vector<2x4x4x8xf32>
    %389 = arith.mulf %385, %388 : vector<2x4x4x8xf32>
    %c0_418 = arith.constant 0 : index
    %c2_419 = arith.constant 2 : index
    %c0_420 = arith.constant 0 : index
    %c0_421 = arith.constant 0 : index
    %390 = vector.load %arg12[%c0_418, %c2_419, %c0_420, %c0_421] : memref<2x6x6x8xf32, #tpu.memory_space<vmem>>, vector<2x4x4x8xf32>
    %c6_422 = arith.constant 6 : index
    %c0_423 = arith.constant 0 : index
    %391 = vector.load %arg3[%c6_422, %c0_423] : memref<9x8xf32, #tpu.memory_space<vmem>>, vector<1x8xf32>
    %392 = vector.shape_cast %391 : vector<1x8xf32> to vector<1x1x1x8xf32>
    %393 = vector.broadcast %392 : vector<1x1x1x8xf32> to vector<2x4x4x8xf32>
    %394 = arith.mulf %390, %393 : vector<2x4x4x8xf32>
    %c0_424 = arith.constant 0 : index
    %c2_425 = arith.constant 2 : index
    %c1_426 = arith.constant 1 : index
    %c0_427 = arith.constant 0 : index
    %395 = vector.load %arg12[%c0_424, %c2_425, %c1_426, %c0_427] : memref<2x6x6x8xf32, #tpu.memory_space<vmem>>, vector<2x4x4x8xf32>
    %c7_428 = arith.constant 7 : index
    %c0_429 = arith.constant 0 : index
    %396 = vector.load %arg3[%c7_428, %c0_429] : memref<9x8xf32, #tpu.memory_space<vmem>>, vector<1x8xf32>
    %397 = vector.shape_cast %396 : vector<1x8xf32> to vector<1x1x1x8xf32>
    %398 = vector.broadcast %397 : vector<1x1x1x8xf32> to vector<2x4x4x8xf32>
    %399 = arith.mulf %395, %398 : vector<2x4x4x8xf32>
    %c0_430 = arith.constant 0 : index
    %c2_431 = arith.constant 2 : index
    %c2_432 = arith.constant 2 : index
    %c0_433 = arith.constant 0 : index
    %400 = vector.load %arg12[%c0_430, %c2_431, %c2_432, %c0_433] : memref<2x6x6x8xf32, #tpu.memory_space<vmem>>, vector<2x4x4x8xf32>
    %c8 = arith.constant 8 : index
    %c0_434 = arith.constant 0 : index
    %401 = vector.load %arg3[%c8, %c0_434] : memref<9x8xf32, #tpu.memory_space<vmem>>, vector<1x8xf32>
    %402 = vector.shape_cast %401 : vector<1x8xf32> to vector<1x1x1x8xf32>
    %403 = vector.broadcast %402 : vector<1x1x1x8xf32> to vector<2x4x4x8xf32>
    %404 = arith.mulf %400, %403 : vector<2x4x4x8xf32>
    %405 = arith.addf %364, %369 : vector<2x4x4x8xf32>
    %406 = arith.addf %374, %379 : vector<2x4x4x8xf32>
    %407 = arith.addf %384, %389 : vector<2x4x4x8xf32>
    %408 = arith.addf %394, %399 : vector<2x4x4x8xf32>
    %409 = arith.addf %405, %406 : vector<2x4x4x8xf32>
    %410 = arith.addf %407, %408 : vector<2x4x4x8xf32>
    %411 = arith.addf %409, %410 : vector<2x4x4x8xf32>
    %412 = arith.addf %411, %404 : vector<2x4x4x8xf32>
    %c0_435 = arith.constant 0 : index
    %c0_436 = arith.constant 0 : index
    %413 = vector.load %arg4[%c0_435, %c0_436] : memref<1x8xf32, #tpu.memory_space<vmem>>, vector<1x8xf32>
    %414 = vector.shape_cast %413 : vector<1x8xf32> to vector<1x1x1x8xf32>
    %415 = vector.broadcast %414 : vector<1x1x1x8xf32> to vector<2x4x4x8xf32>
    %416 = arith.addf %412, %415 : vector<2x4x4x8xf32>
    %cst_437 = arith.constant 0.000000e+00 : f32
    %417 = vector.broadcast %cst_437 : f32 to vector<2x4x4x8xf32>
    %418 = arith.maximumf %416, %417 : vector<2x4x4x8xf32>
    %419 = vector.extract_strided_slice %418 {offsets = [0, 0, 0, 0], sizes = [1, 1, 4, 8], strides = [1, 1, 1, 1]} : vector<2x4x4x8xf32> to vector<1x1x4x8xf32>
    %420 = vector.shape_cast %419 : vector<1x1x4x8xf32> to vector<4x8xf32>
    %c0_438 = arith.constant 0 : index
    %c0_439 = arith.constant 0 : index
    %421 = vector.load %arg5[%c0_438, %c0_439] : memref<8x16xf32, #tpu.memory_space<vmem>>, vector<8x16xf32>
    %cst_440 = arith.constant dense<0.000000e+00> : vector<4x16xf32>
    %422 = tpu.matmul %420, %421, %cst_440 {dimension_numbers = #tpu.dot_dimension_numbers<[1], [0], [0], [1], [0, 0, 1, 1], [], []>} : vector<4x8xf32>, vector<8x16xf32>, vector<4x16xf32> -> vector<4x16xf32>
    %c0_441 = arith.constant 0 : index
    %c0_442 = arith.constant 0 : index
    %423 = vector.load %arg6[%c0_441, %c0_442] : memref<1x16xf32, #tpu.memory_space<vmem>>, vector<1x16xf32>
    %424 = vector.broadcast %423 : vector<1x16xf32> to vector<4x16xf32>
    %425 = arith.addf %422, %424 : vector<4x16xf32>
    %cst_443 = arith.constant 0.000000e+00 : f32
    %426 = vector.broadcast %cst_443 : f32 to vector<4x16xf32>
    %427 = arith.maximumf %425, %426 : vector<4x16xf32>
    %428 = vector.extract_strided_slice %418 {offsets = [0, 1, 0, 0], sizes = [1, 1, 4, 8], strides = [1, 1, 1, 1]} : vector<2x4x4x8xf32> to vector<1x1x4x8xf32>
    %429 = vector.shape_cast %428 : vector<1x1x4x8xf32> to vector<4x8xf32>
    %c0_444 = arith.constant 0 : index
    %c0_445 = arith.constant 0 : index
    %430 = vector.load %arg5[%c0_444, %c0_445] : memref<8x16xf32, #tpu.memory_space<vmem>>, vector<8x16xf32>
    %cst_446 = arith.constant dense<0.000000e+00> : vector<4x16xf32>
    %431 = tpu.matmul %429, %430, %cst_446 {dimension_numbers = #tpu.dot_dimension_numbers<[1], [0], [0], [1], [0, 0, 1, 1], [], []>} : vector<4x8xf32>, vector<8x16xf32>, vector<4x16xf32> -> vector<4x16xf32>
    %c0_447 = arith.constant 0 : index
    %c0_448 = arith.constant 0 : index
    %432 = vector.load %arg6[%c0_447, %c0_448] : memref<1x16xf32, #tpu.memory_space<vmem>>, vector<1x16xf32>
    %433 = vector.broadcast %432 : vector<1x16xf32> to vector<4x16xf32>
    %434 = arith.addf %431, %433 : vector<4x16xf32>
    %cst_449 = arith.constant 0.000000e+00 : f32
    %435 = vector.broadcast %cst_449 : f32 to vector<4x16xf32>
    %436 = arith.maximumf %434, %435 : vector<4x16xf32>
    %437 = vector.extract_strided_slice %418 {offsets = [0, 2, 0, 0], sizes = [1, 1, 4, 8], strides = [1, 1, 1, 1]} : vector<2x4x4x8xf32> to vector<1x1x4x8xf32>
    %438 = vector.shape_cast %437 : vector<1x1x4x8xf32> to vector<4x8xf32>
    %c0_450 = arith.constant 0 : index
    %c0_451 = arith.constant 0 : index
    %439 = vector.load %arg5[%c0_450, %c0_451] : memref<8x16xf32, #tpu.memory_space<vmem>>, vector<8x16xf32>
    %cst_452 = arith.constant dense<0.000000e+00> : vector<4x16xf32>
    %440 = tpu.matmul %438, %439, %cst_452 {dimension_numbers = #tpu.dot_dimension_numbers<[1], [0], [0], [1], [0, 0, 1, 1], [], []>} : vector<4x8xf32>, vector<8x16xf32>, vector<4x16xf32> -> vector<4x16xf32>
    %c0_453 = arith.constant 0 : index
    %c0_454 = arith.constant 0 : index
    %441 = vector.load %arg6[%c0_453, %c0_454] : memref<1x16xf32, #tpu.memory_space<vmem>>, vector<1x16xf32>
    %442 = vector.broadcast %441 : vector<1x16xf32> to vector<4x16xf32>
    %443 = arith.addf %440, %442 : vector<4x16xf32>
    %cst_455 = arith.constant 0.000000e+00 : f32
    %444 = vector.broadcast %cst_455 : f32 to vector<4x16xf32>
    %445 = arith.maximumf %443, %444 : vector<4x16xf32>
    %446 = vector.extract_strided_slice %418 {offsets = [0, 3, 0, 0], sizes = [1, 1, 4, 8], strides = [1, 1, 1, 1]} : vector<2x4x4x8xf32> to vector<1x1x4x8xf32>
    %447 = vector.shape_cast %446 : vector<1x1x4x8xf32> to vector<4x8xf32>
    %c0_456 = arith.constant 0 : index
    %c0_457 = arith.constant 0 : index
    %448 = vector.load %arg5[%c0_456, %c0_457] : memref<8x16xf32, #tpu.memory_space<vmem>>, vector<8x16xf32>
    %cst_458 = arith.constant dense<0.000000e+00> : vector<4x16xf32>
    %449 = tpu.matmul %447, %448, %cst_458 {dimension_numbers = #tpu.dot_dimension_numbers<[1], [0], [0], [1], [0, 0, 1, 1], [], []>} : vector<4x8xf32>, vector<8x16xf32>, vector<4x16xf32> -> vector<4x16xf32>
    %c0_459 = arith.constant 0 : index
    %c0_460 = arith.constant 0 : index
    %450 = vector.load %arg6[%c0_459, %c0_460] : memref<1x16xf32, #tpu.memory_space<vmem>>, vector<1x16xf32>
    %451 = vector.broadcast %450 : vector<1x16xf32> to vector<4x16xf32>
    %452 = arith.addf %449, %451 : vector<4x16xf32>
    %cst_461 = arith.constant 0.000000e+00 : f32
    %453 = vector.broadcast %cst_461 : f32 to vector<4x16xf32>
    %454 = arith.maximumf %452, %453 : vector<4x16xf32>
    %455 = arith.maximumf %427, %436 : vector<4x16xf32>
    %456 = vector.extract_strided_slice %455 {offsets = [0, 0], sizes = [1, 16], strides = [1, 1]} : vector<4x16xf32> to vector<1x16xf32>
    %457 = vector.extract_strided_slice %455 {offsets = [1, 0], sizes = [1, 16], strides = [1, 1]} : vector<4x16xf32> to vector<1x16xf32>
    %458 = arith.maximumf %456, %457 : vector<1x16xf32>
    %459 = vector.extract_strided_slice %455 {offsets = [2, 0], sizes = [1, 16], strides = [1, 1]} : vector<4x16xf32> to vector<1x16xf32>
    %460 = vector.extract_strided_slice %455 {offsets = [3, 0], sizes = [1, 16], strides = [1, 1]} : vector<4x16xf32> to vector<1x16xf32>
    %461 = arith.maximumf %459, %460 : vector<1x16xf32>
    %462 = arith.addf %458, %461 : vector<1x16xf32>
    %463 = arith.maximumf %445, %454 : vector<4x16xf32>
    %464 = vector.extract_strided_slice %463 {offsets = [0, 0], sizes = [1, 16], strides = [1, 1]} : vector<4x16xf32> to vector<1x16xf32>
    %465 = vector.extract_strided_slice %463 {offsets = [1, 0], sizes = [1, 16], strides = [1, 1]} : vector<4x16xf32> to vector<1x16xf32>
    %466 = arith.maximumf %464, %465 : vector<1x16xf32>
    %467 = arith.addf %462, %466 : vector<1x16xf32>
    %468 = vector.extract_strided_slice %463 {offsets = [2, 0], sizes = [1, 16], strides = [1, 1]} : vector<4x16xf32> to vector<1x16xf32>
    %469 = vector.extract_strided_slice %463 {offsets = [3, 0], sizes = [1, 16], strides = [1, 1]} : vector<4x16xf32> to vector<1x16xf32>
    %470 = arith.maximumf %468, %469 : vector<1x16xf32>
    %471 = arith.addf %467, %470 : vector<1x16xf32>
    %cst_462 = arith.constant 2.500000e-01 : f32
    %472 = vector.broadcast %cst_462 : f32 to vector<1x16xf32>
    %473 = arith.mulf %471, %472 : vector<1x16xf32>
    %c0_463 = arith.constant 0 : index
    %c0_464 = arith.constant 0 : index
    %474 = vector.load %arg7[%c0_463, %c0_464] : memref<16x6xf32, #tpu.memory_space<vmem>>, vector<16x6xf32>
    %cst_465 = arith.constant dense<0.000000e+00> : vector<1x6xf32>
    %475 = tpu.matmul %473, %474, %cst_465 {dimension_numbers = #tpu.dot_dimension_numbers<[1], [0], [0], [1], [0, 0, 1, 1], [], []>} : vector<1x16xf32>, vector<16x6xf32>, vector<1x6xf32> -> vector<1x6xf32>
    %c0_466 = arith.constant 0 : index
    %c0_467 = arith.constant 0 : index
    %476 = vector.load %arg8[%c0_466, %c0_467] : memref<1x6xf32, #tpu.memory_space<vmem>>, vector<1x6xf32>
    %477 = arith.addf %475, %476 : vector<1x6xf32>
    %c0_468 = arith.constant 0 : index
    %c0_469 = arith.constant 0 : index
    %478 = vector.load %arg9[%c0_468, %c0_469] : memref<2x6xf32, #tpu.memory_space<vmem>>, vector<1x6xf32>
    tpu.vector_store %arg9[%c0_468, %c0_469], %477 {strides = array<i32>} : memref<2x6xf32, #tpu.memory_space<vmem>>, vector<1x6xf32>,
    %479 = vector.extract_strided_slice %418 {offsets = [1, 0, 0, 0], sizes = [1, 1, 4, 8], strides = [1, 1, 1, 1]} : vector<2x4x4x8xf32> to vector<1x1x4x8xf32>
    %480 = vector.shape_cast %479 : vector<1x1x4x8xf32> to vector<4x8xf32>
    %c0_470 = arith.constant 0 : index
    %c0_471 = arith.constant 0 : index
    %481 = vector.load %arg5[%c0_470, %c0_471] : memref<8x16xf32, #tpu.memory_space<vmem>>, vector<8x16xf32>
    %cst_472 = arith.constant dense<0.000000e+00> : vector<4x16xf32>
    %482 = tpu.matmul %480, %481, %cst_472 {dimension_numbers = #tpu.dot_dimension_numbers<[1], [0], [0], [1], [0, 0, 1, 1], [], []>} : vector<4x8xf32>, vector<8x16xf32>, vector<4x16xf32> -> vector<4x16xf32>
    %c0_473 = arith.constant 0 : index
    %c0_474 = arith.constant 0 : index
    %483 = vector.load %arg6[%c0_473, %c0_474] : memref<1x16xf32, #tpu.memory_space<vmem>>, vector<1x16xf32>
    %484 = vector.broadcast %483 : vector<1x16xf32> to vector<4x16xf32>
    %485 = arith.addf %482, %484 : vector<4x16xf32>
    %cst_475 = arith.constant 0.000000e+00 : f32
    %486 = vector.broadcast %cst_475 : f32 to vector<4x16xf32>
    %487 = arith.maximumf %485, %486 : vector<4x16xf32>
    %488 = vector.extract_strided_slice %418 {offsets = [1, 1, 0, 0], sizes = [1, 1, 4, 8], strides = [1, 1, 1, 1]} : vector<2x4x4x8xf32> to vector<1x1x4x8xf32>
    %489 = vector.shape_cast %488 : vector<1x1x4x8xf32> to vector<4x8xf32>
    %c0_476 = arith.constant 0 : index
    %c0_477 = arith.constant 0 : index
    %490 = vector.load %arg5[%c0_476, %c0_477] : memref<8x16xf32, #tpu.memory_space<vmem>>, vector<8x16xf32>
    %cst_478 = arith.constant dense<0.000000e+00> : vector<4x16xf32>
    %491 = tpu.matmul %489, %490, %cst_478 {dimension_numbers = #tpu.dot_dimension_numbers<[1], [0], [0], [1], [0, 0, 1, 1], [], []>} : vector<4x8xf32>, vector<8x16xf32>, vector<4x16xf32> -> vector<4x16xf32>
    %c0_479 = arith.constant 0 : index
    %c0_480 = arith.constant 0 : index
    %492 = vector.load %arg6[%c0_479, %c0_480] : memref<1x16xf32, #tpu.memory_space<vmem>>, vector<1x16xf32>
    %493 = vector.broadcast %492 : vector<1x16xf32> to vector<4x16xf32>
    %494 = arith.addf %491, %493 : vector<4x16xf32>
    %cst_481 = arith.constant 0.000000e+00 : f32
    %495 = vector.broadcast %cst_481 : f32 to vector<4x16xf32>
    %496 = arith.maximumf %494, %495 : vector<4x16xf32>
    %497 = vector.extract_strided_slice %418 {offsets = [1, 2, 0, 0], sizes = [1, 1, 4, 8], strides = [1, 1, 1, 1]} : vector<2x4x4x8xf32> to vector<1x1x4x8xf32>
    %498 = vector.shape_cast %497 : vector<1x1x4x8xf32> to vector<4x8xf32>
    %c0_482 = arith.constant 0 : index
    %c0_483 = arith.constant 0 : index
    %499 = vector.load %arg5[%c0_482, %c0_483] : memref<8x16xf32, #tpu.memory_space<vmem>>, vector<8x16xf32>
    %cst_484 = arith.constant dense<0.000000e+00> : vector<4x16xf32>
    %500 = tpu.matmul %498, %499, %cst_484 {dimension_numbers = #tpu.dot_dimension_numbers<[1], [0], [0], [1], [0, 0, 1, 1], [], []>} : vector<4x8xf32>, vector<8x16xf32>, vector<4x16xf32> -> vector<4x16xf32>
    %c0_485 = arith.constant 0 : index
    %c0_486 = arith.constant 0 : index
    %501 = vector.load %arg6[%c0_485, %c0_486] : memref<1x16xf32, #tpu.memory_space<vmem>>, vector<1x16xf32>
    %502 = vector.broadcast %501 : vector<1x16xf32> to vector<4x16xf32>
    %503 = arith.addf %500, %502 : vector<4x16xf32>
    %cst_487 = arith.constant 0.000000e+00 : f32
    %504 = vector.broadcast %cst_487 : f32 to vector<4x16xf32>
    %505 = arith.maximumf %503, %504 : vector<4x16xf32>
    %506 = vector.extract_strided_slice %418 {offsets = [1, 3, 0, 0], sizes = [1, 1, 4, 8], strides = [1, 1, 1, 1]} : vector<2x4x4x8xf32> to vector<1x1x4x8xf32>
    %507 = vector.shape_cast %506 : vector<1x1x4x8xf32> to vector<4x8xf32>
    %c0_488 = arith.constant 0 : index
    %c0_489 = arith.constant 0 : index
    %508 = vector.load %arg5[%c0_488, %c0_489] : memref<8x16xf32, #tpu.memory_space<vmem>>, vector<8x16xf32>
    %cst_490 = arith.constant dense<0.000000e+00> : vector<4x16xf32>
    %509 = tpu.matmul %507, %508, %cst_490 {dimension_numbers = #tpu.dot_dimension_numbers<[1], [0], [0], [1], [0, 0, 1, 1], [], []>} : vector<4x8xf32>, vector<8x16xf32>, vector<4x16xf32> -> vector<4x16xf32>
    %c0_491 = arith.constant 0 : index
    %c0_492 = arith.constant 0 : index
    %510 = vector.load %arg6[%c0_491, %c0_492] : memref<1x16xf32, #tpu.memory_space<vmem>>, vector<1x16xf32>
    %511 = vector.broadcast %510 : vector<1x16xf32> to vector<4x16xf32>
    %512 = arith.addf %509, %511 : vector<4x16xf32>
    %cst_493 = arith.constant 0.000000e+00 : f32
    %513 = vector.broadcast %cst_493 : f32 to vector<4x16xf32>
    %514 = arith.maximumf %512, %513 : vector<4x16xf32>
    %515 = arith.maximumf %487, %496 : vector<4x16xf32>
    %516 = vector.extract_strided_slice %515 {offsets = [0, 0], sizes = [1, 16], strides = [1, 1]} : vector<4x16xf32> to vector<1x16xf32>
    %517 = vector.extract_strided_slice %515 {offsets = [1, 0], sizes = [1, 16], strides = [1, 1]} : vector<4x16xf32> to vector<1x16xf32>
    %518 = arith.maximumf %516, %517 : vector<1x16xf32>
    %519 = vector.extract_strided_slice %515 {offsets = [2, 0], sizes = [1, 16], strides = [1, 1]} : vector<4x16xf32> to vector<1x16xf32>
    %520 = vector.extract_strided_slice %515 {offsets = [3, 0], sizes = [1, 16], strides = [1, 1]} : vector<4x16xf32> to vector<1x16xf32>
    %521 = arith.maximumf %519, %520 : vector<1x16xf32>
    %522 = arith.addf %518, %521 : vector<1x16xf32>
    %523 = arith.maximumf %505, %514 : vector<4x16xf32>
    %524 = vector.extract_strided_slice %523 {offsets = [0, 0], sizes = [1, 16], strides = [1, 1]} : vector<4x16xf32> to vector<1x16xf32>
    %525 = vector.extract_strided_slice %523 {offsets = [1, 0], sizes = [1, 16], strides = [1, 1]} : vector<4x16xf32> to vector<1x16xf32>
    %526 = arith.maximumf %524, %525 : vector<1x16xf32>
    %527 = arith.addf %522, %526 : vector<1x16xf32>
    %528 = vector.extract_strided_slice %523 {offsets = [2, 0], sizes = [1, 16], strides = [1, 1]} : vector<4x16xf32> to vector<1x16xf32>
    %529 = vector.extract_strided_slice %523 {offsets = [3, 0], sizes = [1, 16], strides = [1, 1]} : vector<4x16xf32> to vector<1x16xf32>
    %530 = arith.maximumf %528, %529 : vector<1x16xf32>
    %531 = arith.addf %527, %530 : vector<1x16xf32>
    %cst_494 = arith.constant 2.500000e-01 : f32
    %532 = vector.broadcast %cst_494 : f32 to vector<1x16xf32>
    %533 = arith.mulf %531, %532 : vector<1x16xf32>
    %c0_495 = arith.constant 0 : index
    %c0_496 = arith.constant 0 : index
    %534 = vector.load %arg7[%c0_495, %c0_496] : memref<16x6xf32, #tpu.memory_space<vmem>>, vector<16x6xf32>
    %cst_497 = arith.constant dense<0.000000e+00> : vector<1x6xf32>
    %535 = tpu.matmul %533, %534, %cst_497 {dimension_numbers = #tpu.dot_dimension_numbers<[1], [0], [0], [1], [0, 0, 1, 1], [], []>} : vector<1x16xf32>, vector<16x6xf32>, vector<1x6xf32> -> vector<1x6xf32>
    %c0_498 = arith.constant 0 : index
    %c0_499 = arith.constant 0 : index
    %536 = vector.load %arg8[%c0_498, %c0_499] : memref<1x6xf32, #tpu.memory_space<vmem>>, vector<1x6xf32>
    %537 = arith.addf %535, %536 : vector<1x6xf32>
    %c1_500 = arith.constant 1 : index
    %c0_501 = arith.constant 0 : index
    %538 = vector.load %arg9[%c1_500, %c0_501] : memref<2x6xf32, #tpu.memory_space<vmem>>, vector<1x6xf32>
    tpu.vector_store %arg9[%c1_500, %c0_501], %537 {strides = array<i32>} : memref<2x6xf32, #tpu.memory_space<vmem>>, vector<1x6xf32>,
    return
  }
}

</mosaic_0001>

<llo_original>
// kernel: modular_micro_pizza_net_forward.1
$region0: #{modular_micro_pizza_net_forward.1}
  #allocation0 [shape = 'u32[]', space=smem, size = 0x4, offset = 0x4, fixed_abs, tag = 'smem constant byte address 0x4 - core index']
  #allocation1 [shape = 'u32[72,128]{1,0:T(1,128)}', space=vmem, size = 0x9000, scoped, tag = 'internal scratch']
  #allocation2 [shape = 'f32[2,8,8,27]{3,2,1,0:T(8,128)}', space=vmem, size = 0x10000, scoped, tag = 'scratch operand']
  #allocation3 [shape = 'f32[2,8,8,8]{3,2,1,0:T(8,128)}', space=vmem, size = 0x10000, scoped, tag = 'scratch operand']
  #allocation4 [shape = 'f32[2,6,6,8]{3,2,1,0:T(8,128)}', space=vmem, size = 0xc000, scoped, tag = 'scratch operand']
  %s0 = inlined_call_operand.vmem [shape: f32[8,9,9,3], index: 0, kind: input, shape index: {}]
  %s1 = inlined_call_operand.vmem [shape: f32[27,8], index: 1, kind: input, shape index: {}]
  %s2 = inlined_call_operand.vmem [shape: f32[1,8], index: 2, kind: input, shape index: {}]
  %s3 = inlined_call_operand.vmem [shape: f32[9,8], index: 3, kind: input, shape index: {}]
  %s4 = inlined_call_operand.vmem [shape: f32[1,8], index: 4, kind: input, shape index: {}]
  %s5 = inlined_call_operand.vmem [shape: f32[8,16], index: 5, kind: input, shape index: {}]
  %s6 = inlined_call_operand.vmem [shape: f32[1,16], index: 6, kind: input, shape index: {}]
  %s7 = inlined_call_operand.vmem [shape: f32[16,6], index: 7, kind: input, shape index: {}]
  %s8 = inlined_call_operand.vmem [shape: f32[1,6], index: 8, kind: input, shape index: {}]
  %s9 = inlined_call_operand.hbm [shape: f32[2,6], index: 9, kind: output, shape index: {}]
  %s10 = sld [smem:[#allocation0]]
  $region46: #{modular_micro_pizza_net_forward.1} parent=0
    _
  %s12 = ssub.s32 1, %s10
  %s13 = scalar_select 0, %s12, %s10
  $region1: #{modular_micro_pizza_net_forward.1} parent=0
    #allocation5 [shape = 'u8[1024]{0}', space=vmem, size = 0x400, scoped, tag = 'output window, operand 0, single buffered']
    #allocation6 [shape = 's32[1]{0}', space=sflag, size = 0x4, scoped, tag = 'scoped memory for modular_micro_pizza_net_forward.1']
    %14 = vsyncpa [#allocation6], 0
    // Predicated region
    $region2: #{modular_micro_pizza_net_forward.1} parent=1 // pred_check
      _
    $region3: #{modular_micro_pizza_net_forward.1} parent=1 // pred_check_branch
      %16 = sbr.rel (0) target = $region5
    $region4: #{modular_micro_pizza_net_forward.1} parent=1 // pred_region
      _
    $region5: #{modular_micro_pizza_net_forward.1} parent=1 // pred_fallthru
      _
    // Predicated region
    $region6: #{modular_micro_pizza_net_forward.1} parent=1 // pred_check
      _
    $region7: #{modular_micro_pizza_net_forward.1} parent=1 // pred_check_branch
      %18 = sbr.rel (0) target = $region9
    $region8: #{modular_micro_pizza_net_forward.1} parent=1 // pred_region
      _
    $region9: #{modular_micro_pizza_net_forward.1} parent=1 // pred_fallthru
      _
    // Predicated region
    $region10: #{modular_micro_pizza_net_forward.1} parent=1 // pred_check
      _
    $region11: #{modular_micro_pizza_net_forward.1} parent=1 // pred_check_branch
      %20 = sbr.rel (0) target = $region13
    $region12: #{modular_micro_pizza_net_forward.1} parent=1 // pred_region
      _
    $region13: #{modular_micro_pizza_net_forward.1} parent=1 // pred_fallthru
      _
    // Predicated region
    $region14: #{modular_micro_pizza_net_forward.1} parent=1 // pred_check
      _
    $region15: #{modular_micro_pizza_net_forward.1} parent=1 // pred_check_branch
      %22 = sbr.rel (0) target = $region17
    $region16: #{modular_micro_pizza_net_forward.1} parent=1 // pred_region
      _
    $region17: #{modular_micro_pizza_net_forward.1} parent=1 // pred_fallthru
      _
    // Predicated region
    $region18: #{modular_micro_pizza_net_forward.1} parent=1 // pred_check
      _
    $region19: #{modular_micro_pizza_net_forward.1} parent=1 // pred_check_branch
      %24 = sbr.rel (0) target = $region21
    $region20: #{modular_micro_pizza_net_forward.1} parent=1 // pred_region
      _
    $region21: #{modular_micro_pizza_net_forward.1} parent=1 // pred_fallthru
      _
    // Predicated region
    $region22: #{modular_micro_pizza_net_forward.1} parent=1 // pred_check
      _
    $region23: #{modular_micro_pizza_net_forward.1} parent=1 // pred_check_branch
      %26 = sbr.rel (0) target = $region25
    $region24: #{modular_micro_pizza_net_forward.1} parent=1 // pred_region
      _
    $region25: #{modular_micro_pizza_net_forward.1} parent=1 // pred_fallthru
      _
    // Predicated region
    $region26: #{modular_micro_pizza_net_forward.1} parent=1 // pred_check
      _
    $region27: #{modular_micro_pizza_net_forward.1} parent=1 // pred_check_branch
      %28 = sbr.rel (0) target = $region29
    $region28: #{modular_micro_pizza_net_forward.1} parent=1 // pred_region
      _
    $region29: #{modular_micro_pizza_net_forward.1} parent=1 // pred_fallthru
      _
    // Predicated region
    $region30: #{modular_micro_pizza_net_forward.1} parent=1 // pred_check
      _
    $region31: #{modular_micro_pizza_net_forward.1} parent=1 // pred_check_branch
      %30 = sbr.rel (0) target = $region33
    $region32: #{modular_micro_pizza_net_forward.1} parent=1 // pred_region
      _
    $region33: #{modular_micro_pizza_net_forward.1} parent=1 // pred_fallthru
      _
    // Predicated region
    $region34: #{modular_micro_pizza_net_forward.1} parent=1 // pred_check
      _
    $region35: #{modular_micro_pizza_net_forward.1} parent=1 // pred_check_branch
      %32 = sbr.rel (0) target = $region37
    $region36: #{modular_micro_pizza_net_forward.1} parent=1 // pred_region
      _
    $region37: #{modular_micro_pizza_net_forward.1} parent=1 // pred_fallthru
      _
    %v33 = vld [vmem:[%s0] sm:$0xff]
    %v34 = vld [vmem:[%s0 + $0x10] sm:$0xff]
    %v35 = vld [vmem:[%s0 + $0x20] sm:$0xff]
    %v36 = vld [vmem:[%s0 + $0x30] sm:$0xff]
    %v37 = vld [vmem:[%s0 + $0x40] sm:$0xff]
    %v38 = vld [vmem:[%s0 + $0x50] sm:$0xff]
    %v39 = vld [vmem:[%s0 + $0x60] sm:$0xff]
    %v40 = vld [vmem:[%s0 + $0x70] sm:$0xff]
    %v41 = vld [vmem:[%s0 + $0x90] sm:$0xff]
    %v42 = vld [vmem:[%s0 + $0xa0] sm:$0xff]
    %v43 = vld [vmem:[%s0 + $0xb0] sm:$0xff]
    %v44 = vld [vmem:[%s0 + $0xc0] sm:$0xff]
    %v45 = vld [vmem:[%s0 + $0xd0] sm:$0xff]
    %v46 = vld [vmem:[%s0 + $0xe0] sm:$0xff]
    %v47 = vld [vmem:[%s0 + $0xf0] sm:$0xff]
    %v48 = vld [vmem:[%s0 + $0x100] sm:$0xff]
    %vm49 = vcmask 23552
    %50 = vst.msk [vmem:[#allocation2] sm:$0xff] %vm49, %v33
    %51 = vst.msk [vmem:[#allocation2 + $0x8] sm:$0xff] %vm49, %v34
    %52 = vst.msk [vmem:[#allocation2 + $0x10] sm:$0xff] %vm49, %v35
    %53 = vst.msk [vmem:[#allocation2 + $0x18] sm:$0xff] %vm49, %v36
    %54 = vst.msk [vmem:[#allocation2 + $0x20] sm:$0xff] %vm49, %v37
    %55 = vst.msk [vmem:[#allocation2 + $0x28] sm:$0xff] %vm49, %v38
    %56 = vst.msk [vmem:[#allocation2 + $0x30] sm:$0xff] %vm49, %v39
    %57 = vst.msk [vmem:[#allocation2 + $0x38] sm:$0xff] %vm49, %v40
    %58 = vst.msk [vmem:[#allocation2 + $0x40] sm:$0xff] %vm49, %v41
    %59 = vst.msk [vmem:[#allocation2 + $0x48] sm:$0xff] %vm49, %v42
    %60 = vst.msk [vmem:[#allocation2 + $0x50] sm:$0xff] %vm49, %v43
    %61 = vst.msk [vmem:[#allocation2 + $0x58] sm:$0xff] %vm49, %v44
    %62 = vst.msk [vmem:[#allocation2 + $0x60] sm:$0xff] %vm49, %v45
    %63 = vst.msk [vmem:[#allocation2 + $0x68] sm:$0xff] %vm49, %v46
    %64 = vst.msk [vmem:[#allocation2 + $0x70] sm:$0xff] %vm49, %v47
    %65 = vst.msk [vmem:[#allocation2 + $0x78] sm:$0xff] %vm49, %v48
    %s66 = scalar_lea.vmem %s0, 288
    %v67 = vld [vmem:[%s66] sm:$0xff]
    %v68 = vld [vmem:[%s66 + $0x10] sm:$0xff]
    %v69 = vld [vmem:[%s66 + $0x20] sm:$0xff]
    %v70 = vld [vmem:[%s66 + $0x30] sm:$0xff]
    %v71 = vld [vmem:[%s66 + $0x40] sm:$0xff]
    %v72 = vld [vmem:[%s66 + $0x50] sm:$0xff]
    %v73 = vld [vmem:[%s66 + $0x60] sm:$0xff]
    %v74 = vld [vmem:[%s66 + $0x70] sm:$0xff]
    %v75 = vld [vmem:[%s66 + $0x90] sm:$0xff]
    %v76 = vld [vmem:[%s66 + $0xa0] sm:$0xff]
    %v77 = vld [vmem:[%s66 + $0xb0] sm:$0xff]
    %v78 = vld [vmem:[%s66 + $0xc0] sm:$0xff]
    %v79 = vld [vmem:[%s66 + $0xd0] sm:$0xff]
    %v80 = vld [vmem:[%s66 + $0xe0] sm:$0xff]
    %v81 = vld [vmem:[%s66 + $0xf0] sm:$0xff]
    %v82 = vld [vmem:[%s66 + $0x100] sm:$0xff]
    %99 = vrot.lane.b32.xlu0 %v67, 3
    %v100 = vpop.permute.xlu0 %99
    %101 = vrot.lane.b32.xlu0 %v68, 3
    %v102 = vpop.permute.xlu0 %101
    %103 = vrot.lane.b32.xlu0 %v69, 3
    %v104 = vpop.permute.xlu0 %103
    %105 = vrot.lane.b32.xlu0 %v70, 3
    %v106 = vpop.permute.xlu0 %105
    %107 = vrot.lane.b32.xlu0 %v71, 3
    %v108 = vpop.permute.xlu0 %107
    %109 = vrot.lane.b32.xlu0 %v72, 3
    %v110 = vpop.permute.xlu0 %109
    %111 = vrot.lane.b32.xlu0 %v73, 3
    %v112 = vpop.permute.xlu0 %111
    %113 = vrot.lane.b32.xlu0 %v74, 3
    %v114 = vpop.permute.xlu0 %113
    %115 = vrot.lane.b32.xlu0 %v75, 3
    %v116 = vpop.permute.xlu0 %115
    %117 = vrot.lane.b32.xlu0 %v76, 3
    %v118 = vpop.permute.xlu0 %117
    %119 = vrot.lane.b32.xlu0 %v77, 3
    %v120 = vpop.permute.xlu0 %119
    %121 = vrot.lane.b32.xlu0 %v78, 3
    %v122 = vpop.permute.xlu0 %121
    %123 = vrot.lane.b32.xlu0 %v79, 3
    %v124 = vpop.permute.xlu0 %123
    %125 = vrot.lane.b32.xlu0 %v80, 3
    %v126 = vpop.permute.xlu0 %125
    %127 = vrot.lane.b32.xlu0 %v81, 3
    %v128 = vpop.permute.xlu0 %127
    %129 = vrot.lane.b32.xlu0 %v82, 3
    %v130 = vpop.permute.xlu0 %129
    %vm147 = vcmask 48152
    %148 = vst.msk [vmem:[#allocation2] sm:$0xff] %vm147, %v100
    %149 = vst.msk [vmem:[#allocation2 + $0x8] sm:$0xff] %vm147, %v102
    %150 = vst.msk [vmem:[#allocation2 + $0x10] sm:$0xff] %vm147, %v104
    %151 = vst.msk [vmem:[#allocation2 + $0x18] sm:$0xff] %vm147, %v106
    %152 = vst.msk [vmem:[#allocation2 + $0x20] sm:$0xff] %vm147, %v108
    %153 = vst.msk [vmem:[#allocation2 + $0x28] sm:$0xff] %vm147, %v110
    %154 = vst.msk [vmem:[#allocation2 + $0x30] sm:$0xff] %vm147, %v112
    %155 = vst.msk [vmem:[#allocation2 + $0x38] sm:$0xff] %vm147, %v114
    %156 = vst.msk [vmem:[#allocation2 + $0x40] sm:$0xff] %vm147, %v116
    %157 = vst.msk [vmem:[#allocation2 + $0x48] sm:$0xff] %vm147, %v118
    %158 = vst.msk [vmem:[#allocation2 + $0x50] sm:$0xff] %vm147, %v120
    %159 = vst.msk [vmem:[#allocation2 + $0x58] sm:$0xff] %vm147, %v122
    %160 = vst.msk [vmem:[#allocation2 + $0x60] sm:$0xff] %vm147, %v124
    %161 = vst.msk [vmem:[#allocation2 + $0x68] sm:$0xff] %vm147, %v126
    %162 = vst.msk [vmem:[#allocation2 + $0x70] sm:$0xff] %vm147, %v128
    %163 = vst.msk [vmem:[#allocation2 + $0x78] sm:$0xff] %vm147, %v130
    %v164 = vld [vmem:[%s0 + $0x1] sm:$0xff]
    %v165 = vld [vmem:[%s0 + $0x11] sm:$0xff]
    %v166 = vld [vmem:[%s0 + $0x21] sm:$0xff]
    %v167 = vld [vmem:[%s0 + $0x31] sm:$0xff]
    %v168 = vld [vmem:[%s0 + $0x41] sm:$0xff]
    %v169 = vld [vmem:[%s0 + $0x51] sm:$0xff]
    %v170 = vld [vmem:[%s0 + $0x61] sm:$0xff]
    %v171 = vld [vmem:[%s0 + $0x71] sm:$0xff]
    %v172 = vld [vmem:[%s0 + $0x91] sm:$0xff]
    %v173 = vld [vmem:[%s0 + $0xa1] sm:$0xff]
    %v174 = vld [vmem:[%s0 + $0xb1] sm:$0xff]
    %v175 = vld [vmem:[%s0 + $0xc1] sm:$0xff]
    %v176 = vld [vmem:[%s0 + $0xd1] sm:$0xff]
    %v177 = vld [vmem:[%s0 + $0xe1] sm:$0xff]
    %v178 = vld [vmem:[%s0 + $0xf1] sm:$0xff]
    %v179 = vld [vmem:[%s0 + $0x101] sm:$0xff]
    %196 = vrot.lane.b32.xlu0 %v164, 6
    %v197 = vpop.permute.xlu0 %196
    %198 = vrot.lane.b32.xlu0 %v165, 6
    %v199 = vpop.permute.xlu0 %198
    %200 = vrot.lane.b32.xlu0 %v166, 6
    %v201 = vpop.permute.xlu0 %200
    %202 = vrot.lane.b32.xlu0 %v167, 6
    %v203 = vpop.permute.xlu0 %202
    %204 = vrot.lane.b32.xlu0 %v168, 6
    %v205 = vpop.permute.xlu0 %204
    %206 = vrot.lane.b32.xlu0 %v169, 6
    %v207 = vpop.permute.xlu0 %206
    %208 = vrot.lane.b32.xlu0 %v170, 6
    %v209 = vpop.permute.xlu0 %208
    %210 = vrot.lane.b32.xlu0 %v171, 6
    %v211 = vpop.permute.xlu0 %210
    %212 = vrot.lane.b32.xlu0 %v172, 6
    %v213 = vpop.permute.xlu0 %212
    %214 = vrot.lane.b32.xlu0 %v173, 6
    %v215 = vpop.permute.xlu0 %214
    %216 = vrot.lane.b32.xlu0 %v174, 6
    %v217 = vpop.permute.xlu0 %216
    %218 = vrot.lane.b32.xlu0 %v175, 6
    %v219 = vpop.permute.xlu0 %218
    %220 = vrot.lane.b32.xlu0 %v176, 6
    %v221 = vpop.permute.xlu0 %220
    %222 = vrot.lane.b32.xlu0 %v177, 6
    %v223 = vpop.permute.xlu0 %222
    %224 = vrot.lane.b32.xlu0 %v178, 6
    %v225 = vpop.permute.xlu0 %224
    %226 = vrot.lane.b32.xlu0 %v179, 6
    %v227 = vpop.permute.xlu0 %226
    %vm244 = vcmask 72752
    %245 = vst.msk [vmem:[#allocation2] sm:$0xff] %vm244, %v197
    %246 = vst.msk [vmem:[#allocation2 + $0x8] sm:$0xff] %vm244, %v199
    %247 = vst.msk [vmem:[#allocation2 + $0x10] sm:$0xff] %vm244, %v201
    %248 = vst.msk [vmem:[#allocation2 + $0x18] sm:$0xff] %vm244, %v203
    %249 = vst.msk [vmem:[#allocation2 + $0x20] sm:$0xff] %vm244, %v205
    %250 = vst.msk [vmem:[#allocation2 + $0x28] sm:$0xff] %vm244, %v207
    %251 = vst.msk [vmem:[#allocation2 + $0x30] sm:$0xff] %vm244, %v209
    %252 = vst.msk [vmem:[#allocation2 + $0x38] sm:$0xff] %vm244, %v211
    %253 = vst.msk [vmem:[#allocation2 + $0x40] sm:$0xff] %vm244, %v213
    %254 = vst.msk [vmem:[#allocation2 + $0x48] sm:$0xff] %vm244, %v215
    %255 = vst.msk [vmem:[#allocation2 + $0x50] sm:$0xff] %vm244, %v217
    %256 = vst.msk [vmem:[#allocation2 + $0x58] sm:$0xff] %vm244, %v219
    %257 = vst.msk [vmem:[#allocation2 + $0x60] sm:$0xff] %vm244, %v221
    %258 = vst.msk [vmem:[#allocation2 + $0x68] sm:$0xff] %vm244, %v223
    %259 = vst.msk [vmem:[#allocation2 + $0x70] sm:$0xff] %vm244, %v225
    %260 = vst.msk [vmem:[#allocation2 + $0x78] sm:$0xff] %vm244, %v227
    %s261 = scalar_lea.vmem %s0, 576
    %v262 = vld [vmem:[%s261] sm:$0xff]
    %v263 = vld [vmem:[%s261 + $0x10] sm:$0xff]
    %v264 = vld [vmem:[%s261 + $0x20] sm:$0xff]
    %v265 = vld [vmem:[%s261 + $0x30] sm:$0xff]
    %v266 = vld [vmem:[%s261 + $0x40] sm:$0xff]
    %v267 = vld [vmem:[%s261 + $0x50] sm:$0xff]
    %v268 = vld [vmem:[%s261 + $0x60] sm:$0xff]
    %v269 = vld [vmem:[%s261 + $0x70] sm:$0xff]
    %v270 = vld [vmem:[%s261 + $0x90] sm:$0xff]
    %v271 = vld [vmem:[%s261 + $0xa0] sm:$0xff]
    %v272 = vld [vmem:[%s261 + $0xb0] sm:$0xff]
    %v273 = vld [vmem:[%s261 + $0xc0] sm:$0xff]
    %v274 = vld [vmem:[%s261 + $0xd0] sm:$0xff]
    %v275 = vld [vmem:[%s261 + $0xe0] sm:$0xff]
    %v276 = vld [vmem:[%s261 + $0xf0] sm:$0xff]
    %v277 = vld [vmem:[%s261 + $0x100] sm:$0xff]
    %294 = vrot.lane.b32.xlu0 %v262, 9
    %v295 = vpop.permute.xlu0 %294
    %296 = vrot.lane.b32.xlu0 %v263, 9
    %v297 = vpop.permute.xlu0 %296
    %298 = vrot.lane.b32.xlu0 %v264, 9
    %v299 = vpop.permute.xlu0 %298
    %300 = vrot.lane.b32.xlu0 %v265, 9
    %v301 = vpop.permute.xlu0 %300
    %302 = vrot.lane.b32.xlu0 %v266, 9
    %v303 = vpop.permute.xlu0 %302
    %304 = vrot.lane.b32.xlu0 %v267, 9
    %v305 = vpop.permute.xlu0 %304
    %306 = vrot.lane.b32.xlu0 %v268, 9
    %v307 = vpop.permute.xlu0 %306
    %308 = vrot.lane.b32.xlu0 %v269, 9
    %v309 = vpop.permute.xlu0 %308
    %310 = vrot.lane.b32.xlu0 %v270, 9
    %v311 = vpop.permute.xlu0 %310
    %312 = vrot.lane.b32.xlu0 %v271, 9
    %v313 = vpop.permute.xlu0 %312
    %314 = vrot.lane.b32.xlu0 %v272, 9
    %v315 = vpop.permute.xlu0 %314
    %316 = vrot.lane.b32.xlu0 %v273, 9
    %v317 = vpop.permute.xlu0 %316
    %318 = vrot.lane.b32.xlu0 %v274, 9
    %v319 = vpop.permute.xlu0 %318
    %320 = vrot.lane.b32.xlu0 %v275, 9
    %v321 = vpop.permute.xlu0 %320
    %322 = vrot.lane.b32.xlu0 %v276, 9
    %v323 = vpop.permute.xlu0 %322
    %324 = vrot.lane.b32.xlu0 %v277, 9
    %v325 = vpop.permute.xlu0 %324
    %vm342 = vcmask 97352
    %343 = vst.msk [vmem:[#allocation2] sm:$0xff] %vm342, %v295
    %344 = vst.msk [vmem:[#allocation2 + $0x8] sm:$0xff] %vm342, %v297
    %345 = vst.msk [vmem:[#allocation2 + $0x10] sm:$0xff] %vm342, %v299
    %346 = vst.msk [vmem:[#allocation2 + $0x18] sm:$0xff] %vm342, %v301
    %347 = vst.msk [vmem:[#allocation2 + $0x20] sm:$0xff] %vm342, %v303
    %348 = vst.msk [vmem:[#allocation2 + $0x28] sm:$0xff] %vm342, %v305
    %349 = vst.msk [vmem:[#allocation2 + $0x30] sm:$0xff] %vm342, %v307
    %350 = vst.msk [vmem:[#allocation2 + $0x38] sm:$0xff] %vm342, %v309
    %351 = vst.msk [vmem:[#allocation2 + $0x40] sm:$0xff] %vm342, %v311
    %352 = vst.msk [vmem:[#allocation2 + $0x48] sm:$0xff] %vm342, %v313
    %353 = vst.msk [vmem:[#allocation2 + $0x50] sm:$0xff] %vm342, %v315
    %354 = vst.msk [vmem:[#allocation2 + $0x58] sm:$0xff] %vm342, %v317
    %355 = vst.msk [vmem:[#allocation2 + $0x60] sm:$0xff] %vm342, %v319
    %356 = vst.msk [vmem:[#allocation2 + $0x68] sm:$0xff] %vm342, %v321
    %357 = vst.msk [vmem:[#allocation2 + $0x70] sm:$0xff] %vm342, %v323
    %358 = vst.msk [vmem:[#allocation2 + $0x78] sm:$0xff] %vm342, %v325
    %s359 = scalar_lea.vmem %s0, 864
    %v360 = vld [vmem:[%s359] sm:$0xff]
    %v361 = vld [vmem:[%s359 + $0x10] sm:$0xff]
    %v362 = vld [vmem:[%s359 + $0x20] sm:$0xff]
    %v363 = vld [vmem:[%s359 + $0x30] sm:$0xff]
    %v364 = vld [vmem:[%s359 + $0x40] sm:$0xff]
    %v365 = vld [vmem:[%s359 + $0x50] sm:$0xff]
    %v366 = vld [vmem:[%s359 + $0x60] sm:$0xff]
    %v367 = vld [vmem:[%s359 + $0x70] sm:$0xff]
    %v368 = vld [vmem:[%s359 + $0x90] sm:$0xff]
    %v369 = vld [vmem:[%s359 + $0xa0] sm:$0xff]
    %v370 = vld [vmem:[%s359 + $0xb0] sm:$0xff]
    %v371 = vld [vmem:[%s359 + $0xc0] sm:$0xff]
    %v372 = vld [vmem:[%s359 + $0xd0] sm:$0xff]
    %v373 = vld [vmem:[%s359 + $0xe0] sm:$0xff]
    %v374 = vld [vmem:[%s359 + $0xf0] sm:$0xff]
    %v375 = vld [vmem:[%s359 + $0x100] sm:$0xff]
    %392 = vrot.lane.b32.xlu0 %v360, 12
    %v393 = vpop.permute.xlu0 %392
    %394 = vrot.lane.b32.xlu0 %v361, 12
    %v395 = vpop.permute.xlu0 %394
    %396 = vrot.lane.b32.xlu0 %v362, 12
    %v397 = vpop.permute.xlu0 %396
    %398 = vrot.lane.b32.xlu0 %v363, 12
    %v399 = vpop.permute.xlu0 %398
    %400 = vrot.lane.b32.xlu0 %v364, 12
    %v401 = vpop.permute.xlu0 %400
    %402 = vrot.lane.b32.xlu0 %v365, 12
    %v403 = vpop.permute.xlu0 %402
    %404 = vrot.lane.b32.xlu0 %v366, 12
    %v405 = vpop.permute.xlu0 %404
    %406 = vrot.lane.b32.xlu0 %v367, 12
    %v407 = vpop.permute.xlu0 %406
    %408 = vrot.lane.b32.xlu0 %v368, 12
    %v409 = vpop.permute.xlu0 %408
    %410 = vrot.lane.b32.xlu0 %v369, 12
    %v411 = vpop.permute.xlu0 %410
    %412 = vrot.lane.b32.xlu0 %v370, 12
    %v413 = vpop.permute.xlu0 %412
    %414 = vrot.lane.b32.xlu0 %v371, 12
    %v415 = vpop.permute.xlu0 %414
    %416 = vrot.lane.b32.xlu0 %v372, 12
    %v417 = vpop.permute.xlu0 %416
    %418 = vrot.lane.b32.xlu0 %v373, 12
    %v419 = vpop.permute.xlu0 %418
    %420 = vrot.lane.b32.xlu0 %v374, 12
    %v421 = vpop.permute.xlu0 %420
    %422 = vrot.lane.b32.xlu0 %v375, 12
    %v423 = vpop.permute.xlu0 %422
    %vm440 = vcmask 121952
    %441 = vst.msk [vmem:[#allocation2] sm:$0xff] %vm440, %v393
    %442 = vst.msk [vmem:[#allocation2 + $0x8] sm:$0xff] %vm440, %v395
    %443 = vst.msk [vmem:[#allocation2 + $0x10] sm:$0xff] %vm440, %v397
    %444 = vst.msk [vmem:[#allocation2 + $0x18] sm:$0xff] %vm440, %v399
    %445 = vst.msk [vmem:[#allocation2 + $0x20] sm:$0xff] %vm440, %v401
    %446 = vst.msk [vmem:[#allocation2 + $0x28] sm:$0xff] %vm440, %v403
    %447 = vst.msk [vmem:[#allocation2 + $0x30] sm:$0xff] %vm440, %v405
    %448 = vst.msk [vmem:[#allocation2 + $0x38] sm:$0xff] %vm440, %v407
    %449 = vst.msk [vmem:[#allocation2 + $0x40] sm:$0xff] %vm440, %v409
    %450 = vst.msk [vmem:[#allocation2 + $0x48] sm:$0xff] %vm440, %v411
    %451 = vst.msk [vmem:[#allocation2 + $0x50] sm:$0xff] %vm440, %v413
    %452 = vst.msk [vmem:[#allocation2 + $0x58] sm:$0xff] %vm440, %v415
    %453 = vst.msk [vmem:[#allocation2 + $0x60] sm:$0xff] %vm440, %v417
    %454 = vst.msk [vmem:[#allocation2 + $0x68] sm:$0xff] %vm440, %v419
    %455 = vst.msk [vmem:[#allocation2 + $0x70] sm:$0xff] %vm440, %v421
    %456 = vst.msk [vmem:[#allocation2 + $0x78] sm:$0xff] %vm440, %v423
    %v457 = vld [vmem:[%s261 + $0x1] sm:$0xff]
    %v458 = vld [vmem:[%s261 + $0x11] sm:$0xff]
    %v459 = vld [vmem:[%s261 + $0x21] sm:$0xff]
    %v460 = vld [vmem:[%s261 + $0x31] sm:$0xff]
    %v461 = vld [vmem:[%s261 + $0x41] sm:$0xff]
    %v462 = vld [vmem:[%s261 + $0x51] sm:$0xff]
    %v463 = vld [vmem:[%s261 + $0x61] sm:$0xff]
    %v464 = vld [vmem:[%s261 + $0x71] sm:$0xff]
    %v465 = vld [vmem:[%s261 + $0x91] sm:$0xff]
    %v466 = vld [vmem:[%s261 + $0xa1] sm:$0xff]
    %v467 = vld [vmem:[%s261 + $0xb1] sm:$0xff]
    %v468 = vld [vmem:[%s261 + $0xc1] sm:$0xff]
    %v469 = vld [vmem:[%s261 + $0xd1] sm:$0xff]
    %v470 = vld [vmem:[%s261 + $0xe1] sm:$0xff]
    %v471 = vld [vmem:[%s261 + $0xf1] sm:$0xff]
    %v472 = vld [vmem:[%s261 + $0x101] sm:$0xff]
    %489 = vrot.lane.b32.xlu0 %v457, 15
    %v490 = vpop.permute.xlu0 %489
    %491 = vrot.lane.b32.xlu0 %v458, 15
    %v492 = vpop.permute.xlu0 %491
    %493 = vrot.lane.b32.xlu0 %v459, 15
    %v494 = vpop.permute.xlu0 %493
    %495 = vrot.lane.b32.xlu0 %v460, 15
    %v496 = vpop.permute.xlu0 %495
    %497 = vrot.lane.b32.xlu0 %v461, 15
    %v498 = vpop.permute.xlu0 %497
    %499 = vrot.lane.b32.xlu0 %v462, 15
    %v500 = vpop.permute.xlu0 %499
    %501 = vrot.lane.b32.xlu0 %v463, 15
    %v502 = vpop.permute.xlu0 %501
    %503 = vrot.lane.b32.xlu0 %v464, 15
    %v504 = vpop.permute.xlu0 %503
    %505 = vrot.lane.b32.xlu0 %v465, 15
    %v506 = vpop.permute.xlu0 %505
    %507 = vrot.lane.b32.xlu0 %v466, 15
    %v508 = vpop.permute.xlu0 %507
    %509 = vrot.lane.b32.xlu0 %v467, 15
    %v510 = vpop.permute.xlu0 %509
    %511 = vrot.lane.b32.xlu0 %v468, 15
    %v512 = vpop.permute.xlu0 %511
    %513 = vrot.lane.b32.xlu0 %v469, 15
    %v514 = vpop.permute.xlu0 %513
    %515 = vrot.lane.b32.xlu0 %v470, 15
    %v516 = vpop.permute.xlu0 %515
    %517 = vrot.lane.b32.xlu0 %v471, 15
    %v518 = vpop.permute.xlu0 %517
    %519 = vrot.lane.b32.xlu0 %v472, 15
    %v520 = vpop.permute.xlu0 %519
    %vm537 = vcmask 146552
    %538 = vst.msk [vmem:[#allocation2] sm:$0xff] %vm537, %v490
    %539 = vst.msk [vmem:[#allocation2 + $0x8] sm:$0xff] %vm537, %v492
    %540 = vst.msk [vmem:[#allocation2 + $0x10] sm:$0xff] %vm537, %v494
    %541 = vst.msk [vmem:[#allocation2 + $0x18] sm:$0xff] %vm537, %v496
    %542 = vst.msk [vmem:[#allocation2 + $0x20] sm:$0xff] %vm537, %v498
    %543 = vst.msk [vmem:[#allocation2 + $0x28] sm:$0xff] %vm537, %v500
    %544 = vst.msk [vmem:[#allocation2 + $0x30] sm:$0xff] %vm537, %v502
    %545 = vst.msk [vmem:[#allocation2 + $0x38] sm:$0xff] %vm537, %v504
    %546 = vst.msk [vmem:[#allocation2 + $0x40] sm:$0xff] %vm537, %v506
    %547 = vst.msk [vmem:[#allocation2 + $0x48] sm:$0xff] %vm537, %v508
    %548 = vst.msk [vmem:[#allocation2 + $0x50] sm:$0xff] %vm537, %v510
    %549 = vst.msk [vmem:[#allocation2 + $0x58] sm:$0xff] %vm537, %v512
    %550 = vst.msk [vmem:[#allocation2 + $0x60] sm:$0xff] %vm537, %v514
    %551 = vst.msk [vmem:[#allocation2 + $0x68] sm:$0xff] %vm537, %v516
    %552 = vst.msk [vmem:[#allocation2 + $0x70] sm:$0xff] %vm537, %v518
    %553 = vst.msk [vmem:[#allocation2 + $0x78] sm:$0xff] %vm537, %v520
    %s554 = scalar_lea.vmem %s0, 16
    %v555 = vld [vmem:[%s554] sm:$0xff]
    %v556 = vld [vmem:[%s554 + $0x10] sm:$0xff]
    %v557 = vld [vmem:[%s554 + $0x20] sm:$0xff]
    %v558 = vld [vmem:[%s554 + $0x30] sm:$0xff]
    %v559 = vld [vmem:[%s554 + $0x40] sm:$0xff]
    %v560 = vld [vmem:[%s554 + $0x50] sm:$0xff]
    %v561 = vld [vmem:[%s554 + $0x60] sm:$0xff]
    %v562 = vld [vmem:[%s554 + $0x70] sm:$0xff]
    %v563 = vld [vmem:[%s554 + $0x90] sm:$0xff]
    %v564 = vld [vmem:[%s554 + $0xa0] sm:$0xff]
    %v565 = vld [vmem:[%s554 + $0xb0] sm:$0xff]
    %v566 = vld [vmem:[%s554 + $0xc0] sm:$0xff]
    %v567 = vld [vmem:[%s554 + $0xd0] sm:$0xff]
    %v568 = vld [vmem:[%s554 + $0xe0] sm:$0xff]
    %v569 = vld [vmem:[%s554 + $0xf0] sm:$0xff]
    %v570 = vld [vmem:[%s554 + $0x100] sm:$0xff]
    %587 = vrot.lane.b32.xlu0 %v555, 18
    %v588 = vpop.permute.xlu0 %587
    %589 = vrot.lane.b32.xlu0 %v556, 18
    %v590 = vpop.permute.xlu0 %589
    %591 = vrot.lane.b32.xlu0 %v557, 18
    %v592 = vpop.permute.xlu0 %591
    %593 = vrot.lane.b32.xlu0 %v558, 18
    %v594 = vpop.permute.xlu0 %593
    %595 = vrot.lane.b32.xlu0 %v559, 18
    %v596 = vpop.permute.xlu0 %595
    %597 = vrot.lane.b32.xlu0 %v560, 18
    %v598 = vpop.permute.xlu0 %597
    %599 = vrot.lane.b32.xlu0 %v561, 18
    %v600 = vpop.permute.xlu0 %599
    %601 = vrot.lane.b32.xlu0 %v562, 18
    %v602 = vpop.permute.xlu0 %601
    %603 = vrot.lane.b32.xlu0 %v563, 18
    %v604 = vpop.permute.xlu0 %603
    %605 = vrot.lane.b32.xlu0 %v564, 18
    %v606 = vpop.permute.xlu0 %605
    %607 = vrot.lane.b32.xlu0 %v565, 18
    %v608 = vpop.permute.xlu0 %607
    %609 = vrot.lane.b32.xlu0 %v566, 18
    %v610 = vpop.permute.xlu0 %609
    %611 = vrot.lane.b32.xlu0 %v567, 18
    %v612 = vpop.permute.xlu0 %611
    %613 = vrot.lane.b32.xlu0 %v568, 18
    %v614 = vpop.permute.xlu0 %613
    %615 = vrot.lane.b32.xlu0 %v569, 18
    %v616 = vpop.permute.xlu0 %615
    %617 = vrot.lane.b32.xlu0 %v570, 18
    %v618 = vpop.permute.xlu0 %617
    %vm635 = vcmask 171152
    %636 = vst.msk [vmem:[#allocation2] sm:$0xff] %vm635, %v588
    %637 = vst.msk [vmem:[#allocation2 + $0x8] sm:$0xff] %vm635, %v590
    %638 = vst.msk [vmem:[#allocation2 + $0x10] sm:$0xff] %vm635, %v592
    %639 = vst.msk [vmem:[#allocation2 + $0x18] sm:$0xff] %vm635, %v594
    %640 = vst.msk [vmem:[#allocation2 + $0x20] sm:$0xff] %vm635, %v596
    %641 = vst.msk [vmem:[#allocation2 + $0x28] sm:$0xff] %vm635, %v598
    %642 = vst.msk [vmem:[#allocation2 + $0x30] sm:$0xff] %vm635, %v600
    %643 = vst.msk [vmem:[#allocation2 + $0x38] sm:$0xff] %vm635, %v602
    %644 = vst.msk [vmem:[#allocation2 + $0x40] sm:$0xff] %vm635, %v604
    %645 = vst.msk [vmem:[#allocation2 + $0x48] sm:$0xff] %vm635, %v606
    %646 = vst.msk [vmem:[#allocation2 + $0x50] sm:$0xff] %vm635, %v608
    %647 = vst.msk [vmem:[#allocation2 + $0x58] sm:$0xff] %vm635, %v610
    %648 = vst.msk [vmem:[#allocation2 + $0x60] sm:$0xff] %vm635, %v612
    %649 = vst.msk [vmem:[#allocation2 + $0x68] sm:$0xff] %vm635, %v614
    %650 = vst.msk [vmem:[#allocation2 + $0x70] sm:$0xff] %vm635, %v616
    %651 = vst.msk [vmem:[#allocation2 + $0x78] sm:$0xff] %vm635, %v618
    %s652 = scalar_lea.vmem %s0, 304
    %v653 = vld [vmem:[%s652] sm:$0xff]
    %v654 = vld [vmem:[%s652 + $0x10] sm:$0xff]
    %v655 = vld [vmem:[%s652 + $0x20] sm:$0xff]
    %v656 = vld [vmem:[%s652 + $0x30] sm:$0xff]
    %v657 = vld [vmem:[%s652 + $0x40] sm:$0xff]
    %v658 = vld [vmem:[%s652 + $0x50] sm:$0xff]
    %v659 = vld [vmem:[%s652 + $0x60] sm:$0xff]
    %v660 = vld [vmem:[%s652 + $0x70] sm:$0xff]
    %v661 = vld [vmem:[%s652 + $0x90] sm:$0xff]
    %v662 = vld [vmem:[%s652 + $0xa0] sm:$0xff]
    %v663 = vld [vmem:[%s652 + $0xb0] sm:$0xff]
    %v664 = vld [vmem:[%s652 + $0xc0] sm:$0xff]
    %v665 = vld [vmem:[%s652 + $0xd0] sm:$0xff]
    %v666 = vld [vmem:[%s652 + $0xe0] sm:$0xff]
    %v667 = vld [vmem:[%s652 + $0xf0] sm:$0xff]
    %v668 = vld [vmem:[%s652 + $0x100] sm:$0xff]
    %685 = vrot.lane.b32.xlu0 %v653, 21
    %v686 = vpop.permute.xlu0 %685
    %687 = vrot.lane.b32.xlu0 %v654, 21
    %v688 = vpop.permute.xlu0 %687
    %689 = vrot.lane.b32.xlu0 %v655, 21
    %v690 = vpop.permute.xlu0 %689
    %691 = vrot.lane.b32.xlu0 %v656, 21
    %v692 = vpop.permute.xlu0 %691
    %693 = vrot.lane.b32.xlu0 %v657, 21
    %v694 = vpop.permute.xlu0 %693
    %695 = vrot.lane.b32.xlu0 %v658, 21
    %v696 = vpop.permute.xlu0 %695
    %697 = vrot.lane.b32.xlu0 %v659, 21
    %v698 = vpop.permute.xlu0 %697
    %699 = vrot.lane.b32.xlu0 %v660, 21
    %v700 = vpop.permute.xlu0 %699
    %701 = vrot.lane.b32.xlu0 %v661, 21
    %v702 = vpop.permute.xlu0 %701
    %703 = vrot.lane.b32.xlu0 %v662, 21
    %v704 = vpop.permute.xlu0 %703
    %705 = vrot.lane.b32.xlu0 %v663, 21
    %v706 = vpop.permute.xlu0 %705
    %707 = vrot.lane.b32.xlu0 %v664, 21
    %v708 = vpop.permute.xlu0 %707
    %709 = vrot.lane.b32.xlu0 %v665, 21
    %v710 = vpop.permute.xlu0 %709
    %711 = vrot.lane.b32.xlu0 %v666, 21
    %v712 = vpop.permute.xlu0 %711
    %713 = vrot.lane.b32.xlu0 %v667, 21
    %v714 = vpop.permute.xlu0 %713
    %715 = vrot.lane.b32.xlu0 %v668, 21
    %v716 = vpop.permute.xlu0 %715
    %vm733 = vcmask 195752
    %734 = vst.msk [vmem:[#allocation2] sm:$0xff] %vm733, %v686
    %735 = vst.msk [vmem:[#allocation2 + $0x8] sm:$0xff] %vm733, %v688
    %736 = vst.msk [vmem:[#allocation2 + $0x10] sm:$0xff] %vm733, %v690
    %737 = vst.msk [vmem:[#allocation2 + $0x18] sm:$0xff] %vm733, %v692
    %738 = vst.msk [vmem:[#allocation2 + $0x20] sm:$0xff] %vm733, %v694
    %739 = vst.msk [vmem:[#allocation2 + $0x28] sm:$0xff] %vm733, %v696
    %740 = vst.msk [vmem:[#allocation2 + $0x30] sm:$0xff] %vm733, %v698
    %741 = vst.msk [vmem:[#allocation2 + $0x38] sm:$0xff] %vm733, %v700
    %742 = vst.msk [vmem:[#allocation2 + $0x40] sm:$0xff] %vm733, %v702
    %743 = vst.msk [vmem:[#allocation2 + $0x48] sm:$0xff] %vm733, %v704
    %744 = vst.msk [vmem:[#allocation2 + $0x50] sm:$0xff] %vm733, %v706
    %745 = vst.msk [vmem:[#allocation2 + $0x58] sm:$0xff] %vm733, %v708
    %746 = vst.msk [vmem:[#allocation2 + $0x60] sm:$0xff] %vm733, %v710
    %747 = vst.msk [vmem:[#allocation2 + $0x68] sm:$0xff] %vm733, %v712
    %748 = vst.msk [vmem:[#allocation2 + $0x70] sm:$0xff] %vm733, %v714
    %749 = vst.msk [vmem:[#allocation2 + $0x78] sm:$0xff] %vm733, %v716
    %v750 = vld [vmem:[%s554 + $0x1] sm:$0xff]
    %v751 = vld [vmem:[%s554 + $0x11] sm:$0xff]
    %v752 = vld [vmem:[%s554 + $0x21] sm:$0xff]
    %v753 = vld [vmem:[%s554 + $0x31] sm:$0xff]
    %v754 = vld [vmem:[%s554 + $0x41] sm:$0xff]
    %v755 = vld [vmem:[%s554 + $0x51] sm:$0xff]
    %v756 = vld [vmem:[%s554 + $0x61] sm:$0xff]
    %v757 = vld [vmem:[%s554 + $0x71] sm:$0xff]
    %v758 = vld [vmem:[%s554 + $0x91] sm:$0xff]
    %v759 = vld [vmem:[%s554 + $0xa1] sm:$0xff]
    %v760 = vld [vmem:[%s554 + $0xb1] sm:$0xff]
    %v761 = vld [vmem:[%s554 + $0xc1] sm:$0xff]
    %v762 = vld [vmem:[%s554 + $0xd1] sm:$0xff]
    %v763 = vld [vmem:[%s554 + $0xe1] sm:$0xff]
    %v764 = vld [vmem:[%s554 + $0xf1] sm:$0xff]
    %v765 = vld [vmem:[%s554 + $0x101] sm:$0xff]
    %782 = vrot.lane.b32.xlu0 %v750, 24
    %v783 = vpop.permute.xlu0 %782
    %784 = vrot.lane.b32.xlu0 %v751, 24
    %v785 = vpop.permute.xlu0 %784
    %786 = vrot.lane.b32.xlu0 %v752, 24
    %v787 = vpop.permute.xlu0 %786
    %788 = vrot.lane.b32.xlu0 %v753, 24
    %v789 = vpop.permute.xlu0 %788
    %790 = vrot.lane.b32.xlu0 %v754, 24
    %v791 = vpop.permute.xlu0 %790
    %792 = vrot.lane.b32.xlu0 %v755, 24
    %v793 = vpop.permute.xlu0 %792
    %794 = vrot.lane.b32.xlu0 %v756, 24
    %v795 = vpop.permute.xlu0 %794
    %796 = vrot.lane.b32.xlu0 %v757, 24
    %v797 = vpop.permute.xlu0 %796
    %798 = vrot.lane.b32.xlu0 %v758, 24
    %v799 = vpop.permute.xlu0 %798
    %800 = vrot.lane.b32.xlu0 %v759, 24
    %v801 = vpop.permute.xlu0 %800
    %802 = vrot.lane.b32.xlu0 %v760, 24
    %v803 = vpop.permute.xlu0 %802
    %804 = vrot.lane.b32.xlu0 %v761, 24
    %v805 = vpop.permute.xlu0 %804
    %806 = vrot.lane.b32.xlu0 %v762, 24
    %v807 = vpop.permute.xlu0 %806
    %808 = vrot.lane.b32.xlu0 %v763, 24
    %v809 = vpop.permute.xlu0 %808
    %810 = vrot.lane.b32.xlu0 %v764, 24
    %v811 = vpop.permute.xlu0 %810
    %812 = vrot.lane.b32.xlu0 %v765, 24
    %v813 = vpop.permute.xlu0 %812
    %vm830 = vcmask 220352
    %831 = vst.msk [vmem:[#allocation2] sm:$0xff] %vm830, %v783
    %832 = vst.msk [vmem:[#allocation2 + $0x8] sm:$0xff] %vm830, %v785
    %833 = vst.msk [vmem:[#allocation2 + $0x10] sm:$0xff] %vm830, %v787
    %834 = vst.msk [vmem:[#allocation2 + $0x18] sm:$0xff] %vm830, %v789
    %835 = vst.msk [vmem:[#allocation2 + $0x20] sm:$0xff] %vm830, %v791
    %836 = vst.msk [vmem:[#allocation2 + $0x28] sm:$0xff] %vm830, %v793
    %837 = vst.msk [vmem:[#allocation2 + $0x30] sm:$0xff] %vm830, %v795
    %838 = vst.msk [vmem:[#allocation2 + $0x38] sm:$0xff] %vm830, %v797
    %839 = vst.msk [vmem:[#allocation2 + $0x40] sm:$0xff] %vm830, %v799
    %840 = vst.msk [vmem:[#allocation2 + $0x48] sm:$0xff] %vm830, %v801
    %841 = vst.msk [vmem:[#allocation2 + $0x50] sm:$0xff] %vm830, %v803
    %842 = vst.msk [vmem:[#allocation2 + $0x58] sm:$0xff] %vm830, %v805
    %843 = vst.msk [vmem:[#allocation2 + $0x60] sm:$0xff] %vm830, %v807
    %844 = vst.msk [vmem:[#allocation2 + $0x68] sm:$0xff] %vm830, %v809
    %845 = vst.msk [vmem:[#allocation2 + $0x70] sm:$0xff] %vm830, %v811
    %846 = vst.msk [vmem:[#allocation2 + $0x78] sm:$0xff] %vm830, %v813
    %v847 = vld [vmem:[#allocation2] sm:$0xff]
    %v848 = vld [vmem:[%s1] sm:$0xff]
    %v849 = vld [vmem:[%s1 + $0x8] sm:$0xff]
    %v850 = vld [vmem:[%s1 + $0x10] sm:$0xff]
    %v851 = vld [vmem:[%s1 + $0x18] sm:$0x7]
    %v852 = vld [vmem:[%s2] sm:$0x1]
    %v854 = vperm.slane %v852, 0
    %vm856 = vcmask 220160
    %v858 = vsel %vm856, %v847, 0
    %vm860 = vcmask 1042432
    %v862 = vsel %vm860, %v851, 0
    %864 = vmatpush.msra.mxu0 0.0
    %865 = vmatpush.msra.mxu0 0.0
    %866 = vmatpush.msra.mxu0 0.0
    %867 = vmatpush.msra.mxu0 0.0
    %868 = vmatpush.msra.mxu0 0.0
    %869 = vmatpush.msra.mxu0 0.0
    %870 = vmatpush.msra.mxu0 0.0
    %871 = vmatpush.msra.mxu0 0.0
    %872 = vmatpush.msra.mxu0 0.0
    %873 = vmatpush.msra.mxu0 0.0
    %874 = vmatpush.msra.mxu0 0.0
    %875 = vmatpush.msra.mxu0 0.0
    %876 = vmatpush.msra.mxu0 %v862
    %877 = vmatpush.msra.mxu0 %v850
    %878 = vmatpush.msra.mxu0 %v849
    %879 = vmatpush.msra.mxu0 %v848
    %880 = vmatmul.f32.gmra.mxu0 %v858
    %v881 = vpop.f32.mrf.mxu0
    %v882 = vadd.f32 %v854, %v881
    %883 = vdwg.mxu0
    %v884 = vmax.f32 %v882, 0.0
    %vm885 = vcmask 64512
    %886 = vst.msk [vmem:[#allocation3] sm:$0xff] %vm885, %v884
    %s887 = scalar_lea.vmem [#allocation2], 8
    %v888 = vld [vmem:[%s887] sm:$0xff]
    %v889 = vld [vmem:[%s1] sm:$0xff]
    %v890 = vld [vmem:[%s1 + $0x8] sm:$0xff]
    %v891 = vld [vmem:[%s1 + $0x10] sm:$0xff]
    %v892 = vld [vmem:[%s1 + $0x18] sm:$0x7]
    %v893 = vld [vmem:[%s2] sm:$0x1]
    %v895 = vperm.slane %v893, 0
    %v898 = vsel %vm856, %v888, 0
    %v901 = vsel %vm860, %v892, 0
    %903 = vmatpush.msra.mxu0 0.0
    %904 = vmatpush.msra.mxu0 0.0
    %905 = vmatpush.msra.mxu0 0.0
    %906 = vmatpush.msra.mxu0 0.0
    %907 = vmatpush.msra.mxu0 0.0
    %908 = vmatpush.msra.mxu0 0.0
    %909 = vmatpush.msra.mxu0 0.0
    %910 = vmatpush.msra.mxu0 0.0
    %911 = vmatpush.msra.mxu0 0.0
    %912 = vmatpush.msra.mxu0 0.0
    %913 = vmatpush.msra.mxu0 0.0
    %914 = vmatpush.msra.mxu0 0.0
    %915 = vmatpush.msra.mxu0 %v901
    %916 = vmatpush.msra.mxu0 %v891
    %917 = vmatpush.msra.mxu0 %v890
    %918 = vmatpush.msra.mxu0 %v889
    %919 = vmatmul.f32.gmra.mxu0 %v898
    %v920 = vpop.f32.mrf.mxu0
    %v921 = vadd.f32 %v895, %v920
    %922 = vdwg.mxu0
    %v923 = vmax.f32 %v921, 0.0
    %s924 = scalar_lea.vmem [#allocation3], 8
    %925 = vst.msk [vmem:[%s924] sm:$0xff] %vm885, %v923
    %s926 = scalar_lea.vmem [#allocation2], 16
    %v927 = vld [vmem:[%s926] sm:$0xff]
    %v928 = vld [vmem:[%s1] sm:$0xff]
    %v929 = vld [vmem:[%s1 + $0x8] sm:$0xff]
    %v930 = vld [vmem:[%s1 + $0x10] sm:$0xff]
    %v931 = vld [vmem:[%s1 + $0x18] sm:$0x7]
    %v932 = vld [vmem:[%s2] sm:$0x1]
    %v934 = vperm.slane %v932, 0
    %v937 = vsel %vm856, %v927, 0
    %v940 = vsel %vm860, %v931, 0
    %942 = vmatpush.msra.mxu0 0.0
    %943 = vmatpush.msra.mxu0 0.0
    %944 = vmatpush.msra.mxu0 0.0
    %945 = vmatpush.msra.mxu0 0.0
    %946 = vmatpush.msra.mxu0 0.0
    %947 = vmatpush.msra.mxu0 0.0
    %948 = vmatpush.msra.mxu0 0.0
    %949 = vmatpush.msra.mxu0 0.0
    %950 = vmatpush.msra.mxu0 0.0
    %951 = vmatpush.msra.mxu0 0.0
    %952 = vmatpush.msra.mxu0 0.0
    %953 = vmatpush.msra.mxu0 0.0
    %954 = vmatpush.msra.mxu0 %v940
    %955 = vmatpush.msra.mxu0 %v930
    %956 = vmatpush.msra.mxu0 %v929
    %957 = vmatpush.msra.mxu0 %v928
    %958 = vmatmul.f32.gmra.mxu0 %v937
    %v959 = vpop.f32.mrf.mxu0
    %v960 = vadd.f32 %v934, %v959
    %961 = vdwg.mxu0
    %v962 = vmax.f32 %v960, 0.0
    %s963 = scalar_lea.vmem [#allocation3], 16
    %964 = vst.msk [vmem:[%s963] sm:$0xff] %vm885, %v962
    %s965 = scalar_lea.vmem [#allocation2], 24
    %v966 = vld [vmem:[%s965] sm:$0xff]
    %v967 = vld [vmem:[%s1] sm:$0xff]
    %v968 = vld [vmem:[%s1 + $0x8] sm:$0xff]
    %v969 = vld [vmem:[%s1 + $0x10] sm:$0xff]
    %v970 = vld [vmem:[%s1 + $0x18] sm:$0x7]
    %v971 = vld [vmem:[%s2] sm:$0x1]
    %v973 = vperm.slane %v971, 0
    %v976 = vsel %vm856, %v966, 0
    %v979 = vsel %vm860, %v970, 0
    %981 = vmatpush.msra.mxu0 0.0
    %982 = vmatpush.msra.mxu0 0.0
    %983 = vmatpush.msra.mxu0 0.0
    %984 = vmatpush.msra.mxu0 0.0
    %985 = vmatpush.msra.mxu0 0.0
    %986 = vmatpush.msra.mxu0 0.0
    %987 = vmatpush.msra.mxu0 0.0
    %988 = vmatpush.msra.mxu0 0.0
    %989 = vmatpush.msra.mxu0 0.0
    %990 = vmatpush.msra.mxu0 0.0
    %991 = vmatpush.msra.mxu0 0.0
    %992 = vmatpush.msra.mxu0 0.0
    %993 = vmatpush.msra.mxu0 %v979
    %994 = vmatpush.msra.mxu0 %v969
    %995 = vmatpush.msra.mxu0 %v968
    %996 = vmatpush.msra.mxu0 %v967
    %997 = vmatmul.f32.gmra.mxu0 %v976
    %v998 = vpop.f32.mrf.mxu0
    %v999 = vadd.f32 %v973, %v998
    %1000 = vdwg.mxu0
    %v1001 = vmax.f32 %v999, 0.0
    %s1002 = scalar_lea.vmem [#allocation3], 24
    %1003 = vst.msk [vmem:[%s1002] sm:$0xff] %vm885, %v1001
    %s1004 = scalar_lea.vmem [#allocation2], 32
    %v1005 = vld [vmem:[%s1004] sm:$0xff]
    %v1006 = vld [vmem:[%s1] sm:$0xff]
    %v1007 = vld [vmem:[%s1 + $0x8] sm:$0xff]
    %v1008 = vld [vmem:[%s1 + $0x10] sm:$0xff]
    %v1009 = vld [vmem:[%s1 + $0x18] sm:$0x7]
    %v1010 = vld [vmem:[%s2] sm:$0x1]
    %v1012 = vperm.slane %v1010, 0
    %v1015 = vsel %vm856, %v1005, 0
    %v1018 = vsel %vm860, %v1009, 0
    %1020 = vmatpush.msra.mxu0 0.0
    %1021 = vmatpush.msra.mxu0 0.0
    %1022 = vmatpush.msra.mxu0 0.0
    %1023 = vmatpush.msra.mxu0 0.0
    %1024 = vmatpush.msra.mxu0 0.0
    %1025 = vmatpush.msra.mxu0 0.0
    %1026 = vmatpush.msra.mxu0 0.0
    %1027 = vmatpush.msra.mxu0 0.0
    %1028 = vmatpush.msra.mxu0 0.0
    %1029 = vmatpush.msra.mxu0 0.0
    %1030 = vmatpush.msra.mxu0 0.0
    %1031 = vmatpush.msra.mxu0 0.0
    %1032 = vmatpush.msra.mxu0 %v1018
    %1033 = vmatpush.msra.mxu0 %v1008
    %1034 = vmatpush.msra.mxu0 %v1007
    %1035 = vmatpush.msra.mxu0 %v1006
    %1036 = vmatmul.f32.gmra.mxu0 %v1015
    %v1037 = vpop.f32.mrf.mxu0
    %v1038 = vadd.f32 %v1012, %v1037
    %1039 = vdwg.mxu0
    %v1040 = vmax.f32 %v1038, 0.0
    %s1041 = scalar_lea.vmem [#allocation3], 32
    %1042 = vst.msk [vmem:[%s1041] sm:$0xff] %vm885, %v1040
    %s1043 = scalar_lea.vmem [#allocation2], 40
    %v1044 = vld [vmem:[%s1043] sm:$0xff]
    %v1045 = vld [vmem:[%s1] sm:$0xff]
    %v1046 = vld [vmem:[%s1 + $0x8] sm:$0xff]
    %v1047 = vld [vmem:[%s1 + $0x10] sm:$0xff]
    %v1048 = vld [vmem:[%s1 + $0x18] sm:$0x7]
    %v1049 = vld [vmem:[%s2] sm:$0x1]
    %v1051 = vperm.slane %v1049, 0
    %v1054 = vsel %vm856, %v1044, 0
    %v1057 = vsel %vm860, %v1048, 0
    %1059 = vmatpush.msra.mxu0 0.0
    %1060 = vmatpush.msra.mxu0 0.0
    %1061 = vmatpush.msra.mxu0 0.0
    %1062 = vmatpush.msra.mxu0 0.0
    %1063 = vmatpush.msra.mxu0 0.0
    %1064 = vmatpush.msra.mxu0 0.0
    %1065 = vmatpush.msra.mxu0 0.0
    %1066 = vmatpush.msra.mxu0 0.0
    %1067 = vmatpush.msra.mxu0 0.0
    %1068 = vmatpush.msra.mxu0 0.0
    %1069 = vmatpush.msra.mxu0 0.0
    %1070 = vmatpush.msra.mxu0 0.0
    %1071 = vmatpush.msra.mxu0 %v1057
    %1072 = vmatpush.msra.mxu0 %v1047
    %1073 = vmatpush.msra.mxu0 %v1046
    %1074 = vmatpush.msra.mxu0 %v1045
    %1075 = vmatmul.f32.gmra.mxu0 %v1054
    %v1076 = vpop.f32.mrf.mxu0
    %v1077 = vadd.f32 %v1051, %v1076
    %1078 = vdwg.mxu0
    %v1079 = vmax.f32 %v1077, 0.0
    %s1080 = scalar_lea.vmem [#allocation3], 40
    %1081 = vst.msk [vmem:[%s1080] sm:$0xff] %vm885, %v1079
    %s1082 = scalar_lea.vmem [#allocation2], 48
    %v1083 = vld [vmem:[%s1082] sm:$0xff]
    %v1084 = vld [vmem:[%s1] sm:$0xff]
    %v1085 = vld [vmem:[%s1 + $0x8] sm:$0xff]
    %v1086 = vld [vmem:[%s1 + $0x10] sm:$0xff]
    %v1087 = vld [vmem:[%s1 + $0x18] sm:$0x7]
    %v1088 = vld [vmem:[%s2] sm:$0x1]
    %v1090 = vperm.slane %v1088, 0
    %v1093 = vsel %vm856, %v1083, 0
    %v1096 = vsel %vm860, %v1087, 0
    %1098 = vmatpush.msra.mxu0 0.0
    %1099 = vmatpush.msra.mxu0 0.0
    %1100 = vmatpush.msra.mxu0 0.0
    %1101 = vmatpush.msra.mxu0 0.0
    %1102 = vmatpush.msra.mxu0 0.0
    %1103 = vmatpush.msra.mxu0 0.0
    %1104 = vmatpush.msra.mxu0 0.0
    %1105 = vmatpush.msra.mxu0 0.0
    %1106 = vmatpush.msra.mxu0 0.0
    %1107 = vmatpush.msra.mxu0 0.0
    %1108 = vmatpush.msra.mxu0 0.0
    %1109 = vmatpush.msra.mxu0 0.0
    %1110 = vmatpush.msra.mxu0 %v1096
    %1111 = vmatpush.msra.mxu0 %v1086
    %1112 = vmatpush.msra.mxu0 %v1085
    %1113 = vmatpush.msra.mxu0 %v1084
    %1114 = vmatmul.f32.gmra.mxu0 %v1093
    %v1115 = vpop.f32.mrf.mxu0
    %v1116 = vadd.f32 %v1090, %v1115
    %1117 = vdwg.mxu0
    %v1118 = vmax.f32 %v1116, 0.0
    %s1119 = scalar_lea.vmem [#allocation3], 48
    %1120 = vst.msk [vmem:[%s1119] sm:$0xff] %vm885, %v1118
    %s1121 = scalar_lea.vmem [#allocation2], 56
    %v1122 = vld [vmem:[%s1121] sm:$0xff]
    %v1123 = vld [vmem:[%s1] sm:$0xff]
    %v1124 = vld [vmem:[%s1 + $0x8] sm:$0xff]
    %v1125 = vld [vmem:[%s1 + $0x10] sm:$0xff]
    %v1126 = vld [vmem:[%s1 + $0x18] sm:$0x7]
    %v1127 = vld [vmem:[%s2] sm:$0x1]
    %v1129 = vperm.slane %v1127, 0
    %v1132 = vsel %vm856, %v1122, 0
    %v1135 = vsel %vm860, %v1126, 0
    %1137 = vmatpush.msra.mxu0 0.0
    %1138 = vmatpush.msra.mxu0 0.0
    %1139 = vmatpush.msra.mxu0 0.0
    %1140 = vmatpush.msra.mxu0 0.0
    %1141 = vmatpush.msra.mxu0 0.0
    %1142 = vmatpush.msra.mxu0 0.0
    %1143 = vmatpush.msra.mxu0 0.0
    %1144 = vmatpush.msra.mxu0 0.0
    %1145 = vmatpush.msra.mxu0 0.0
    %1146 = vmatpush.msra.mxu0 0.0
    %1147 = vmatpush.msra.mxu0 0.0
    %1148 = vmatpush.msra.mxu0 0.0
    %1149 = vmatpush.msra.mxu0 %v1135
    %1150 = vmatpush.msra.mxu0 %v1125
    %1151 = vmatpush.msra.mxu0 %v1124
    %1152 = vmatpush.msra.mxu0 %v1123
    %1153 = vmatmul.f32.gmra.mxu0 %v1132
    %v1154 = vpop.f32.mrf.mxu0
    %v1155 = vadd.f32 %v1129, %v1154
    %1156 = vdwg.mxu0
    %v1157 = vmax.f32 %v1155, 0.0
    %s1158 = scalar_lea.vmem [#allocation3], 56
    %1159 = vst.msk [vmem:[%s1158] sm:$0xff] %vm885, %v1157
    %s1160 = scalar_lea.vmem [#allocation2], 64
    %v1161 = vld [vmem:[%s1160] sm:$0xff]
    %v1162 = vld [vmem:[%s1] sm:$0xff]
    %v1163 = vld [vmem:[%s1 + $0x8] sm:$0xff]
    %v1164 = vld [vmem:[%s1 + $0x10] sm:$0xff]
    %v1165 = vld [vmem:[%s1 + $0x18] sm:$0x7]
    %v1166 = vld [vmem:[%s2] sm:$0x1]
    %v1168 = vperm.slane %v1166, 0
    %v1171 = vsel %vm856, %v1161, 0
    %v1174 = vsel %vm860, %v1165, 0
    %1176 = vmatpush.msra.mxu0 0.0
    %1177 = vmatpush.msra.mxu0 0.0
    %1178 = vmatpush.msra.mxu0 0.0
    %1179 = vmatpush.msra.mxu0 0.0
    %1180 = vmatpush.msra.mxu0 0.0
    %1181 = vmatpush.msra.mxu0 0.0
    %1182 = vmatpush.msra.mxu0 0.0
    %1183 = vmatpush.msra.mxu0 0.0
    %1184 = vmatpush.msra.mxu0 0.0
    %1185 = vmatpush.msra.mxu0 0.0
    %1186 = vmatpush.msra.mxu0 0.0
    %1187 = vmatpush.msra.mxu0 0.0
    %1188 = vmatpush.msra.mxu0 %v1174
    %1189 = vmatpush.msra.mxu0 %v1164
    %1190 = vmatpush.msra.mxu0 %v1163
    %1191 = vmatpush.msra.mxu0 %v1162
    %1192 = vmatmul.f32.gmra.mxu0 %v1171
    %v1193 = vpop.f32.mrf.mxu0
    %v1194 = vadd.f32 %v1168, %v1193
    %1195 = vdwg.mxu0
    %v1196 = vmax.f32 %v1194, 0.0
    %s1197 = scalar_lea.vmem [#allocation3], 64
    %1198 = vst.msk [vmem:[%s1197] sm:$0xff] %vm885, %v1196
    %s1199 = scalar_lea.vmem [#allocation2], 72
    %v1200 = vld [vmem:[%s1199] sm:$0xff]
    %v1201 = vld [vmem:[%s1] sm:$0xff]
    %v1202 = vld [vmem:[%s1 + $0x8] sm:$0xff]
    %v1203 = vld [vmem:[%s1 + $0x10] sm:$0xff]
    %v1204 = vld [vmem:[%s1 + $0x18] sm:$0x7]
    %v1205 = vld [vmem:[%s2] sm:$0x1]
    %v1207 = vperm.slane %v1205, 0
    %v1210 = vsel %vm856, %v1200, 0
    %v1213 = vsel %vm860, %v1204, 0
    %1215 = vmatpush.msra.mxu0 0.0
    %1216 = vmatpush.msra.mxu0 0.0
    %1217 = vmatpush.msra.mxu0 0.0
    %1218 = vmatpush.msra.mxu0 0.0
    %1219 = vmatpush.msra.mxu0 0.0
    %1220 = vmatpush.msra.mxu0 0.0
    %1221 = vmatpush.msra.mxu0 0.0
    %1222 = vmatpush.msra.mxu0 0.0
    %1223 = vmatpush.msra.mxu0 0.0
    %1224 = vmatpush.msra.mxu0 0.0
    %1225 = vmatpush.msra.mxu0 0.0
    %1226 = vmatpush.msra.mxu0 0.0
    %1227 = vmatpush.msra.mxu0 %v1213
    %1228 = vmatpush.msra.mxu0 %v1203
    %1229 = vmatpush.msra.mxu0 %v1202
    %1230 = vmatpush.msra.mxu0 %v1201
    %1231 = vmatmul.f32.gmra.mxu0 %v1210
    %v1232 = vpop.f32.mrf.mxu0
    %v1233 = vadd.f32 %v1207, %v1232
    %1234 = vdwg.mxu0
    %v1235 = vmax.f32 %v1233, 0.0
    %s1236 = scalar_lea.vmem [#allocation3], 72
    %1237 = vst.msk [vmem:[%s1236] sm:$0xff] %vm885, %v1235
    %s1238 = scalar_lea.vmem [#allocation2], 80
    %v1239 = vld [vmem:[%s1238] sm:$0xff]
    %v1240 = vld [vmem:[%s1] sm:$0xff]
    %v1241 = vld [vmem:[%s1 + $0x8] sm:$0xff]
    %v1242 = vld [vmem:[%s1 + $0x10] sm:$0xff]
    %v1243 = vld [vmem:[%s1 + $0x18] sm:$0x7]
    %v1244 = vld [vmem:[%s2] sm:$0x1]
    %v1246 = vperm.slane %v1244, 0
    %v1249 = vsel %vm856, %v1239, 0
    %v1252 = vsel %vm860, %v1243, 0
    %1254 = vmatpush.msra.mxu0 0.0
    %1255 = vmatpush.msra.mxu0 0.0
    %1256 = vmatpush.msra.mxu0 0.0
    %1257 = vmatpush.msra.mxu0 0.0
    %1258 = vmatpush.msra.mxu0 0.0
    %1259 = vmatpush.msra.mxu0 0.0
    %1260 = vmatpush.msra.mxu0 0.0
    %1261 = vmatpush.msra.mxu0 0.0
    %1262 = vmatpush.msra.mxu0 0.0
    %1263 = vmatpush.msra.mxu0 0.0
    %1264 = vmatpush.msra.mxu0 0.0
    %1265 = vmatpush.msra.mxu0 0.0
    %1266 = vmatpush.msra.mxu0 %v1252
    %1267 = vmatpush.msra.mxu0 %v1242
    %1268 = vmatpush.msra.mxu0 %v1241
    %1269 = vmatpush.msra.mxu0 %v1240
    %1270 = vmatmul.f32.gmra.mxu0 %v1249
    %v1271 = vpop.f32.mrf.mxu0
    %v1272 = vadd.f32 %v1246, %v1271
    %1273 = vdwg.mxu0
    %v1274 = vmax.f32 %v1272, 0.0
    %s1275 = scalar_lea.vmem [#allocation3], 80
    %1276 = vst.msk [vmem:[%s1275] sm:$0xff] %vm885, %v1274
    %s1277 = scalar_lea.vmem [#allocation2], 88
    %v1278 = vld [vmem:[%s1277] sm:$0xff]
    %v1279 = vld [vmem:[%s1] sm:$0xff]
    %v1280 = vld [vmem:[%s1 + $0x8] sm:$0xff]
    %v1281 = vld [vmem:[%s1 + $0x10] sm:$0xff]
    %v1282 = vld [vmem:[%s1 + $0x18] sm:$0x7]
    %v1283 = vld [vmem:[%s2] sm:$0x1]
    %v1285 = vperm.slane %v1283, 0
    %v1288 = vsel %vm856, %v1278, 0
    %v1291 = vsel %vm860, %v1282, 0
    %1293 = vmatpush.msra.mxu0 0.0
    %1294 = vmatpush.msra.mxu0 0.0
    %1295 = vmatpush.msra.mxu0 0.0
    %1296 = vmatpush.msra.mxu0 0.0
    %1297 = vmatpush.msra.mxu0 0.0
    %1298 = vmatpush.msra.mxu0 0.0
    %1299 = vmatpush.msra.mxu0 0.0
    %1300 = vmatpush.msra.mxu0 0.0
    %1301 = vmatpush.msra.mxu0 0.0
    %1302 = vmatpush.msra.mxu0 0.0
    %1303 = vmatpush.msra.mxu0 0.0
    %1304 = vmatpush.msra.mxu0 0.0
    %1305 = vmatpush.msra.mxu0 %v1291
    %1306 = vmatpush.msra.mxu0 %v1281
    %1307 = vmatpush.msra.mxu0 %v1280
    %1308 = vmatpush.msra.mxu0 %v1279
    %1309 = vmatmul.f32.gmra.mxu0 %v1288
    %v1310 = vpop.f32.mrf.mxu0
    %v1311 = vadd.f32 %v1285, %v1310
    %1312 = vdwg.mxu0
    %v1313 = vmax.f32 %v1311, 0.0
    %s1314 = scalar_lea.vmem [#allocation3], 88
    %1315 = vst.msk [vmem:[%s1314] sm:$0xff] %vm885, %v1313
    %s1316 = scalar_lea.vmem [#allocation2], 96
    %v1317 = vld [vmem:[%s1316] sm:$0xff]
    %v1318 = vld [vmem:[%s1] sm:$0xff]
    %v1319 = vld [vmem:[%s1 + $0x8] sm:$0xff]
    %v1320 = vld [vmem:[%s1 + $0x10] sm:$0xff]
    %v1321 = vld [vmem:[%s1 + $0x18] sm:$0x7]
    %v1322 = vld [vmem:[%s2] sm:$0x1]
    %v1324 = vperm.slane %v1322, 0
    %v1327 = vsel %vm856, %v1317, 0
    %v1330 = vsel %vm860, %v1321, 0
    %1332 = vmatpush.msra.mxu0 0.0
    %1333 = vmatpush.msra.mxu0 0.0
    %1334 = vmatpush.msra.mxu0 0.0
    %1335 = vmatpush.msra.mxu0 0.0
    %1336 = vmatpush.msra.mxu0 0.0
    %1337 = vmatpush.msra.mxu0 0.0
    %1338 = vmatpush.msra.mxu0 0.0
    %1339 = vmatpush.msra.mxu0 0.0
    %1340 = vmatpush.msra.mxu0 0.0
    %1341 = vmatpush.msra.mxu0 0.0
    %1342 = vmatpush.msra.mxu0 0.0
    %1343 = vmatpush.msra.mxu0 0.0
    %1344 = vmatpush.msra.mxu0 %v1330
    %1345 = vmatpush.msra.mxu0 %v1320
    %1346 = vmatpush.msra.mxu0 %v1319
    %1347 = vmatpush.msra.mxu0 %v1318
    %1348 = vmatmul.f32.gmra.mxu0 %v1327
    %v1349 = vpop.f32.mrf.mxu0
    %v1350 = vadd.f32 %v1324, %v1349
    %1351 = vdwg.mxu0
    %v1352 = vmax.f32 %v1350, 0.0
    %s1353 = scalar_lea.vmem [#allocation3], 96
    %1354 = vst.msk [vmem:[%s1353] sm:$0xff] %vm885, %v1352
    %s1355 = scalar_lea.vmem [#allocation2], 104
    %v1356 = vld [vmem:[%s1355] sm:$0xff]
    %v1357 = vld [vmem:[%s1] sm:$0xff]
    %v1358 = vld [vmem:[%s1 + $0x8] sm:$0xff]
    %v1359 = vld [vmem:[%s1 + $0x10] sm:$0xff]
    %v1360 = vld [vmem:[%s1 + $0x18] sm:$0x7]
    %v1361 = vld [vmem:[%s2] sm:$0x1]
    %v1363 = vperm.slane %v1361, 0
    %v1366 = vsel %vm856, %v1356, 0
    %v1369 = vsel %vm860, %v1360, 0
    %1371 = vmatpush.msra.mxu0 0.0
    %1372 = vmatpush.msra.mxu0 0.0
    %1373 = vmatpush.msra.mxu0 0.0
    %1374 = vmatpush.msra.mxu0 0.0
    %1375 = vmatpush.msra.mxu0 0.0
    %1376 = vmatpush.msra.mxu0 0.0
    %1377 = vmatpush.msra.mxu0 0.0
    %1378 = vmatpush.msra.mxu0 0.0
    %1379 = vmatpush.msra.mxu0 0.0
    %1380 = vmatpush.msra.mxu0 0.0
    %1381 = vmatpush.msra.mxu0 0.0
    %1382 = vmatpush.msra.mxu0 0.0
    %1383 = vmatpush.msra.mxu0 %v1369
    %1384 = vmatpush.msra.mxu0 %v1359
    %1385 = vmatpush.msra.mxu0 %v1358
    %1386 = vmatpush.msra.mxu0 %v1357
    %1387 = vmatmul.f32.gmra.mxu0 %v1366
    %v1388 = vpop.f32.mrf.mxu0
    %v1389 = vadd.f32 %v1363, %v1388
    %1390 = vdwg.mxu0
    %v1391 = vmax.f32 %v1389, 0.0
    %s1392 = scalar_lea.vmem [#allocation3], 104
    %1393 = vst.msk [vmem:[%s1392] sm:$0xff] %vm885, %v1391
    %s1394 = scalar_lea.vmem [#allocation2], 112
    %v1395 = vld [vmem:[%s1394] sm:$0xff]
    %v1396 = vld [vmem:[%s1] sm:$0xff]
    %v1397 = vld [vmem:[%s1 + $0x8] sm:$0xff]
    %v1398 = vld [vmem:[%s1 + $0x10] sm:$0xff]
    %v1399 = vld [vmem:[%s1 + $0x18] sm:$0x7]
    %v1400 = vld [vmem:[%s2] sm:$0x1]
    %v1402 = vperm.slane %v1400, 0
    %v1405 = vsel %vm856, %v1395, 0
    %v1408 = vsel %vm860, %v1399, 0
    %1410 = vmatpush.msra.mxu0 0.0
    %1411 = vmatpush.msra.mxu0 0.0
    %1412 = vmatpush.msra.mxu0 0.0
    %1413 = vmatpush.msra.mxu0 0.0
    %1414 = vmatpush.msra.mxu0 0.0
    %1415 = vmatpush.msra.mxu0 0.0
    %1416 = vmatpush.msra.mxu0 0.0
    %1417 = vmatpush.msra.mxu0 0.0
    %1418 = vmatpush.msra.mxu0 0.0
    %1419 = vmatpush.msra.mxu0 0.0
    %1420 = vmatpush.msra.mxu0 0.0
    %1421 = vmatpush.msra.mxu0 0.0
    %1422 = vmatpush.msra.mxu0 %v1408
    %1423 = vmatpush.msra.mxu0 %v1398
    %1424 = vmatpush.msra.mxu0 %v1397
    %1425 = vmatpush.msra.mxu0 %v1396
    %1426 = vmatmul.f32.gmra.mxu0 %v1405
    %v1427 = vpop.f32.mrf.mxu0
    %v1428 = vadd.f32 %v1402, %v1427
    %1429 = vdwg.mxu0
    %v1430 = vmax.f32 %v1428, 0.0
    %s1431 = scalar_lea.vmem [#allocation3], 112
    %1432 = vst.msk [vmem:[%s1431] sm:$0xff] %vm885, %v1430
    %s1433 = scalar_lea.vmem [#allocation2], 120
    %v1434 = vld [vmem:[%s1433] sm:$0xff]
    %v1435 = vld [vmem:[%s1] sm:$0xff]
    %v1436 = vld [vmem:[%s1 + $0x8] sm:$0xff]
    %v1437 = vld [vmem:[%s1 + $0x10] sm:$0xff]
    %v1438 = vld [vmem:[%s1 + $0x18] sm:$0x7]
    %v1439 = vld [vmem:[%s2] sm:$0x1]
    %v1441 = vperm.slane %v1439, 0
    %v1444 = vsel %vm856, %v1434, 0
    %v1447 = vsel %vm860, %v1438, 0
    %1449 = vmatpush.msra.mxu0 0.0
    %1450 = vmatpush.msra.mxu0 0.0
    %1451 = vmatpush.msra.mxu0 0.0
    %1452 = vmatpush.msra.mxu0 0.0
    %1453 = vmatpush.msra.mxu0 0.0
    %1454 = vmatpush.msra.mxu0 0.0
    %1455 = vmatpush.msra.mxu0 0.0
    %1456 = vmatpush.msra.mxu0 0.0
    %1457 = vmatpush.msra.mxu0 0.0
    %1458 = vmatpush.msra.mxu0 0.0
    %1459 = vmatpush.msra.mxu0 0.0
    %1460 = vmatpush.msra.mxu0 0.0
    %1461 = vmatpush.msra.mxu0 %v1447
    %1462 = vmatpush.msra.mxu0 %v1437
    %1463 = vmatpush.msra.mxu0 %v1436
    %1464 = vmatpush.msra.mxu0 %v1435
    %1465 = vmatmul.f32.gmra.mxu0 %v1444
    %v1466 = vpop.f32.mrf.mxu0
    %v1467 = vadd.f32 %v1441, %v1466
    %1468 = vdwg.mxu0
    %v1469 = vmax.f32 %v1467, 0.0
    %s1470 = scalar_lea.vmem [#allocation3], 120
    %1471 = vst.msk [vmem:[%s1470] sm:$0xff] %vm885, %v1469
    %vm1472 = vcmask 62464
    %1473 = vst.msk [vmem:[#allocation4] sm:$0x3f] %vm1472, 0.0
    %1474 = vst.msk [vmem:[#allocation4 + $0x8] sm:$0x3f] %vm1472, 0.0
    %1475 = vst.msk [vmem:[#allocation4 + $0x10] sm:$0x3f] %vm1472, 0.0
    %1476 = vst.msk [vmem:[#allocation4 + $0x18] sm:$0x3f] %vm1472, 0.0
    %1477 = vst.msk [vmem:[#allocation4 + $0x20] sm:$0x3f] %vm1472, 0.0
    %1478 = vst.msk [vmem:[#allocation4 + $0x28] sm:$0x3f] %vm1472, 0.0
    %1479 = vst.msk [vmem:[#allocation4 + $0x30] sm:$0x3f] %vm1472, 0.0
    %1480 = vst.msk [vmem:[#allocation4 + $0x38] sm:$0x3f] %vm1472, 0.0
    %1481 = vst.msk [vmem:[#allocation4 + $0x40] sm:$0x3f] %vm1472, 0.0
    %1482 = vst.msk [vmem:[#allocation4 + $0x48] sm:$0x3f] %vm1472, 0.0
    %1483 = vst.msk [vmem:[#allocation4 + $0x50] sm:$0x3f] %vm1472, 0.0
    %1484 = vst.msk [vmem:[#allocation4 + $0x58] sm:$0x3f] %vm1472, 0.0
    %v1485 = vld [vmem:[#allocation3] sm:$0xff]
    %v1486 = vld [vmem:[#allocation3 + $0x40] sm:$0xff]
    %v1487 = vld [vmem:[%s924] sm:$0xff]
    %v1488 = vld [vmem:[%s924 + $0x40] sm:$0xff]
    %v1489 = vmax.f32 %v1485, %v1487
    %v1490 = vmax.f32 %v1486, %v1488
    %v1493 = vrot.slane %v1489, 1
    %v1494 = vrot.slane %v1490, 1
    %v1497 = vmax.f32 %v1489, %v1493
    %v1498 = vmax.f32 %v1490, %v1494
    %s1499 = scalar_lea.vmem [#allocation4], 8
    %vm1500 = vcmask 57344
    %1501 = vst.msk [vmem:[%s1499 + $0x1] sm:$0x1] %vm1500, %v1497
    %1502 = vst.msk [vmem:[%s1499 + $0x31] sm:$0x1] %vm1500, %v1498
    %vm1503 = vcmask 59394
    %1504 = vst.msk [vmem:[%s1499] sm:$0x4] %vm1503, %v1497
    %1505 = vst.msk [vmem:[%s1499 + $0x30] sm:$0x4] %vm1503, %v1498
    %vm1506 = vcmask 61444
    %1507 = vst.msk [vmem:[%s1499 - $0x1] sm:$0x10] %vm1506, %v1497
    %1508 = vst.msk [vmem:[%s1499 + $0x2f] sm:$0x10] %vm1506, %v1498
    %vm1509 = vcmask 63494
    %1510 = vst.msk [vmem:[%s1499 - $0x2] sm:$0x40] %vm1509, %v1497
    %1511 = vst.msk [vmem:[%s1499 + $0x2e] sm:$0x40] %vm1509, %v1498
    %v1512 = vld [vmem:[%s963] sm:$0xff]
    %v1513 = vld [vmem:[%s963 + $0x40] sm:$0xff]
    %v1514 = vld [vmem:[%s1002] sm:$0xff]
    %v1515 = vld [vmem:[%s1002 + $0x40] sm:$0xff]
    %v1516 = vmax.f32 %v1512, %v1514
    %v1517 = vmax.f32 %v1513, %v1515
    %v1520 = vrot.slane %v1516, 1
    %v1521 = vrot.slane %v1517, 1
    %v1524 = vmax.f32 %v1516, %v1520
    %v1525 = vmax.f32 %v1517, %v1521
    %s1526 = scalar_lea.vmem [#allocation4], 16
    %1527 = vst.msk [vmem:[%s1526 + $0x1] sm:$0x1] %vm1500, %v1524
    %1528 = vst.msk [vmem:[%s1526 + $0x31] sm:$0x1] %vm1500, %v1525
    %1529 = vst.msk [vmem:[%s1526] sm:$0x4] %vm1503, %v1524
    %1530 = vst.msk [vmem:[%s1526 + $0x30] sm:$0x4] %vm1503, %v1525
    %1531 = vst.msk [vmem:[%s1526 - $0x1] sm:$0x10] %vm1506, %v1524
    %1532 = vst.msk [vmem:[%s1526 + $0x2f] sm:$0x10] %vm1506, %v1525
    %1533 = vst.msk [vmem:[%s1526 - $0x2] sm:$0x40] %vm1509, %v1524
    %1534 = vst.msk [vmem:[%s1526 + $0x2e] sm:$0x40] %vm1509, %v1525
    %v1535 = vld [vmem:[%s1041] sm:$0xff]
    %v1536 = vld [vmem:[%s1041 + $0x40] sm:$0xff]
    %v1537 = vld [vmem:[%s1080] sm:$0xff]
    %v1538 = vld [vmem:[%s1080 + $0x40] sm:$0xff]
    %v1539 = vmax.f32 %v1535, %v1537
    %v1540 = vmax.f32 %v1536, %v1538
    %v1543 = vrot.slane %v1539, 1
    %v1544 = vrot.slane %v1540, 1
    %v1547 = vmax.f32 %v1539, %v1543
    %v1548 = vmax.f32 %v1540, %v1544
    %s1549 = scalar_lea.vmem [#allocation4], 24
    %1550 = vst.msk [vmem:[%s1549 + $0x1] sm:$0x1] %vm1500, %v1547
    %1551 = vst.msk [vmem:[%s1549 + $0x31] sm:$0x1] %vm1500, %v1548
    %1552 = vst.msk [vmem:[%s1549] sm:$0x4] %vm1503, %v1547
    %1553 = vst.msk [vmem:[%s1549 + $0x30] sm:$0x4] %vm1503, %v1548
    %1554 = vst.msk [vmem:[%s1549 - $0x1] sm:$0x10] %vm1506, %v1547
    %1555 = vst.msk [vmem:[%s1549 + $0x2f] sm:$0x10] %vm1506, %v1548
    %1556 = vst.msk [vmem:[%s1549 - $0x2] sm:$0x40] %vm1509, %v1547
    %1557 = vst.msk [vmem:[%s1549 + $0x2e] sm:$0x40] %vm1509, %v1548
    %v1558 = vld [vmem:[%s1119] sm:$0xff]
    %v1559 = vld [vmem:[%s1119 + $0x40] sm:$0xff]
    %v1560 = vld [vmem:[%s1158] sm:$0xff]
    %v1561 = vld [vmem:[%s1158 + $0x40] sm:$0xff]
    %v1562 = vmax.f32 %v1558, %v1560
    %v1563 = vmax.f32 %v1559, %v1561
    %v1566 = vrot.slane %v1562, 1
    %v1567 = vrot.slane %v1563, 1
    %v1570 = vmax.f32 %v1562, %v1566
    %v1571 = vmax.f32 %v1563, %v1567
    %s1572 = scalar_lea.vmem [#allocation4], 32
    %1573 = vst.msk [vmem:[%s1572 + $0x1] sm:$0x1] %vm1500, %v1570
    %1574 = vst.msk [vmem:[%s1572 + $0x31] sm:$0x1] %vm1500, %v1571
    %1575 = vst.msk [vmem:[%s1572] sm:$0x4] %vm1503, %v1570
    %1576 = vst.msk [vmem:[%s1572 + $0x30] sm:$0x4] %vm1503, %v1571
    %1577 = vst.msk [vmem:[%s1572 - $0x1] sm:$0x10] %vm1506, %v1570
    %1578 = vst.msk [vmem:[%s1572 + $0x2f] sm:$0x10] %vm1506, %v1571
    %1579 = vst.msk [vmem:[%s1572 - $0x2] sm:$0x40] %vm1509, %v1570
    %1580 = vst.msk [vmem:[%s1572 + $0x2e] sm:$0x40] %vm1509, %v1571
    %v1581 = vld [vmem:[#allocation4] sm:$0xf]
    %v1582 = vld [vmem:[#allocation4 + $0x8] sm:$0xf]
    %v1583 = vld [vmem:[#allocation4 + $0x10] sm:$0xf]
    %v1584 = vld [vmem:[#allocation4 + $0x18] sm:$0xf]
    %v1585 = vld [vmem:[#allocation4 + $0x30] sm:$0xf]
    %v1586 = vld [vmem:[#allocation4 + $0x38] sm:$0xf]
    %v1587 = vld [vmem:[#allocation4 + $0x40] sm:$0xf]
    %v1588 = vld [vmem:[#allocation4 + $0x48] sm:$0xf]
    %v1589 = vld [vmem:[%s3] sm:$0x1]
    %v1590 = vperm.slane %v1589, 0
    %v1591 = vmul.f32 %v1581, %v1590
    %v1592 = vmul.f32 %v1582, %v1590
    %v1593 = vmul.f32 %v1583, %v1590
    %v1594 = vmul.f32 %v1584, %v1590
    %v1595 = vmul.f32 %v1585, %v1590
    %v1596 = vmul.f32 %v1586, %v1590
    %v1597 = vmul.f32 %v1587, %v1590
    %v1598 = vmul.f32 %v1588, %v1590
    %v1599 = vld [vmem:[#allocation4 + $0x1] sm:$0xf]
    %v1600 = vld [vmem:[#allocation4 + $0x9] sm:$0xf]
    %v1601 = vld [vmem:[#allocation4 + $0x11] sm:$0xf]
    %v1602 = vld [vmem:[#allocation4 + $0x19] sm:$0xf]
    %v1603 = vld [vmem:[#allocation4 + $0x31] sm:$0xf]
    %v1604 = vld [vmem:[#allocation4 + $0x39] sm:$0xf]
    %v1605 = vld [vmem:[#allocation4 + $0x41] sm:$0xf]
    %v1606 = vld [vmem:[#allocation4 + $0x49] sm:$0xf]
    %v1607 = vld [vmem:[%s3 + $0x1] sm:$0x1]
    %v1608 = vperm.slane %v1607, 0
    %v1609 = vmul.f32 %v1599, %v1608
    %v1610 = vmul.f32 %v1600, %v1608
    %v1611 = vmul.f32 %v1601, %v1608
    %v1612 = vmul.f32 %v1602, %v1608
    %v1613 = vmul.f32 %v1603, %v1608
    %v1614 = vmul.f32 %v1604, %v1608
    %v1615 = vmul.f32 %v1605, %v1608
    %v1616 = vmul.f32 %v1606, %v1608
    %v1617 = vld [vmem:[#allocation4 + $0x2] sm:$0xf]
    %v1618 = vld [vmem:[#allocation4 + $0xa] sm:$0xf]
    %v1619 = vld [vmem:[#allocation4 + $0x12] sm:$0xf]
    %v1620 = vld [vmem:[#allocation4 + $0x1a] sm:$0xf]
    %v1621 = vld [vmem:[#allocation4 + $0x32] sm:$0xf]
    %v1622 = vld [vmem:[#allocation4 + $0x3a] sm:$0xf]
    %v1623 = vld [vmem:[#allocation4 + $0x42] sm:$0xf]
    %v1624 = vld [vmem:[#allocation4 + $0x4a] sm:$0xf]
    %v1625 = vld [vmem:[%s3 + $0x2] sm:$0x1]
    %v1626 = vperm.slane %v1625, 0
    %v1627 = vmul.f32 %v1617, %v1626
    %v1628 = vmul.f32 %v1618, %v1626
    %v1629 = vmul.f32 %v1619, %v1626
    %v1630 = vmul.f32 %v1620, %v1626
    %v1631 = vmul.f32 %v1621, %v1626
    %v1632 = vmul.f32 %v1622, %v1626
    %v1633 = vmul.f32 %v1623, %v1626
    %v1634 = vmul.f32 %v1624, %v1626
    %v1635 = vld [vmem:[%s1499] sm:$0xf]
    %v1636 = vld [vmem:[%s1499 + $0x8] sm:$0xf]
    %v1637 = vld [vmem:[%s1499 + $0x10] sm:$0xf]
    %v1638 = vld [vmem:[%s1499 + $0x18] sm:$0xf]
    %v1639 = vld [vmem:[%s1499 + $0x30] sm:$0xf]
    %v1640 = vld [vmem:[%s1499 + $0x38] sm:$0xf]
    %v1641 = vld [vmem:[%s1499 + $0x40] sm:$0xf]
    %v1642 = vld [vmem:[%s1499 + $0x48] sm:$0xf]
    %v1643 = vld [vmem:[%s3 + $0x3] sm:$0x1]
    %v1644 = vperm.slane %v1643, 0
    %v1645 = vmul.f32 %v1635, %v1644
    %v1646 = vmul.f32 %v1636, %v1644
    %v1647 = vmul.f32 %v1637, %v1644
    %v1648 = vmul.f32 %v1638, %v1644
    %v1649 = vmul.f32 %v1639, %v1644
    %v1650 = vmul.f32 %v1640, %v1644
    %v1651 = vmul.f32 %v1641, %v1644
    %v1652 = vmul.f32 %v1642, %v1644
    %v1653 = vld [vmem:[%s1499 + $0x1] sm:$0xf]
    %v1654 = vld [vmem:[%s1499 + $0x9] sm:$0xf]
    %v1655 = vld [vmem:[%s1499 + $0x11] sm:$0xf]
    %v1656 = vld [vmem:[%s1499 + $0x19] sm:$0xf]
    %v1657 = vld [vmem:[%s1499 + $0x31] sm:$0xf]
    %v1658 = vld [vmem:[%s1499 + $0x39] sm:$0xf]
    %v1659 = vld [vmem:[%s1499 + $0x41] sm:$0xf]
    %v1660 = vld [vmem:[%s1499 + $0x49] sm:$0xf]
    %v1661 = vld [vmem:[%s3 + $0x4] sm:$0x1]
    %v1662 = vperm.slane %v1661, 0
    %v1663 = vmul.f32 %v1653, %v1662
    %v1664 = vmul.f32 %v1654, %v1662
    %v1665 = vmul.f32 %v1655, %v1662
    %v1666 = vmul.f32 %v1656, %v1662
    %v1667 = vmul.f32 %v1657, %v1662
    %v1668 = vmul.f32 %v1658, %v1662
    %v1669 = vmul.f32 %v1659, %v1662
    %v1670 = vmul.f32 %v1660, %v1662
    %v1671 = vld [vmem:[%s1499 + $0x2] sm:$0xf]
    %v1672 = vld [vmem:[%s1499 + $0xa] sm:$0xf]
    %v1673 = vld [vmem:[%s1499 + $0x12] sm:$0xf]
    %v1674 = vld [vmem:[%s1499 + $0x1a] sm:$0xf]
    %v1675 = vld [vmem:[%s1499 + $0x32] sm:$0xf]
    %v1676 = vld [vmem:[%s1499 + $0x3a] sm:$0xf]
    %v1677 = vld [vmem:[%s1499 + $0x42] sm:$0xf]
    %v1678 = vld [vmem:[%s1499 + $0x4a] sm:$0xf]
    %v1679 = vld [vmem:[%s3 + $0x5] sm:$0x1]
    %v1680 = vperm.slane %v1679, 0
    %v1681 = vmul.f32 %v1671, %v1680
    %v1682 = vmul.f32 %v1672, %v1680
    %v1683 = vmul.f32 %v1673, %v1680
    %v1684 = vmul.f32 %v1674, %v1680
    %v1685 = vmul.f32 %v1675, %v1680
    %v1686 = vmul.f32 %v1676, %v1680
    %v1687 = vmul.f32 %v1677, %v1680
    %v1688 = vmul.f32 %v1678, %v1680
    %v1689 = vld [vmem:[%s1526] sm:$0xf]
    %v1690 = vld [vmem:[%s1526 + $0x8] sm:$0xf]
    %v1691 = vld [vmem:[%s1526 + $0x10] sm:$0xf]
    %v1692 = vld [vmem:[%s1526 + $0x18] sm:$0xf]
    %v1693 = vld [vmem:[%s1526 + $0x30] sm:$0xf]
    %v1694 = vld [vmem:[%s1526 + $0x38] sm:$0xf]
    %v1695 = vld [vmem:[%s1526 + $0x40] sm:$0xf]
    %v1696 = vld [vmem:[%s1526 + $0x48] sm:$0xf]
    %v1697 = vld [vmem:[%s3 + $0x6] sm:$0x1]
    %v1698 = vperm.slane %v1697, 0
    %v1699 = vmul.f32 %v1689, %v1698
    %v1700 = vmul.f32 %v1690, %v1698
    %v1701 = vmul.f32 %v1691, %v1698
    %v1702 = vmul.f32 %v1692, %v1698
    %v1703 = vmul.f32 %v1693, %v1698
    %v1704 = vmul.f32 %v1694, %v1698
    %v1705 = vmul.f32 %v1695, %v1698
    %v1706 = vmul.f32 %v1696, %v1698
    %v1707 = vld [vmem:[%s1526 + $0x1] sm:$0xf]
    %v1708 = vld [vmem:[%s1526 + $0x9] sm:$0xf]
    %v1709 = vld [vmem:[%s1526 + $0x11] sm:$0xf]
    %v1710 = vld [vmem:[%s1526 + $0x19] sm:$0xf]
    %v1711 = vld [vmem:[%s1526 + $0x31] sm:$0xf]
    %v1712 = vld [vmem:[%s1526 + $0x39] sm:$0xf]
    %v1713 = vld [vmem:[%s1526 + $0x41] sm:$0xf]
    %v1714 = vld [vmem:[%s1526 + $0x49] sm:$0xf]
    %v1715 = vld [vmem:[%s3 + $0x7] sm:$0x1]
    %v1716 = vperm.slane %v1715, 0
    %v1717 = vmul.f32 %v1707, %v1716
    %v1718 = vmul.f32 %v1708, %v1716
    %v1719 = vmul.f32 %v1709, %v1716
    %v1720 = vmul.f32 %v1710, %v1716
    %v1721 = vmul.f32 %v1711, %v1716
    %v1722 = vmul.f32 %v1712, %v1716
    %v1723 = vmul.f32 %v1713, %v1716
    %v1724 = vmul.f32 %v1714, %v1716
    %v1725 = vld [vmem:[%s1526 + $0x2] sm:$0xf]
    %v1726 = vld [vmem:[%s1526 + $0xa] sm:$0xf]
    %v1727 = vld [vmem:[%s1526 + $0x12] sm:$0xf]
    %v1728 = vld [vmem:[%s1526 + $0x1a] sm:$0xf]
    %v1729 = vld [vmem:[%s1526 + $0x32] sm:$0xf]
    %v1730 = vld [vmem:[%s1526 + $0x3a] sm:$0xf]
    %v1731 = vld [vmem:[%s1526 + $0x42] sm:$0xf]
    %v1732 = vld [vmem:[%s1526 + $0x4a] sm:$0xf]
    %v1733 = vld [vmem:[%s3 + $0x8] sm:$0x1]
    %v1734 = vperm.slane %v1733, 0
    %v1735 = vmul.f32 %v1725, %v1734
    %v1736 = vmul.f32 %v1726, %v1734
    %v1737 = vmul.f32 %v1727, %v1734
    %v1738 = vmul.f32 %v1728, %v1734
    %v1739 = vmul.f32 %v1729, %v1734
    %v1740 = vmul.f32 %v1730, %v1734
    %v1741 = vmul.f32 %v1731, %v1734
    %v1742 = vmul.f32 %v1732, %v1734
    %v1743 = vadd.f32 %v1591, %v1609
    %v1744 = vadd.f32 %v1592, %v1610
    %v1745 = vadd.f32 %v1593, %v1611
    %v1746 = vadd.f32 %v1594, %v1612
    %v1747 = vadd.f32 %v1595, %v1613
    %v1748 = vadd.f32 %v1596, %v1614
    %v1749 = vadd.f32 %v1597, %v1615
    %v1750 = vadd.f32 %v1598, %v1616
    %v1751 = vadd.f32 %v1627, %v1645
    %v1752 = vadd.f32 %v1628, %v1646
    %v1753 = vadd.f32 %v1629, %v1647
    %v1754 = vadd.f32 %v1630, %v1648
    %v1755 = vadd.f32 %v1631, %v1649
    %v1756 = vadd.f32 %v1632, %v1650
    %v1757 = vadd.f32 %v1633, %v1651
    %v1758 = vadd.f32 %v1634, %v1652
    %v1759 = vadd.f32 %v1663, %v1681
    %v1760 = vadd.f32 %v1664, %v1682
    %v1761 = vadd.f32 %v1665, %v1683
    %v1762 = vadd.f32 %v1666, %v1684
    %v1763 = vadd.f32 %v1667, %v1685
    %v1764 = vadd.f32 %v1668, %v1686
    %v1765 = vadd.f32 %v1669, %v1687
    %v1766 = vadd.f32 %v1670, %v1688
    %v1767 = vadd.f32 %v1699, %v1717
    %v1768 = vadd.f32 %v1700, %v1718
    %v1769 = vadd.f32 %v1701, %v1719
    %v1770 = vadd.f32 %v1702, %v1720
    %v1771 = vadd.f32 %v1703, %v1721
    %v1772 = vadd.f32 %v1704, %v1722
    %v1773 = vadd.f32 %v1705, %v1723
    %v1774 = vadd.f32 %v1706, %v1724
    %v1775 = vadd.f32 %v1743, %v1751
    %v1776 = vadd.f32 %v1744, %v1752
    %v1777 = vadd.f32 %v1745, %v1753
    %v1778 = vadd.f32 %v1746, %v1754
    %v1779 = vadd.f32 %v1747, %v1755
    %v1780 = vadd.f32 %v1748, %v1756
    %v1781 = vadd.f32 %v1749, %v1757
    %v1782 = vadd.f32 %v1750, %v1758
    %v1783 = vadd.f32 %v1759, %v1767
    %v1784 = vadd.f32 %v1760, %v1768
    %v1785 = vadd.f32 %v1761, %v1769
    %v1786 = vadd.f32 %v1762, %v1770
    %v1787 = vadd.f32 %v1763, %v1771
    %v1788 = vadd.f32 %v1764, %v1772
    %v1789 = vadd.f32 %v1765, %v1773
    %v1790 = vadd.f32 %v1766, %v1774
    %v1791 = vadd.f32 %v1775, %v1783
    %v1792 = vadd.f32 %v1776, %v1784
    %v1793 = vadd.f32 %v1777, %v1785
    %v1794 = vadd.f32 %v1778, %v1786
    %v1795 = vadd.f32 %v1779, %v1787
    %v1796 = vadd.f32 %v1780, %v1788
    %v1797 = vadd.f32 %v1781, %v1789
    %v1798 = vadd.f32 %v1782, %v1790
    %v1799 = vadd.f32 %v1791, %v1735
    %v1800 = vadd.f32 %v1792, %v1736
    %v1801 = vadd.f32 %v1793, %v1737
    %v1802 = vadd.f32 %v1794, %v1738
    %v1803 = vadd.f32 %v1795, %v1739
    %v1804 = vadd.f32 %v1796, %v1740
    %v1805 = vadd.f32 %v1797, %v1741
    %v1806 = vadd.f32 %v1798, %v1742
    %v1807 = vld [vmem:[%s4] sm:$0x1]
    %v1809 = vperm.slane %v1807, 0
    %v1811 = vadd.f32 %v1799, %v1809
    %v1812 = vadd.f32 %v1800, %v1809
    %v1813 = vadd.f32 %v1801, %v1809
    %v1814 = vadd.f32 %v1802, %v1809
    %v1815 = vadd.f32 %v1803, %v1809
    %v1816 = vadd.f32 %v1804, %v1809
    %v1817 = vadd.f32 %v1805, %v1809
    %v1818 = vadd.f32 %v1806, %v1809
    %v1819 = vmax.f32 %v1811, 0.0
    %v1820 = vmax.f32 %v1812, 0.0
    %v1821 = vmax.f32 %v1813, 0.0
    %v1822 = vmax.f32 %v1814, 0.0
    %v1823 = vmax.f32 %v1815, 0.0
    %v1824 = vmax.f32 %v1816, 0.0
    %v1825 = vmax.f32 %v1817, 0.0
    %v1826 = vmax.f32 %v1818, 0.0
    %v1827 = vld [vmem:[%s5] sm:$0xff]
    %v1828 = vld [vmem:[%s6] sm:$0x1]
    %v1830 = vperm.slane %v1828, 0
    %v1833 = vsel %vm885, %v1819, 0
    %1835 = vmatpush.msra.mxu0 0.0
    %1836 = vmatpush.msra.mxu0 0.0
    %1837 = vmatpush.msra.mxu0 0.0
    %1838 = vmatpush.msra.mxu0 0.0
    %1839 = vmatpush.msra.mxu0 0.0
    %1840 = vmatpush.msra.mxu0 0.0
    %1841 = vmatpush.msra.mxu0 0.0
    %1842 = vmatpush.msra.mxu0 0.0
    %1843 = vmatpush.msra.mxu0 0.0
    %1844 = vmatpush.msra.mxu0 0.0
    %1845 = vmatpush.msra.mxu0 0.0
    %1846 = vmatpush.msra.mxu0 0.0
    %1847 = vmatpush.msra.mxu0 0.0
    %1848 = vmatpush.msra.mxu0 0.0
    %1849 = vmatpush.msra.mxu0 0.0
    %1850 = vmatpush.msra.mxu0 %v1827
    %1851 = vmatmul.f32.gmra.mxu0 %v1833
    %v1852 = vpop.f32.mrf.mxu0
    %v1853 = vadd.f32 %v1830, %v1852
    %1854 = vdwg.mxu0
    %v1855 = vmax.f32 %v1853, 0.0
    %v1857 = vsel %vm885, %v1820, 0
    %1859 = vmatpush.msra.mxu0 0.0
    %1860 = vmatpush.msra.mxu0 0.0
    %1861 = vmatpush.msra.mxu0 0.0
    %1862 = vmatpush.msra.mxu0 0.0
    %1863 = vmatpush.msra.mxu0 0.0
    %1864 = vmatpush.msra.mxu0 0.0
    %1865 = vmatpush.msra.mxu0 0.0
    %1866 = vmatpush.msra.mxu0 0.0
    %1867 = vmatpush.msra.mxu0 0.0
    %1868 = vmatpush.msra.mxu0 0.0
    %1869 = vmatpush.msra.mxu0 0.0
    %1870 = vmatpush.msra.mxu0 0.0
    %1871 = vmatpush.msra.mxu0 0.0
    %1872 = vmatpush.msra.mxu0 0.0
    %1873 = vmatpush.msra.mxu0 0.0
    %1874 = vmatpush.msra.mxu0 %v1827
    %1875 = vmatmul.f32.gmra.mxu0 %v1857
    %v1876 = vpop.f32.mrf.mxu0
    %v1877 = vadd.f32 %v1830, %v1876
    %1878 = vdwg.mxu0
    %v1879 = vmax.f32 %v1877, 0.0
    %v1881 = vsel %vm885, %v1821, 0
    %1883 = vmatpush.msra.mxu0 0.0
    %1884 = vmatpush.msra.mxu0 0.0
    %1885 = vmatpush.msra.mxu0 0.0
    %1886 = vmatpush.msra.mxu0 0.0
    %1887 = vmatpush.msra.mxu0 0.0
    %1888 = vmatpush.msra.mxu0 0.0
    %1889 = vmatpush.msra.mxu0 0.0
    %1890 = vmatpush.msra.mxu0 0.0
    %1891 = vmatpush.msra.mxu0 0.0
    %1892 = vmatpush.msra.mxu0 0.0
    %1893 = vmatpush.msra.mxu0 0.0
    %1894 = vmatpush.msra.mxu0 0.0
    %1895 = vmatpush.msra.mxu0 0.0
    %1896 = vmatpush.msra.mxu0 0.0
    %1897 = vmatpush.msra.mxu0 0.0
    %1898 = vmatpush.msra.mxu0 %v1827
    %1899 = vmatmul.f32.gmra.mxu0 %v1881
    %v1900 = vpop.f32.mrf.mxu0
    %v1901 = vadd.f32 %v1830, %v1900
    %1902 = vdwg.mxu0
    %v1903 = vmax.f32 %v1901, 0.0
    %v1905 = vsel %vm885, %v1822, 0
    %1907 = vmatpush.msra.mxu0 0.0
    %1908 = vmatpush.msra.mxu0 0.0
    %1909 = vmatpush.msra.mxu0 0.0
    %1910 = vmatpush.msra.mxu0 0.0
    %1911 = vmatpush.msra.mxu0 0.0
    %1912 = vmatpush.msra.mxu0 0.0
    %1913 = vmatpush.msra.mxu0 0.0
    %1914 = vmatpush.msra.mxu0 0.0
    %1915 = vmatpush.msra.mxu0 0.0
    %1916 = vmatpush.msra.mxu0 0.0
    %1917 = vmatpush.msra.mxu0 0.0
    %1918 = vmatpush.msra.mxu0 0.0
    %1919 = vmatpush.msra.mxu0 0.0
    %1920 = vmatpush.msra.mxu0 0.0
    %1921 = vmatpush.msra.mxu0 0.0
    %1922 = vmatpush.msra.mxu0 %v1827
    %1923 = vmatmul.f32.gmra.mxu0 %v1905
    %v1924 = vpop.f32.mrf.mxu0
    %v1925 = vadd.f32 %v1830, %v1924
    %1926 = vdwg.mxu0
    %v1927 = vmax.f32 %v1925, 0.0
    %v1928 = vmax.f32 %v1855, %v1879
    %v1930 = vrot.slane %v1928, 1
    %v1932 = vmax.f32 %v1928, %v1930
    %v1934 = vrot.slane %v1932, 2
    %v1936 = vadd.f32 %v1932, %v1934
    %v1937 = vmax.f32 %v1903, %v1927
    %v1939 = vrot.slane %v1937, 1
    %v1941 = vmax.f32 %v1937, %v1939
    %v1942 = vadd.f32 %v1936, %v1941
    %v1944 = vrot.slane %v1941, 2
    %v1946 = vadd.f32 %v1942, %v1944
    %v1947 = vmul.f32 %v1946, 0.25
    %v1948 = vld [vmem:[%s7] sm:$0xff]
    %v1949 = vld [vmem:[%s7 + $0x8] sm:$0xff]
    %v1950 = vld [vmem:[%s8] sm:$0x1]
    %vm1951 = vcmask 130048
    %v1953 = vsel %vm1951, %v1947, 0
    %1955 = vmatpush.msra.mxu0 0.0
    %1956 = vmatpush.msra.mxu0 0.0
    %1957 = vmatpush.msra.mxu0 0.0
    %1958 = vmatpush.msra.mxu0 0.0
    %1959 = vmatpush.msra.mxu0 0.0
    %1960 = vmatpush.msra.mxu0 0.0
    %1961 = vmatpush.msra.mxu0 0.0
    %1962 = vmatpush.msra.mxu0 0.0
    %1963 = vmatpush.msra.mxu0 0.0
    %1964 = vmatpush.msra.mxu0 0.0
    %1965 = vmatpush.msra.mxu0 0.0
    %1966 = vmatpush.msra.mxu0 0.0
    %1967 = vmatpush.msra.mxu0 0.0
    %1968 = vmatpush.msra.mxu0 0.0
    %1969 = vmatpush.msra.mxu0 %v1949
    %1970 = vmatpush.msra.mxu0 %v1948
    %1971 = vmatmul.f32.gmra.mxu0 %v1953
    %v1972 = vpop.f32.mrf.mxu0
    %v1973 = vadd.f32 %v1950, %v1972
    %1974 = vdwg.mxu0
    %vm1975 = vcmask 40960
    %1976 = vst.msk [vmem:[#allocation5] sm:$0x1] %vm1975, %v1973
    %v1977 = vld [vmem:[%s5] sm:$0xff]
    %v1978 = vld [vmem:[%s6] sm:$0x1]
    %v1980 = vperm.slane %v1978, 0
    %v1983 = vsel %vm885, %v1823, 0
    %1985 = vmatpush.msra.mxu0 0.0
    %1986 = vmatpush.msra.mxu0 0.0
    %1987 = vmatpush.msra.mxu0 0.0
    %1988 = vmatpush.msra.mxu0 0.0
    %1989 = vmatpush.msra.mxu0 0.0
    %1990 = vmatpush.msra.mxu0 0.0
    %1991 = vmatpush.msra.mxu0 0.0
    %1992 = vmatpush.msra.mxu0 0.0
    %1993 = vmatpush.msra.mxu0 0.0
    %1994 = vmatpush.msra.mxu0 0.0
    %1995 = vmatpush.msra.mxu0 0.0
    %1996 = vmatpush.msra.mxu0 0.0
    %1997 = vmatpush.msra.mxu0 0.0
    %1998 = vmatpush.msra.mxu0 0.0
    %1999 = vmatpush.msra.mxu0 0.0
    %2000 = vmatpush.msra.mxu0 %v1977
    %2001 = vmatmul.f32.gmra.mxu0 %v1983
    %v2002 = vpop.f32.mrf.mxu0
    %v2003 = vadd.f32 %v1980, %v2002
    %2004 = vdwg.mxu0
    %v2005 = vmax.f32 %v2003, 0.0
    %v2007 = vsel %vm885, %v1824, 0
    %2009 = vmatpush.msra.mxu0 0.0
    %2010 = vmatpush.msra.mxu0 0.0
    %2011 = vmatpush.msra.mxu0 0.0
    %2012 = vmatpush.msra.mxu0 0.0
    %2013 = vmatpush.msra.mxu0 0.0
    %2014 = vmatpush.msra.mxu0 0.0
    %2015 = vmatpush.msra.mxu0 0.0
    %2016 = vmatpush.msra.mxu0 0.0
    %2017 = vmatpush.msra.mxu0 0.0
    %2018 = vmatpush.msra.mxu0 0.0
    %2019 = vmatpush.msra.mxu0 0.0
    %2020 = vmatpush.msra.mxu0 0.0
    %2021 = vmatpush.msra.mxu0 0.0
    %2022 = vmatpush.msra.mxu0 0.0
    %2023 = vmatpush.msra.mxu0 0.0
    %2024 = vmatpush.msra.mxu0 %v1977
    %2025 = vmatmul.f32.gmra.mxu0 %v2007
    %v2026 = vpop.f32.mrf.mxu0
    %v2027 = vadd.f32 %v1980, %v2026
    %2028 = vdwg.mxu0
    %v2029 = vmax.f32 %v2027, 0.0
    %v2031 = vsel %vm885, %v1825, 0
    %2033 = vmatpush.msra.mxu0 0.0
    %2034 = vmatpush.msra.mxu0 0.0
    %2035 = vmatpush.msra.mxu0 0.0
    %2036 = vmatpush.msra.mxu0 0.0
    %2037 = vmatpush.msra.mxu0 0.0
    %2038 = vmatpush.msra.mxu0 0.0
    %2039 = vmatpush.msra.mxu0 0.0
    %2040 = vmatpush.msra.mxu0 0.0
    %2041 = vmatpush.msra.mxu0 0.0
    %2042 = vmatpush.msra.mxu0 0.0
    %2043 = vmatpush.msra.mxu0 0.0
    %2044 = vmatpush.msra.mxu0 0.0
    %2045 = vmatpush.msra.mxu0 0.0
    %2046 = vmatpush.msra.mxu0 0.0
    %2047 = vmatpush.msra.mxu0 0.0
    %2048 = vmatpush.msra.mxu0 %v1977
    %2049 = vmatmul.f32.gmra.mxu0 %v2031
    %v2050 = vpop.f32.mrf.mxu0
    %v2051 = vadd.f32 %v1980, %v2050
    %2052 = vdwg.mxu0
    %v2053 = vmax.f32 %v2051, 0.0
    %v2055 = vsel %vm885, %v1826, 0
    %2057 = vmatpush.msra.mxu0 0.0
    %2058 = vmatpush.msra.mxu0 0.0
    %2059 = vmatpush.msra.mxu0 0.0
    %2060 = vmatpush.msra.mxu0 0.0
    %2061 = vmatpush.msra.mxu0 0.0
    %2062 = vmatpush.msra.mxu0 0.0
    %2063 = vmatpush.msra.mxu0 0.0
    %2064 = vmatpush.msra.mxu0 0.0
    %2065 = vmatpush.msra.mxu0 0.0
    %2066 = vmatpush.msra.mxu0 0.0
    %2067 = vmatpush.msra.mxu0 0.0
    %2068 = vmatpush.msra.mxu0 0.0
    %2069 = vmatpush.msra.mxu0 0.0
    %2070 = vmatpush.msra.mxu0 0.0
    %2071 = vmatpush.msra.mxu0 0.0
    %2072 = vmatpush.msra.mxu0 %v1977
    %2073 = vmatmul.f32.gmra.mxu0 %v2055
    %v2074 = vpop.f32.mrf.mxu0
    %v2075 = vadd.f32 %v1980, %v2074
    %2076 = vdwg.mxu0
    %v2077 = vmax.f32 %v2075, 0.0
    %v2078 = vmax.f32 %v2005, %v2029
    %v2080 = vrot.slane %v2078, 1
    %v2082 = vmax.f32 %v2078, %v2080
    %v2084 = vrot.slane %v2082, 2
    %v2086 = vadd.f32 %v2082, %v2084
    %v2087 = vmax.f32 %v2053, %v2077
    %v2089 = vrot.slane %v2087, 1
    %v2091 = vmax.f32 %v2087, %v2089
    %v2092 = vadd.f32 %v2086, %v2091
    %v2094 = vrot.slane %v2091, 2
    %v2096 = vadd.f32 %v2092, %v2094
    %v2097 = vmul.f32 %v2096, 0.25
    %v2098 = vld [vmem:[%s7] sm:$0xff]
    %v2099 = vld [vmem:[%s7 + $0x8] sm:$0xff]
    %v2100 = vld [vmem:[%s8] sm:$0x1]
    %v2102 = vsel %vm1951, %v2097, 0
    %2104 = vmatpush.msra.mxu0 0.0
    %2105 = vmatpush.msra.mxu0 0.0
    %2106 = vmatpush.msra.mxu0 0.0
    %2107 = vmatpush.msra.mxu0 0.0
    %2108 = vmatpush.msra.mxu0 0.0
    %2109 = vmatpush.msra.mxu0 0.0
    %2110 = vmatpush.msra.mxu0 0.0
    %2111 = vmatpush.msra.mxu0 0.0
    %2112 = vmatpush.msra.mxu0 0.0
    %2113 = vmatpush.msra.mxu0 0.0
    %2114 = vmatpush.msra.mxu0 0.0
    %2115 = vmatpush.msra.mxu0 0.0
    %2116 = vmatpush.msra.mxu0 0.0
    %2117 = vmatpush.msra.mxu0 0.0
    %2118 = vmatpush.msra.mxu0 %v2099
    %2119 = vmatpush.msra.mxu0 %v2098
    %2120 = vmatmul.f32.gmra.mxu0 %v2102
    %v2121 = vpop.f32.mrf.mxu0
    %v2122 = vadd.f32 %v2100, %v2121
    %2123 = vdwg.mxu0
    %2124 = vst.msk [vmem:[#allocation5 + $0x1] sm:$0x1] %vm1975, %v2122
    // Predicated region
    $region38: #{modular_micro_pizza_net_forward.1} parent=1 // pred_check
      _
    $region39: #{modular_micro_pizza_net_forward.1} parent=1 // pred_check_branch
      %2126 = sbr.rel (0) target = $region41
    $region40: #{modular_micro_pizza_net_forward.1} parent=1 // pred_region
      %2128 = vsyncadd [#allocation6], 0
      %s2130 = sshll.u32 [#allocation5], 4
      %s2131 = int_to_ptr.vmem [resolvable:$true] %s2130
      %s2132 = sshll.u32 %s9, 4
      %s2133 = int_to_ptr.hbm [resolvable:$true] %s2132
      %2135 = dma.vmem_to_hbm [thread:$0]  %s2131, 32, %s2133, [#allocation6]
    $region41: #{modular_micro_pizza_net_forward.1} parent=1 // pred_fallthru
      _
    // Predicated region
    $region42: #{modular_micro_pizza_net_forward.1} parent=1 // pred_check
      _
    $region43: #{modular_micro_pizza_net_forward.1} parent=1 // pred_check_branch
      %2137 = sbr.rel (0) target = $region45
    $region44: #{modular_micro_pizza_net_forward.1} parent=1 // pred_region
      %2139 = dma.done [#allocation6], 32
    $region45: #{modular_micro_pizza_net_forward.1} parent=1 // pred_fallthru
      _
    %2140 = vsyncpa [#allocation6], 1

</llo_original>
